<compile_context>
chip_gen: v7x
topology: tpu7x:2x2x1
jax: 0.10.0
libtpu: 0.0.40
codegen_flags: <defaults>
</compile_context>

<pallas_src>
import math

import jax
import jax.numpy as jnp
from jax.experimental import pallas as pl
from jax.experimental.pallas import tpu as pltpu

# ----------------------------- configuration --------------------------------
VOCAB_SIZE = 64
EMBED_SIZE = 32
HIDDEN_SIZE = 32
OUT_DIM = 16
PADDING_IDX = 0
BATCH = 2
SEQ_A = 8
SEQ_B = 8

GATE_PAD = ((3 * HIDDEN_SIZE + 127) // 128) * 128   # per-direction gates -> 128 lanes
OUT_PAD = ((OUT_DIM + 127) // 128) * 128            # projection output -> 128 lanes
assert 3 * HIDDEN_SIZE <= GATE_PAD


# ------------------------------ Pallas kernel --------------------------------
def siamese_kernel(x_ref, lens_ref, maxlen_ref,
                   wih0_ref, bih0_ref, whh0_ref, bhh0_ref,
                   wih1_ref, bih1_ref, whh1_ref, bhh1_ref,
                   pw_ref, pb_ref,
                   out_ref,
                   gx_ref, h0_ref):
    """Fused 2-layer bi-GRU encoder (both siamese branches) + pooling + head.

    x_ref:       (T*NB, E) bf16, time-major embeddings; row = t*NB + r, rows
                 within a timestep are [branch-a batch..., branch-b batch..., pad]
    lens_ref:    (NB, 1) int32 per-row sequence length (0 for dummy rows)
    maxlen_ref:  (NB, 1) int32 per-row branch max length (pad_packed length)
    wih{0,1}:    (In, 2*GP) bf16   fused fwd|bwd input weights (gate order r,z,n,
                 padded to GP=128 lanes per direction)
    bih{0,1}:    (1, 2*GP)  f32
    whh{0,1}:    (2H, 2*GP) bf16   block-diagonal fused recurrent weights
    bhh{0,1}:    (1, 2*GP)  f32
    pw_ref:      (8H, OPAD) bf16,  pb_ref: (1, OPAD) f32
    out_ref:     (B, OPAD)  f32
    scratch:     gx_ref (T*NB, 2*GP) f32 hoisted input gates (reused per layer),
                 h0_ref (T*NB, 2H)   f32 layer-0 [fwd|bwd] per-step outputs.
    """
    NB = lens_ref.shape[0]
    TN = x_ref.shape[0]
    T = TN // NB
    H = whh0_ref.shape[0] // 2
    GP = whh0_ref.shape[1] // 2
    B = out_ref.shape[0]
    NEG = jnp.float32(-3.0e38)

    lens_v = lens_ref[...]          # (NB, 1) int32
    maxlen_v = maxlen_ref[...]      # (NB, 1) int32
    hz = jnp.zeros((NB, H), jnp.float32)

    def gate_half(gx, gh, h):
        # gx, gh: (NB, GP) f32 gate preactivations (layout r|z|n|pad); h: (NB, H)
        rz = jax.nn.sigmoid(gx[:, 0:2 * H] + gh[:, 0:2 * H])   # one EUP push for r|z
        r = rz[:, 0:H]
        z = rz[:, H:2 * H]
        n = jnp.tanh(gx[:, 2 * H:3 * H] + r * gh[:, 2 * H:3 * H])
        return n + z * (h - n)                                  # == (1-z)*n + z*h

    # --------------------------- layer 0 -------------------------------------
    # hoisted fwd+bwd input projections for all T steps: ONE matmul
    gx_ref[...] = jnp.dot(x_ref[...], wih0_ref[...],
                          preferred_element_type=jnp.float32) + bih0_ref[...]

    whh0 = whh0_ref[...]            # (2H, 2*GP) bf16, block-diagonal
    bhh0 = bhh0_ref[...]            # (1, 2*GP)  f32

    def step0(i, carry):
        hf, hb = carry
        tb = T - 1 - i                               # bwd scans time reversed
        rf = pl.multiple_of(i * NB, NB)
        rb = pl.multiple_of(tb * NB, NB)
        gx_f = gx_ref[pl.ds(rf, NB), 0:GP]           # (NB, GP) full aligned vreg
        gx_b = gx_ref[pl.ds(rb, NB), GP:2 * GP]
        h_cat = jnp.concatenate([hf, hb], axis=1).astype(jnp.bfloat16)   # (NB, 2H)
        gh = jnp.dot(h_cat, whh0, preferred_element_type=jnp.float32) + bhh0
        hf_new = gate_half(gx_f, gh[:, 0:GP], hf)
        hb_new = gate_half(gx_b, gh[:, GP:2 * GP], hb)
        mf = i < lens_v                              # (NB, 1) bool
        mb = tb < lens_v
        # packed semantics: zero output at padded steps, freeze hidden state
        h0_ref[pl.ds(rf, NB), 0:H] = jnp.where(mf, hf_new, 0.0)
        h0_ref[pl.ds(rb, NB), H:2 * H] = jnp.where(mb, hb_new, 0.0)
        return jnp.where(mf, hf_new, hf), jnp.where(mb, hb_new, hb)

    jax.lax.fori_loop(0, T, step0, (hz, hz), unroll=True)

    # --------------------------- layer 1 -------------------------------------
    # hoisted fwd+bwd input projection from merged layer-0 outputs: ONE K=2H dot
    h0 = h0_ref[...].astype(jnp.bfloat16)                              # (TN, 2H)
    gx_ref[...] = jnp.dot(h0, wih1_ref[...],
                          preferred_element_type=jnp.float32) + bih1_ref[...]

    whh1 = whh1_ref[...]
    bhh1 = bhh1_ref[...]

    def step1(i, carry):
        hf, hb, vmf, vmb = carry
        tb = T - 1 - i
        rf = pl.multiple_of(i * NB, NB)
        rb = pl.multiple_of(tb * NB, NB)
        gx_f = gx_ref[pl.ds(rf, NB), 0:GP]
        gx_b = gx_ref[pl.ds(rb, NB), GP:2 * GP]
        h_cat = jnp.concatenate([hf, hb], axis=1).astype(jnp.bfloat16)
        gh = jnp.dot(h_cat, whh1, preferred_element_type=jnp.float32) + bhh1
        hf_new = gate_half(gx_f, gh[:, 0:GP], hf)
        hb_new = gate_half(gx_b, gh[:, GP:2 * GP], hb)
        mf = i < lens_v
        mb = tb < lens_v
        # pad_packed semantics: zeros for t in [len, branch_max_len);
        # timesteps >= branch_max_len do not exist for torch.max -> NEG sentinel.
        of = jnp.where(mf, hf_new, 0.0)
        ob = jnp.where(mb, hb_new, 0.0)
        vmf = jnp.maximum(vmf, jnp.where(i < maxlen_v, of, NEG))
        vmb = jnp.maximum(vmb, jnp.where(tb < maxlen_v, ob, NEG))
        return (jnp.where(mf, hf_new, hf), jnp.where(mb, hb_new, hb), vmf, vmb)

    vneg = jnp.full((NB, H), NEG, jnp.float32)
    _, _, vmf, vmb = jax.lax.fori_loop(0, T, step1, (hz, hz, vneg, vneg),
                                       unroll=True)

    # --------------- head: sim features + linear projection ------------------
    # pooled encoder output per row = [max_t fwd | max_t bwd]
    va = jnp.concatenate([vmf[0:B], vmb[0:B]], axis=1)             # (B, 2H)
    vb = jnp.concatenate([vmf[B:2 * B], vmb[B:2 * B]], axis=1)     # (B, 2H)
    sim = jnp.concatenate([va, va * vb, jnp.abs(va - vb), vb], axis=1)  # (B, 8H)
    out_ref[...] = (jnp.dot(sim.astype(jnp.bfloat16), pw_ref[...],
                            preferred_element_type=jnp.float32) + pb_ref[...])


# ----------------------------- Pallas wrapper ---------------------------------
def run_siamese(x_flat, lens_p, maxlen_p, l0, l1, pw, pb, batch):
    TN = x_flat.shape[0]
    H = l0["whh"].shape[0] // 2
    GP = l0["whh"].shape[1] // 2
    OPAD = pw.shape[1]
    # NOTE: weights + scratch total well under 1 MiB, so no vmem_limit_bytes is
    # needed on any generation (v5e/v6e/v7x); revisit if T*NB grows.
    return pl.pallas_call(
        siamese_kernel,
        out_shape=jax.ShapeDtypeStruct((batch, OPAD), jnp.float32),
        in_specs=[pl.BlockSpec(memory_space=pltpu.MemorySpace.VMEM)] * 13,
        out_specs=pl.BlockSpec(memory_space=pltpu.MemorySpace.VMEM),
        scratch_shapes=[
            pltpu.VMEM((TN, 2 * GP), jnp.float32),   # fused hoisted input gates
            pltpu.VMEM((TN, 2 * H), jnp.float32),    # layer-0 [fwd|bwd] outputs
        ],
    )(x_flat, lens_p, maxlen_p,
      l0["wih"], l0["bih"], l0["whh"], l0["bhh"],
      l1["wih"], l1["bih"], l1["whh"], l1["bhh"],
      pw, pb)


# ------------------------------- forward pass ---------------------------------
@jax.jit
def siamese_gru_forward(texta, textb, params):
    B, Ta = texta.shape
    _, Tb = textb.shape
    T = max(Ta, Tb)
    # pad token ids to a common length (extra columns are PADDING_IDX -> masked)
    pa = jnp.pad(texta, ((0, 0), (0, T - Ta)), constant_values=PADDING_IDX)
    pbt = jnp.pad(textb, ((0, 0), (0, T - Tb)), constant_values=PADDING_IDX)
    ids = jnp.concatenate([pa, pbt], axis=0)                         # (2B, T)
    # assumes strictly trailing padding (pack_padded_sequence flow guarantees it)
    lens = jnp.sum(ids != PADDING_IDX, axis=-1).astype(jnp.int32)    # (2B,)

    # embedding lookup (single XLA gather); dropout = identity in eval mode
    x = jnp.take(params["embed"], ids, axis=0)                       # (2B, T, E) f32

    # time-major, rows padded to the 8-sublane vreg width, flattened to 2D, bf16
    NB = ((2 * B + 7) // 8) * 8
    x_tm = jnp.transpose(x, (1, 0, 2))                               # (T, 2B, E)
    x_tm = jnp.pad(x_tm, ((0, 0), (0, NB - 2 * B), (0, 0)))
    x_flat = x_tm.reshape(T * NB, x.shape[-1]).astype(jnp.bfloat16)  # (T*NB, E)

    lens_p = jnp.pad(lens, (0, NB - 2 * B)).reshape(NB, 1)           # (NB, 1)
    ml_a = jnp.max(lens[:B])
    ml_b = jnp.max(lens[B:])
    maxlen_p = jnp.concatenate([
        jnp.broadcast_to(ml_a, (B,)),
        jnp.broadcast_to(ml_b, (B,)),
        jnp.zeros((NB - 2 * B,), jnp.int32),
    ]).astype(jnp.int32).reshape(NB, 1)

    g = params["gru"]
    out = run_siamese(x_flat, lens_p, maxlen_p, g["l0"], g["l1"],
                      params["proj_w"], params["proj_b"], B)
    return out[:, :OUT_DIM]                                          # drop lane pad


# --------------------------- parameter construction ---------------------------
def make_layer_params(key, in_size, hidden):
    """Raw per-direction GRU weights in PyTorch layout (gate order r, z, n)."""
    ks = jax.random.split(key, 8)
    s = 1.0 / math.sqrt(hidden)
    G = 3 * hidden
    u = lambda kk, shape: jax.random.uniform(kk, shape, jnp.float32, -s, s)
    return dict(
        wih_f=u(ks[0], (in_size, G)), wih_b=u(ks[1], (in_size, G)),
        bih_f=u(ks[2], (1, G)),       bih_b=u(ks[3], (1, G)),
        whh_f=u(ks[4], (hidden, G)),  whh_b=u(ks[5], (hidden, G)),
        bhh_f=u(ks[6], (hidden and 1, G)), bhh_b=u(ks[7], (1, G)),
    )


def fuse_layer(raw, in_size, hidden, gate_pad):
    """Fuse fwd|bwd weights on the lane axis, pad gates to 128 lanes, make the
    recurrent weight block-diagonal, and cast MXU operands to bf16."""
    G = 3 * hidden
    wih = jnp.zeros((in_size, 2 * gate_pad), jnp.float32)
    wih = wih.at[:, 0:G].set(raw["wih_f"]).at[:, gate_pad:gate_pad + G].set(raw["wih_b"])
    bih = jnp.zeros((1, 2 * gate_pad), jnp.float32)
    bih = bih.at[:, 0:G].set(raw["bih_f"]).at[:, gate_pad:gate_pad + G].set(raw["bih_b"])
    whh = jnp.zeros((2 * hidden, 2 * gate_pad), jnp.float32)
    whh = whh.at[0:hidden, 0:G].set(raw["whh_f"])
    whh = whh.at[hidden:2 * hidden, gate_pad:gate_pad + G].set(raw["whh_b"])
    bhh = jnp.zeros((1, 2 * gate_pad), jnp.float32)
    bhh = bhh.at[:, 0:G].set(raw["bhh_f"]).at[:, gate_pad:gate_pad + G].set(raw["bhh_b"])
    return dict(wih=wih.astype(jnp.bfloat16), bih=bih,
                whh=whh.astype(jnp.bfloat16), bhh=bhh)


def init_params(key):
    keys = jax.random.split(key, 4)
    H = HIDDEN_SIZE
    raw_l0 = make_layer_params(keys[1], EMBED_SIZE, H)
    raw_l1 = make_layer_params(keys[2], 2 * H, H)
    xavier_std = math.sqrt(2.0 / (8 * H + OUT_DIM))
    proj_w = xavier_std * jax.random.normal(keys[3], (8 * H, OUT_DIM), jnp.float32)
    pw_pad = jnp.zeros((8 * H, OUT_PAD), jnp.float32).at[:, :OUT_DIM].set(proj_w)
    return dict(
        # nn.Embedding without padding_idx: row 0 is a normal vector, but padded
        # timesteps are fully masked downstream so it never affects the output.
        embed=0.5 * jax.random.normal(keys[0], (VOCAB_SIZE, EMBED_SIZE), jnp.float32),
        gru=dict(
            l0=fuse_layer(raw_l0, EMBED_SIZE, H, GATE_PAD),
            l1=fuse_layer(raw_l1, 2 * H, H, GATE_PAD),
        ),
        proj_w=pw_pad.astype(jnp.bfloat16),
        proj_b=jnp.zeros((1, OUT_PAD), jnp.float32),
    )
    # TODO(synk): inter-layer GRU dropout / input dropout omitted (eval mode).


def _check_trailing_padding(ids):
    nonpad = ids != PADDING_IDX
    lens = jnp.sum(nonpad, axis=-1)
    pos = jnp.arange(ids.shape[-1])[None, :]
    assert bool(jnp.all(nonpad == (pos < lens[:, None]))), \
        "padding must be strictly trailing (pack_padded_sequence semantics)"


# ------------------------------------ main -------------------------------------
if __name__ == "__main__":
    key = jax.random.PRNGKey(0)
    k_param, k_a, k_b = jax.random.split(key, 3)
    params = init_params(k_param)

    texta = jax.random.randint(k_a, (BATCH, SEQ_A), 1, VOCAB_SIZE, dtype=jnp.int32)
    textb = jax.random.randint(k_b, (BATCH, SEQ_B), 1, VOCAB_SIZE, dtype=jnp.int32)
    # trailing padding to exercise variable-length / packed-sequence semantics
    texta = texta.at[1, 5:].set(PADDING_IDX)   # row 1: length 5
    textb = textb.at[0, 6:].set(PADDING_IDX)   # row 0: length 6
    _check_trailing_padding(texta)
    _check_trailing_padding(textb)

    out = siamese_gru_forward(texta, textb, params)
    jax.block_until_ready(out)
    assert out.shape == (BATCH, OUT_DIM)
    assert bool(jnp.all(jnp.isfinite(out)))
    print("KERNEL_OK")
</pallas_src>

<mosaic_0001>
module attributes {stable_mosaic.version = 11 : i64} {
  func.func @siamese_kernel(%arg0: memref<64x32xbf16, #tpu.memory_space<vmem>>, %arg1: memref<8x1xi32, #tpu.memory_space<vmem>>, %arg2: memref<8x1xi32, #tpu.memory_space<vmem>>, %arg3: memref<32x256xbf16, #tpu.memory_space<vmem>>, %arg4: memref<1x256xf32, #tpu.memory_space<vmem>>, %arg5: memref<64x256xbf16, #tpu.memory_space<vmem>>, %arg6: memref<1x256xf32, #tpu.memory_space<vmem>>, %arg7: memref<64x256xbf16, #tpu.memory_space<vmem>>, %arg8: memref<1x256xf32, #tpu.memory_space<vmem>>, %arg9: memref<64x256xbf16, #tpu.memory_space<vmem>>, %arg10: memref<1x256xf32, #tpu.memory_space<vmem>>, %arg11: memref<256x128xbf16, #tpu.memory_space<vmem>>, %arg12: memref<1x128xf32, #tpu.memory_space<vmem>>, %arg13: memref<2x128xf32, #tpu.memory_space<vmem>>, %arg14: memref<64x256xf32, #tpu.memory_space<vmem>>, %arg15: memref<64x64xf32, #tpu.memory_space<vmem>>) attributes {dimension_semantics = [], scalar_prefetch = 0 : i64, scratch_operands = 2 : i64, tpu.core_type = #tpu.core_type<tc>} {
    %c0 = arith.constant 0 : index
    %c0_0 = arith.constant 0 : index
    %0 = vector.load %arg1[%c0, %c0_0] : memref<8x1xi32, #tpu.memory_space<vmem>>, vector<8x1xi32>
    %c0_1 = arith.constant 0 : index
    %c0_2 = arith.constant 0 : index
    %1 = vector.load %arg2[%c0_1, %c0_2] : memref<8x1xi32, #tpu.memory_space<vmem>>, vector<8x1xi32>
    %cst = arith.constant 0.000000e+00 : f32
    %2 = vector.broadcast %cst : f32 to vector<8x32xf32>
    %c0_3 = arith.constant 0 : index
    %c0_4 = arith.constant 0 : index
    %3 = vector.load %arg0[%c0_3, %c0_4] : memref<64x32xbf16, #tpu.memory_space<vmem>>, vector<64x32xbf16>
    %c0_5 = arith.constant 0 : index
    %c0_6 = arith.constant 0 : index
    %4 = vector.load %arg3[%c0_5, %c0_6] : memref<32x256xbf16, #tpu.memory_space<vmem>>, vector<32x256xbf16>
    %cst_7 = arith.constant dense<0.000000e+00> : vector<64x256xf32>
    %5 = tpu.matmul %3, %4, %cst_7 {dimension_numbers = #tpu.dot_dimension_numbers<[1], [0], [0], [1], [0, 0, 1, 1], [], []>} : vector<64x32xbf16>, vector<32x256xbf16>, vector<64x256xf32> -> vector<64x256xf32>
    %c0_8 = arith.constant 0 : index
    %c0_9 = arith.constant 0 : index
    %6 = vector.load %arg4[%c0_8, %c0_9] : memref<1x256xf32, #tpu.memory_space<vmem>>, vector<1x256xf32>
    %7 = vector.broadcast %6 : vector<1x256xf32> to vector<64x256xf32>
    %8 = arith.addf %5, %7 : vector<64x256xf32>
    %c0_10 = arith.constant 0 : index
    %c0_11 = arith.constant 0 : index
    %9 = vector.load %arg14[%c0_10, %c0_11] : memref<64x256xf32, #tpu.memory_space<vmem>>, vector<64x256xf32>
    tpu.vector_store %arg14[%c0_10, %c0_11], %8 {strides = array<i32>} : memref<64x256xf32, #tpu.memory_space<vmem>>, vector<64x256xf32>,
    %c0_12 = arith.constant 0 : index
    %c0_13 = arith.constant 0 : index
    %10 = vector.load %arg5[%c0_12, %c0_13] : memref<64x256xbf16, #tpu.memory_space<vmem>>, vector<64x256xbf16>
    %c0_14 = arith.constant 0 : index
    %c0_15 = arith.constant 0 : index
    %11 = vector.load %arg6[%c0_14, %c0_15] : memref<1x256xf32, #tpu.memory_space<vmem>>, vector<1x256xf32>
    %c0_i32 = arith.constant 0 : i32
    %c7_i32 = arith.constant 7 : i32
    %12 = arith.subi %c7_i32, %c0_i32 : i32
    %c8_i32 = arith.constant 8 : i32
    %13 = arith.muli %c0_i32, %c8_i32 : i32
    %14 = tpu.assume_multiple %13, 8 : i32
    %c8_i32_16 = arith.constant 8 : i32
    %15 = arith.muli %12, %c8_i32_16 : i32
    %16 = tpu.assume_multiple %15, 8 : i32
    %17 = arith.index_cast %14 : i32 to index
    %c0_17 = arith.constant 0 : index
    %18 = vector.load %arg14[%17, %c0_17] : memref<64x256xf32, #tpu.memory_space<vmem>>, vector<8x128xf32>
    %19 = arith.index_cast %16 : i32 to index
    %c128 = arith.constant 128 : index
    %20 = vector.load %arg14[%19, %c128] : memref<64x256xf32, #tpu.memory_space<vmem>>, vector<8x128xf32>
    %21 = tpu.concatenate %2, %2 in 1 : vector<8x32xf32>, vector<8x32xf32> -> vector<8x64xf32>
    %22 = arith.truncf %21 : vector<8x64xf32> to vector<8x64xbf16>
    %cst_18 = arith.constant dense<0.000000e+00> : vector<8x256xf32>
    %23 = tpu.matmul %22, %10, %cst_18 {dimension_numbers = #tpu.dot_dimension_numbers<[1], [0], [0], [1], [0, 0, 1, 1], [], []>} : vector<8x64xbf16>, vector<64x256xbf16>, vector<8x256xf32> -> vector<8x256xf32>
    %24 = vector.broadcast %11 : vector<1x256xf32> to vector<8x256xf32>
    %25 = arith.addf %23, %24 : vector<8x256xf32>
    %26 = vector.extract_strided_slice %25 {offsets = [0, 0], sizes = [8, 128], strides = [1, 1]} : vector<8x256xf32> to vector<8x128xf32>
    %27 = vector.extract_strided_slice %18 {offsets = [0, 0], sizes = [8, 64], strides = [1, 1]} : vector<8x128xf32> to vector<8x64xf32>
    %28 = vector.extract_strided_slice %26 {offsets = [0, 0], sizes = [8, 64], strides = [1, 1]} : vector<8x128xf32> to vector<8x64xf32>
    %29 = arith.addf %27, %28 : vector<8x64xf32>
    %30 = arith.negf %29 : vector<8x64xf32>
    %31 = math.exp %30 : vector<8x64xf32>
    %cst_19 = arith.constant 1.000000e+00 : f32
    %32 = vector.broadcast %cst_19 : f32 to vector<8x64xf32>
    %33 = arith.addf %32, %31 : vector<8x64xf32>
    %34 = arith.divf %32, %33 : vector<8x64xf32>
    %35 = vector.extract_strided_slice %34 {offsets = [0, 0], sizes = [8, 32], strides = [1, 1]} : vector<8x64xf32> to vector<8x32xf32>
    %36 = vector.extract_strided_slice %34 {offsets = [0, 32], sizes = [8, 32], strides = [1, 1]} : vector<8x64xf32> to vector<8x32xf32>
    %37 = vector.extract_strided_slice %18 {offsets = [0, 64], sizes = [8, 32], strides = [1, 1]} : vector<8x128xf32> to vector<8x32xf32>
    %38 = vector.extract_strided_slice %26 {offsets = [0, 64], sizes = [8, 32], strides = [1, 1]} : vector<8x128xf32> to vector<8x32xf32>
    %39 = arith.mulf %35, %38 : vector<8x32xf32>
    %40 = arith.addf %37, %39 : vector<8x32xf32>
    %41 = math.tanh %40 : vector<8x32xf32>
    %42 = arith.subf %2, %41 : vector<8x32xf32>
    %43 = arith.mulf %36, %42 : vector<8x32xf32>
    %44 = arith.addf %41, %43 : vector<8x32xf32>
    %45 = vector.extract_strided_slice %25 {offsets = [0, 128], sizes = [8, 128], strides = [1, 1]} : vector<8x256xf32> to vector<8x128xf32>
    %46 = vector.extract_strided_slice %20 {offsets = [0, 0], sizes = [8, 64], strides = [1, 1]} : vector<8x128xf32> to vector<8x64xf32>
    %47 = vector.extract_strided_slice %45 {offsets = [0, 0], sizes = [8, 64], strides = [1, 1]} : vector<8x128xf32> to vector<8x64xf32>
    %48 = arith.addf %46, %47 : vector<8x64xf32>
    %49 = arith.negf %48 : vector<8x64xf32>
    %50 = math.exp %49 : vector<8x64xf32>
    %cst_20 = arith.constant 1.000000e+00 : f32
    %51 = vector.broadcast %cst_20 : f32 to vector<8x64xf32>
    %52 = arith.addf %51, %50 : vector<8x64xf32>
    %53 = arith.divf %51, %52 : vector<8x64xf32>
    %54 = vector.extract_strided_slice %53 {offsets = [0, 0], sizes = [8, 32], strides = [1, 1]} : vector<8x64xf32> to vector<8x32xf32>
    %55 = vector.extract_strided_slice %53 {offsets = [0, 32], sizes = [8, 32], strides = [1, 1]} : vector<8x64xf32> to vector<8x32xf32>
    %56 = vector.extract_strided_slice %20 {offsets = [0, 64], sizes = [8, 32], strides = [1, 1]} : vector<8x128xf32> to vector<8x32xf32>
    %57 = vector.extract_strided_slice %45 {offsets = [0, 64], sizes = [8, 32], strides = [1, 1]} : vector<8x128xf32> to vector<8x32xf32>
    %58 = arith.mulf %54, %57 : vector<8x32xf32>
    %59 = arith.addf %56, %58 : vector<8x32xf32>
    %60 = math.tanh %59 : vector<8x32xf32>
    %61 = arith.subf %2, %60 : vector<8x32xf32>
    %62 = arith.mulf %55, %61 : vector<8x32xf32>
    %63 = arith.addf %60, %62 : vector<8x32xf32>
    %64 = vector.broadcast %c0_i32 : i32 to vector<8x1xi32>
    %65 = arith.cmpi slt, %64, %0 : vector<8x1xi32>
    %66 = vector.broadcast %12 : i32 to vector<8x1xi32>
    %67 = arith.cmpi slt, %66, %0 : vector<8x1xi32>
    %cst_21 = arith.constant 0.000000e+00 : f32
    %68 = vector.shape_cast %65 : vector<8x1xi1> to vector<8x1xi1>
    %69 = vector.broadcast %68 : vector<8x1xi1> to vector<8x32xi1>
    %70 = vector.broadcast %cst_21 : f32 to vector<8x32xf32>
    %71 = arith.select %69, %44, %70 : vector<8x32xi1>, vector<8x32xf32>
    %72 = arith.index_cast %14 : i32 to index
    %c0_22 = arith.constant 0 : index
    %73 = vector.load %arg15[%72, %c0_22] : memref<64x64xf32, #tpu.memory_space<vmem>>, vector<8x32xf32>
    tpu.vector_store %arg15[%72, %c0_22], %71 {strides = array<i32>} : memref<64x64xf32, #tpu.memory_space<vmem>>, vector<8x32xf32>,
    %cst_23 = arith.constant 0.000000e+00 : f32
    %74 = vector.shape_cast %67 : vector<8x1xi1> to vector<8x1xi1>
    %75 = vector.broadcast %74 : vector<8x1xi1> to vector<8x32xi1>
    %76 = vector.broadcast %cst_23 : f32 to vector<8x32xf32>
    %77 = arith.select %75, %63, %76 : vector<8x32xi1>, vector<8x32xf32>
    %78 = arith.index_cast %16 : i32 to index
    %c32 = arith.constant 32 : index
    %79 = vector.load %arg15[%78, %c32] : memref<64x64xf32, #tpu.memory_space<vmem>>, vector<8x32xf32>
    tpu.vector_store %arg15[%78, %c32], %77 {strides = array<i32>} : memref<64x64xf32, #tpu.memory_space<vmem>>, vector<8x32xf32>,
    %80 = vector.shape_cast %65 : vector<8x1xi1> to vector<8x1xi1>
    %81 = vector.broadcast %80 : vector<8x1xi1> to vector<8x32xi1>
    %82 = arith.select %81, %44, %2 : vector<8x32xi1>, vector<8x32xf32>
    %83 = vector.shape_cast %67 : vector<8x1xi1> to vector<8x1xi1>
    %84 = vector.broadcast %83 : vector<8x1xi1> to vector<8x32xi1>
    %85 = arith.select %84, %63, %2 : vector<8x32xi1>, vector<8x32xf32>
    %c1_i32 = arith.constant 1 : i32
    %c7_i32_24 = arith.constant 7 : i32
    %86 = arith.subi %c7_i32_24, %c1_i32 : i32
    %c8_i32_25 = arith.constant 8 : i32
    %87 = arith.muli %c1_i32, %c8_i32_25 : i32
    %88 = tpu.assume_multiple %87, 8 : i32
    %c8_i32_26 = arith.constant 8 : i32
    %89 = arith.muli %86, %c8_i32_26 : i32
    %90 = tpu.assume_multiple %89, 8 : i32
    %91 = arith.index_cast %88 : i32 to index
    %c0_27 = arith.constant 0 : index
    %92 = vector.load %arg14[%91, %c0_27] : memref<64x256xf32, #tpu.memory_space<vmem>>, vector<8x128xf32>
    %93 = arith.index_cast %90 : i32 to index
    %c128_28 = arith.constant 128 : index
    %94 = vector.load %arg14[%93, %c128_28] : memref<64x256xf32, #tpu.memory_space<vmem>>, vector<8x128xf32>
    %95 = tpu.concatenate %82, %85 in 1 : vector<8x32xf32>, vector<8x32xf32> -> vector<8x64xf32>
    %96 = arith.truncf %95 : vector<8x64xf32> to vector<8x64xbf16>
    %cst_29 = arith.constant dense<0.000000e+00> : vector<8x256xf32>
    %97 = tpu.matmul %96, %10, %cst_29 {dimension_numbers = #tpu.dot_dimension_numbers<[1], [0], [0], [1], [0, 0, 1, 1], [], []>} : vector<8x64xbf16>, vector<64x256xbf16>, vector<8x256xf32> -> vector<8x256xf32>
    %98 = vector.broadcast %11 : vector<1x256xf32> to vector<8x256xf32>
    %99 = arith.addf %97, %98 : vector<8x256xf32>
    %100 = vector.extract_strided_slice %99 {offsets = [0, 0], sizes = [8, 128], strides = [1, 1]} : vector<8x256xf32> to vector<8x128xf32>
    %101 = vector.extract_strided_slice %92 {offsets = [0, 0], sizes = [8, 64], strides = [1, 1]} : vector<8x128xf32> to vector<8x64xf32>
    %102 = vector.extract_strided_slice %100 {offsets = [0, 0], sizes = [8, 64], strides = [1, 1]} : vector<8x128xf32> to vector<8x64xf32>
    %103 = arith.addf %101, %102 : vector<8x64xf32>
    %104 = arith.negf %103 : vector<8x64xf32>
    %105 = math.exp %104 : vector<8x64xf32>
    %cst_30 = arith.constant 1.000000e+00 : f32
    %106 = vector.broadcast %cst_30 : f32 to vector<8x64xf32>
    %107 = arith.addf %106, %105 : vector<8x64xf32>
    %108 = arith.divf %106, %107 : vector<8x64xf32>
    %109 = vector.extract_strided_slice %108 {offsets = [0, 0], sizes = [8, 32], strides = [1, 1]} : vector<8x64xf32> to vector<8x32xf32>
    %110 = vector.extract_strided_slice %108 {offsets = [0, 32], sizes = [8, 32], strides = [1, 1]} : vector<8x64xf32> to vector<8x32xf32>
    %111 = vector.extract_strided_slice %92 {offsets = [0, 64], sizes = [8, 32], strides = [1, 1]} : vector<8x128xf32> to vector<8x32xf32>
    %112 = vector.extract_strided_slice %100 {offsets = [0, 64], sizes = [8, 32], strides = [1, 1]} : vector<8x128xf32> to vector<8x32xf32>
    %113 = arith.mulf %109, %112 : vector<8x32xf32>
    %114 = arith.addf %111, %113 : vector<8x32xf32>
    %115 = math.tanh %114 : vector<8x32xf32>
    %116 = arith.subf %82, %115 : vector<8x32xf32>
    %117 = arith.mulf %110, %116 : vector<8x32xf32>
    %118 = arith.addf %115, %117 : vector<8x32xf32>
    %119 = vector.extract_strided_slice %99 {offsets = [0, 128], sizes = [8, 128], strides = [1, 1]} : vector<8x256xf32> to vector<8x128xf32>
    %120 = vector.extract_strided_slice %94 {offsets = [0, 0], sizes = [8, 64], strides = [1, 1]} : vector<8x128xf32> to vector<8x64xf32>
    %121 = vector.extract_strided_slice %119 {offsets = [0, 0], sizes = [8, 64], strides = [1, 1]} : vector<8x128xf32> to vector<8x64xf32>
    %122 = arith.addf %120, %121 : vector<8x64xf32>
    %123 = arith.negf %122 : vector<8x64xf32>
    %124 = math.exp %123 : vector<8x64xf32>
    %cst_31 = arith.constant 1.000000e+00 : f32
    %125 = vector.broadcast %cst_31 : f32 to vector<8x64xf32>
    %126 = arith.addf %125, %124 : vector<8x64xf32>
    %127 = arith.divf %125, %126 : vector<8x64xf32>
    %128 = vector.extract_strided_slice %127 {offsets = [0, 0], sizes = [8, 32], strides = [1, 1]} : vector<8x64xf32> to vector<8x32xf32>
    %129 = vector.extract_strided_slice %127 {offsets = [0, 32], sizes = [8, 32], strides = [1, 1]} : vector<8x64xf32> to vector<8x32xf32>
    %130 = vector.extract_strided_slice %94 {offsets = [0, 64], sizes = [8, 32], strides = [1, 1]} : vector<8x128xf32> to vector<8x32xf32>
    %131 = vector.extract_strided_slice %119 {offsets = [0, 64], sizes = [8, 32], strides = [1, 1]} : vector<8x128xf32> to vector<8x32xf32>
    %132 = arith.mulf %128, %131 : vector<8x32xf32>
    %133 = arith.addf %130, %132 : vector<8x32xf32>
    %134 = math.tanh %133 : vector<8x32xf32>
    %135 = arith.subf %85, %134 : vector<8x32xf32>
    %136 = arith.mulf %129, %135 : vector<8x32xf32>
    %137 = arith.addf %134, %136 : vector<8x32xf32>
    %138 = vector.broadcast %c1_i32 : i32 to vector<8x1xi32>
    %139 = arith.cmpi slt, %138, %0 : vector<8x1xi32>
    %140 = vector.broadcast %86 : i32 to vector<8x1xi32>
    %141 = arith.cmpi slt, %140, %0 : vector<8x1xi32>
    %cst_32 = arith.constant 0.000000e+00 : f32
    %142 = vector.shape_cast %139 : vector<8x1xi1> to vector<8x1xi1>
    %143 = vector.broadcast %142 : vector<8x1xi1> to vector<8x32xi1>
    %144 = vector.broadcast %cst_32 : f32 to vector<8x32xf32>
    %145 = arith.select %143, %118, %144 : vector<8x32xi1>, vector<8x32xf32>
    %146 = arith.index_cast %88 : i32 to index
    %c0_33 = arith.constant 0 : index
    %147 = vector.load %arg15[%146, %c0_33] : memref<64x64xf32, #tpu.memory_space<vmem>>, vector<8x32xf32>
    tpu.vector_store %arg15[%146, %c0_33], %145 {strides = array<i32>} : memref<64x64xf32, #tpu.memory_space<vmem>>, vector<8x32xf32>,
    %cst_34 = arith.constant 0.000000e+00 : f32
    %148 = vector.shape_cast %141 : vector<8x1xi1> to vector<8x1xi1>
    %149 = vector.broadcast %148 : vector<8x1xi1> to vector<8x32xi1>
    %150 = vector.broadcast %cst_34 : f32 to vector<8x32xf32>
    %151 = arith.select %149, %137, %150 : vector<8x32xi1>, vector<8x32xf32>
    %152 = arith.index_cast %90 : i32 to index
    %c32_35 = arith.constant 32 : index
    %153 = vector.load %arg15[%152, %c32_35] : memref<64x64xf32, #tpu.memory_space<vmem>>, vector<8x32xf32>
    tpu.vector_store %arg15[%152, %c32_35], %151 {strides = array<i32>} : memref<64x64xf32, #tpu.memory_space<vmem>>, vector<8x32xf32>,
    %154 = vector.shape_cast %139 : vector<8x1xi1> to vector<8x1xi1>
    %155 = vector.broadcast %154 : vector<8x1xi1> to vector<8x32xi1>
    %156 = arith.select %155, %118, %82 : vector<8x32xi1>, vector<8x32xf32>
    %157 = vector.shape_cast %141 : vector<8x1xi1> to vector<8x1xi1>
    %158 = vector.broadcast %157 : vector<8x1xi1> to vector<8x32xi1>
    %159 = arith.select %158, %137, %85 : vector<8x32xi1>, vector<8x32xf32>
    %c2_i32 = arith.constant 2 : i32
    %c7_i32_36 = arith.constant 7 : i32
    %160 = arith.subi %c7_i32_36, %c2_i32 : i32
    %c8_i32_37 = arith.constant 8 : i32
    %161 = arith.muli %c2_i32, %c8_i32_37 : i32
    %162 = tpu.assume_multiple %161, 8 : i32
    %c8_i32_38 = arith.constant 8 : i32
    %163 = arith.muli %160, %c8_i32_38 : i32
    %164 = tpu.assume_multiple %163, 8 : i32
    %165 = arith.index_cast %162 : i32 to index
    %c0_39 = arith.constant 0 : index
    %166 = vector.load %arg14[%165, %c0_39] : memref<64x256xf32, #tpu.memory_space<vmem>>, vector<8x128xf32>
    %167 = arith.index_cast %164 : i32 to index
    %c128_40 = arith.constant 128 : index
    %168 = vector.load %arg14[%167, %c128_40] : memref<64x256xf32, #tpu.memory_space<vmem>>, vector<8x128xf32>
    %169 = tpu.concatenate %156, %159 in 1 : vector<8x32xf32>, vector<8x32xf32> -> vector<8x64xf32>
    %170 = arith.truncf %169 : vector<8x64xf32> to vector<8x64xbf16>
    %cst_41 = arith.constant dense<0.000000e+00> : vector<8x256xf32>
    %171 = tpu.matmul %170, %10, %cst_41 {dimension_numbers = #tpu.dot_dimension_numbers<[1], [0], [0], [1], [0, 0, 1, 1], [], []>} : vector<8x64xbf16>, vector<64x256xbf16>, vector<8x256xf32> -> vector<8x256xf32>
    %172 = vector.broadcast %11 : vector<1x256xf32> to vector<8x256xf32>
    %173 = arith.addf %171, %172 : vector<8x256xf32>
    %174 = vector.extract_strided_slice %173 {offsets = [0, 0], sizes = [8, 128], strides = [1, 1]} : vector<8x256xf32> to vector<8x128xf32>
    %175 = vector.extract_strided_slice %166 {offsets = [0, 0], sizes = [8, 64], strides = [1, 1]} : vector<8x128xf32> to vector<8x64xf32>
    %176 = vector.extract_strided_slice %174 {offsets = [0, 0], sizes = [8, 64], strides = [1, 1]} : vector<8x128xf32> to vector<8x64xf32>
    %177 = arith.addf %175, %176 : vector<8x64xf32>
    %178 = arith.negf %177 : vector<8x64xf32>
    %179 = math.exp %178 : vector<8x64xf32>
    %cst_42 = arith.constant 1.000000e+00 : f32
    %180 = vector.broadcast %cst_42 : f32 to vector<8x64xf32>
    %181 = arith.addf %180, %179 : vector<8x64xf32>
    %182 = arith.divf %180, %181 : vector<8x64xf32>
    %183 = vector.extract_strided_slice %182 {offsets = [0, 0], sizes = [8, 32], strides = [1, 1]} : vector<8x64xf32> to vector<8x32xf32>
    %184 = vector.extract_strided_slice %182 {offsets = [0, 32], sizes = [8, 32], strides = [1, 1]} : vector<8x64xf32> to vector<8x32xf32>
    %185 = vector.extract_strided_slice %166 {offsets = [0, 64], sizes = [8, 32], strides = [1, 1]} : vector<8x128xf32> to vector<8x32xf32>
    %186 = vector.extract_strided_slice %174 {offsets = [0, 64], sizes = [8, 32], strides = [1, 1]} : vector<8x128xf32> to vector<8x32xf32>
    %187 = arith.mulf %183, %186 : vector<8x32xf32>
    %188 = arith.addf %185, %187 : vector<8x32xf32>
    %189 = math.tanh %188 : vector<8x32xf32>
    %190 = arith.subf %156, %189 : vector<8x32xf32>
    %191 = arith.mulf %184, %190 : vector<8x32xf32>
    %192 = arith.addf %189, %191 : vector<8x32xf32>
    %193 = vector.extract_strided_slice %173 {offsets = [0, 128], sizes = [8, 128], strides = [1, 1]} : vector<8x256xf32> to vector<8x128xf32>
    %194 = vector.extract_strided_slice %168 {offsets = [0, 0], sizes = [8, 64], strides = [1, 1]} : vector<8x128xf32> to vector<8x64xf32>
    %195 = vector.extract_strided_slice %193 {offsets = [0, 0], sizes = [8, 64], strides = [1, 1]} : vector<8x128xf32> to vector<8x64xf32>
    %196 = arith.addf %194, %195 : vector<8x64xf32>
    %197 = arith.negf %196 : vector<8x64xf32>
    %198 = math.exp %197 : vector<8x64xf32>
    %cst_43 = arith.constant 1.000000e+00 : f32
    %199 = vector.broadcast %cst_43 : f32 to vector<8x64xf32>
    %200 = arith.addf %199, %198 : vector<8x64xf32>
    %201 = arith.divf %199, %200 : vector<8x64xf32>
    %202 = vector.extract_strided_slice %201 {offsets = [0, 0], sizes = [8, 32], strides = [1, 1]} : vector<8x64xf32> to vector<8x32xf32>
    %203 = vector.extract_strided_slice %201 {offsets = [0, 32], sizes = [8, 32], strides = [1, 1]} : vector<8x64xf32> to vector<8x32xf32>
    %204 = vector.extract_strided_slice %168 {offsets = [0, 64], sizes = [8, 32], strides = [1, 1]} : vector<8x128xf32> to vector<8x32xf32>
    %205 = vector.extract_strided_slice %193 {offsets = [0, 64], sizes = [8, 32], strides = [1, 1]} : vector<8x128xf32> to vector<8x32xf32>
    %206 = arith.mulf %202, %205 : vector<8x32xf32>
    %207 = arith.addf %204, %206 : vector<8x32xf32>
    %208 = math.tanh %207 : vector<8x32xf32>
    %209 = arith.subf %159, %208 : vector<8x32xf32>
    %210 = arith.mulf %203, %209 : vector<8x32xf32>
    %211 = arith.addf %208, %210 : vector<8x32xf32>
    %212 = vector.broadcast %c2_i32 : i32 to vector<8x1xi32>
    %213 = arith.cmpi slt, %212, %0 : vector<8x1xi32>
    %214 = vector.broadcast %160 : i32 to vector<8x1xi32>
    %215 = arith.cmpi slt, %214, %0 : vector<8x1xi32>
    %cst_44 = arith.constant 0.000000e+00 : f32
    %216 = vector.shape_cast %213 : vector<8x1xi1> to vector<8x1xi1>
    %217 = vector.broadcast %216 : vector<8x1xi1> to vector<8x32xi1>
    %218 = vector.broadcast %cst_44 : f32 to vector<8x32xf32>
    %219 = arith.select %217, %192, %218 : vector<8x32xi1>, vector<8x32xf32>
    %220 = arith.index_cast %162 : i32 to index
    %c0_45 = arith.constant 0 : index
    %221 = vector.load %arg15[%220, %c0_45] : memref<64x64xf32, #tpu.memory_space<vmem>>, vector<8x32xf32>
    tpu.vector_store %arg15[%220, %c0_45], %219 {strides = array<i32>} : memref<64x64xf32, #tpu.memory_space<vmem>>, vector<8x32xf32>,
    %cst_46 = arith.constant 0.000000e+00 : f32
    %222 = vector.shape_cast %215 : vector<8x1xi1> to vector<8x1xi1>
    %223 = vector.broadcast %222 : vector<8x1xi1> to vector<8x32xi1>
    %224 = vector.broadcast %cst_46 : f32 to vector<8x32xf32>
    %225 = arith.select %223, %211, %224 : vector<8x32xi1>, vector<8x32xf32>
    %226 = arith.index_cast %164 : i32 to index
    %c32_47 = arith.constant 32 : index
    %227 = vector.load %arg15[%226, %c32_47] : memref<64x64xf32, #tpu.memory_space<vmem>>, vector<8x32xf32>
    tpu.vector_store %arg15[%226, %c32_47], %225 {strides = array<i32>} : memref<64x64xf32, #tpu.memory_space<vmem>>, vector<8x32xf32>,
    %228 = vector.shape_cast %213 : vector<8x1xi1> to vector<8x1xi1>
    %229 = vector.broadcast %228 : vector<8x1xi1> to vector<8x32xi1>
    %230 = arith.select %229, %192, %156 : vector<8x32xi1>, vector<8x32xf32>
    %231 = vector.shape_cast %215 : vector<8x1xi1> to vector<8x1xi1>
    %232 = vector.broadcast %231 : vector<8x1xi1> to vector<8x32xi1>
    %233 = arith.select %232, %211, %159 : vector<8x32xi1>, vector<8x32xf32>
    %c3_i32 = arith.constant 3 : i32
    %c7_i32_48 = arith.constant 7 : i32
    %234 = arith.subi %c7_i32_48, %c3_i32 : i32
    %c8_i32_49 = arith.constant 8 : i32
    %235 = arith.muli %c3_i32, %c8_i32_49 : i32
    %236 = tpu.assume_multiple %235, 8 : i32
    %c8_i32_50 = arith.constant 8 : i32
    %237 = arith.muli %234, %c8_i32_50 : i32
    %238 = tpu.assume_multiple %237, 8 : i32
    %239 = arith.index_cast %236 : i32 to index
    %c0_51 = arith.constant 0 : index
    %240 = vector.load %arg14[%239, %c0_51] : memref<64x256xf32, #tpu.memory_space<vmem>>, vector<8x128xf32>
    %241 = arith.index_cast %238 : i32 to index
    %c128_52 = arith.constant 128 : index
    %242 = vector.load %arg14[%241, %c128_52] : memref<64x256xf32, #tpu.memory_space<vmem>>, vector<8x128xf32>
    %243 = tpu.concatenate %230, %233 in 1 : vector<8x32xf32>, vector<8x32xf32> -> vector<8x64xf32>
    %244 = arith.truncf %243 : vector<8x64xf32> to vector<8x64xbf16>
    %cst_53 = arith.constant dense<0.000000e+00> : vector<8x256xf32>
    %245 = tpu.matmul %244, %10, %cst_53 {dimension_numbers = #tpu.dot_dimension_numbers<[1], [0], [0], [1], [0, 0, 1, 1], [], []>} : vector<8x64xbf16>, vector<64x256xbf16>, vector<8x256xf32> -> vector<8x256xf32>
    %246 = vector.broadcast %11 : vector<1x256xf32> to vector<8x256xf32>
    %247 = arith.addf %245, %246 : vector<8x256xf32>
    %248 = vector.extract_strided_slice %247 {offsets = [0, 0], sizes = [8, 128], strides = [1, 1]} : vector<8x256xf32> to vector<8x128xf32>
    %249 = vector.extract_strided_slice %240 {offsets = [0, 0], sizes = [8, 64], strides = [1, 1]} : vector<8x128xf32> to vector<8x64xf32>
    %250 = vector.extract_strided_slice %248 {offsets = [0, 0], sizes = [8, 64], strides = [1, 1]} : vector<8x128xf32> to vector<8x64xf32>
    %251 = arith.addf %249, %250 : vector<8x64xf32>
    %252 = arith.negf %251 : vector<8x64xf32>
    %253 = math.exp %252 : vector<8x64xf32>
    %cst_54 = arith.constant 1.000000e+00 : f32
    %254 = vector.broadcast %cst_54 : f32 to vector<8x64xf32>
    %255 = arith.addf %254, %253 : vector<8x64xf32>
    %256 = arith.divf %254, %255 : vector<8x64xf32>
    %257 = vector.extract_strided_slice %256 {offsets = [0, 0], sizes = [8, 32], strides = [1, 1]} : vector<8x64xf32> to vector<8x32xf32>
    %258 = vector.extract_strided_slice %256 {offsets = [0, 32], sizes = [8, 32], strides = [1, 1]} : vector<8x64xf32> to vector<8x32xf32>
    %259 = vector.extract_strided_slice %240 {offsets = [0, 64], sizes = [8, 32], strides = [1, 1]} : vector<8x128xf32> to vector<8x32xf32>
    %260 = vector.extract_strided_slice %248 {offsets = [0, 64], sizes = [8, 32], strides = [1, 1]} : vector<8x128xf32> to vector<8x32xf32>
    %261 = arith.mulf %257, %260 : vector<8x32xf32>
    %262 = arith.addf %259, %261 : vector<8x32xf32>
    %263 = math.tanh %262 : vector<8x32xf32>
    %264 = arith.subf %230, %263 : vector<8x32xf32>
    %265 = arith.mulf %258, %264 : vector<8x32xf32>
    %266 = arith.addf %263, %265 : vector<8x32xf32>
    %267 = vector.extract_strided_slice %247 {offsets = [0, 128], sizes = [8, 128], strides = [1, 1]} : vector<8x256xf32> to vector<8x128xf32>
    %268 = vector.extract_strided_slice %242 {offsets = [0, 0], sizes = [8, 64], strides = [1, 1]} : vector<8x128xf32> to vector<8x64xf32>
    %269 = vector.extract_strided_slice %267 {offsets = [0, 0], sizes = [8, 64], strides = [1, 1]} : vector<8x128xf32> to vector<8x64xf32>
    %270 = arith.addf %268, %269 : vector<8x64xf32>
    %271 = arith.negf %270 : vector<8x64xf32>
    %272 = math.exp %271 : vector<8x64xf32>
    %cst_55 = arith.constant 1.000000e+00 : f32
    %273 = vector.broadcast %cst_55 : f32 to vector<8x64xf32>
    %274 = arith.addf %273, %272 : vector<8x64xf32>
    %275 = arith.divf %273, %274 : vector<8x64xf32>
    %276 = vector.extract_strided_slice %275 {offsets = [0, 0], sizes = [8, 32], strides = [1, 1]} : vector<8x64xf32> to vector<8x32xf32>
    %277 = vector.extract_strided_slice %275 {offsets = [0, 32], sizes = [8, 32], strides = [1, 1]} : vector<8x64xf32> to vector<8x32xf32>
    %278 = vector.extract_strided_slice %242 {offsets = [0, 64], sizes = [8, 32], strides = [1, 1]} : vector<8x128xf32> to vector<8x32xf32>
    %279 = vector.extract_strided_slice %267 {offsets = [0, 64], sizes = [8, 32], strides = [1, 1]} : vector<8x128xf32> to vector<8x32xf32>
    %280 = arith.mulf %276, %279 : vector<8x32xf32>
    %281 = arith.addf %278, %280 : vector<8x32xf32>
    %282 = math.tanh %281 : vector<8x32xf32>
    %283 = arith.subf %233, %282 : vector<8x32xf32>
    %284 = arith.mulf %277, %283 : vector<8x32xf32>
    %285 = arith.addf %282, %284 : vector<8x32xf32>
    %286 = vector.broadcast %c3_i32 : i32 to vector<8x1xi32>
    %287 = arith.cmpi slt, %286, %0 : vector<8x1xi32>
    %288 = vector.broadcast %234 : i32 to vector<8x1xi32>
    %289 = arith.cmpi slt, %288, %0 : vector<8x1xi32>
    %cst_56 = arith.constant 0.000000e+00 : f32
    %290 = vector.shape_cast %287 : vector<8x1xi1> to vector<8x1xi1>
    %291 = vector.broadcast %290 : vector<8x1xi1> to vector<8x32xi1>
    %292 = vector.broadcast %cst_56 : f32 to vector<8x32xf32>
    %293 = arith.select %291, %266, %292 : vector<8x32xi1>, vector<8x32xf32>
    %294 = arith.index_cast %236 : i32 to index
    %c0_57 = arith.constant 0 : index
    %295 = vector.load %arg15[%294, %c0_57] : memref<64x64xf32, #tpu.memory_space<vmem>>, vector<8x32xf32>
    tpu.vector_store %arg15[%294, %c0_57], %293 {strides = array<i32>} : memref<64x64xf32, #tpu.memory_space<vmem>>, vector<8x32xf32>,
    %cst_58 = arith.constant 0.000000e+00 : f32
    %296 = vector.shape_cast %289 : vector<8x1xi1> to vector<8x1xi1>
    %297 = vector.broadcast %296 : vector<8x1xi1> to vector<8x32xi1>
    %298 = vector.broadcast %cst_58 : f32 to vector<8x32xf32>
    %299 = arith.select %297, %285, %298 : vector<8x32xi1>, vector<8x32xf32>
    %300 = arith.index_cast %238 : i32 to index
    %c32_59 = arith.constant 32 : index
    %301 = vector.load %arg15[%300, %c32_59] : memref<64x64xf32, #tpu.memory_space<vmem>>, vector<8x32xf32>
    tpu.vector_store %arg15[%300, %c32_59], %299 {strides = array<i32>} : memref<64x64xf32, #tpu.memory_space<vmem>>, vector<8x32xf32>,
    %302 = vector.shape_cast %287 : vector<8x1xi1> to vector<8x1xi1>
    %303 = vector.broadcast %302 : vector<8x1xi1> to vector<8x32xi1>
    %304 = arith.select %303, %266, %230 : vector<8x32xi1>, vector<8x32xf32>
    %305 = vector.shape_cast %289 : vector<8x1xi1> to vector<8x1xi1>
    %306 = vector.broadcast %305 : vector<8x1xi1> to vector<8x32xi1>
    %307 = arith.select %306, %285, %233 : vector<8x32xi1>, vector<8x32xf32>
    %c4_i32 = arith.constant 4 : i32
    %c7_i32_60 = arith.constant 7 : i32
    %308 = arith.subi %c7_i32_60, %c4_i32 : i32
    %c8_i32_61 = arith.constant 8 : i32
    %309 = arith.muli %c4_i32, %c8_i32_61 : i32
    %310 = tpu.assume_multiple %309, 8 : i32
    %c8_i32_62 = arith.constant 8 : i32
    %311 = arith.muli %308, %c8_i32_62 : i32
    %312 = tpu.assume_multiple %311, 8 : i32
    %313 = arith.index_cast %310 : i32 to index
    %c0_63 = arith.constant 0 : index
    %314 = vector.load %arg14[%313, %c0_63] : memref<64x256xf32, #tpu.memory_space<vmem>>, vector<8x128xf32>
    %315 = arith.index_cast %312 : i32 to index
    %c128_64 = arith.constant 128 : index
    %316 = vector.load %arg14[%315, %c128_64] : memref<64x256xf32, #tpu.memory_space<vmem>>, vector<8x128xf32>
    %317 = tpu.concatenate %304, %307 in 1 : vector<8x32xf32>, vector<8x32xf32> -> vector<8x64xf32>
    %318 = arith.truncf %317 : vector<8x64xf32> to vector<8x64xbf16>
    %cst_65 = arith.constant dense<0.000000e+00> : vector<8x256xf32>
    %319 = tpu.matmul %318, %10, %cst_65 {dimension_numbers = #tpu.dot_dimension_numbers<[1], [0], [0], [1], [0, 0, 1, 1], [], []>} : vector<8x64xbf16>, vector<64x256xbf16>, vector<8x256xf32> -> vector<8x256xf32>
    %320 = vector.broadcast %11 : vector<1x256xf32> to vector<8x256xf32>
    %321 = arith.addf %319, %320 : vector<8x256xf32>
    %322 = vector.extract_strided_slice %321 {offsets = [0, 0], sizes = [8, 128], strides = [1, 1]} : vector<8x256xf32> to vector<8x128xf32>
    %323 = vector.extract_strided_slice %314 {offsets = [0, 0], sizes = [8, 64], strides = [1, 1]} : vector<8x128xf32> to vector<8x64xf32>
    %324 = vector.extract_strided_slice %322 {offsets = [0, 0], sizes = [8, 64], strides = [1, 1]} : vector<8x128xf32> to vector<8x64xf32>
    %325 = arith.addf %323, %324 : vector<8x64xf32>
    %326 = arith.negf %325 : vector<8x64xf32>
    %327 = math.exp %326 : vector<8x64xf32>
    %cst_66 = arith.constant 1.000000e+00 : f32
    %328 = vector.broadcast %cst_66 : f32 to vector<8x64xf32>
    %329 = arith.addf %328, %327 : vector<8x64xf32>
    %330 = arith.divf %328, %329 : vector<8x64xf32>
    %331 = vector.extract_strided_slice %330 {offsets = [0, 0], sizes = [8, 32], strides = [1, 1]} : vector<8x64xf32> to vector<8x32xf32>
    %332 = vector.extract_strided_slice %330 {offsets = [0, 32], sizes = [8, 32], strides = [1, 1]} : vector<8x64xf32> to vector<8x32xf32>
    %333 = vector.extract_strided_slice %314 {offsets = [0, 64], sizes = [8, 32], strides = [1, 1]} : vector<8x128xf32> to vector<8x32xf32>
    %334 = vector.extract_strided_slice %322 {offsets = [0, 64], sizes = [8, 32], strides = [1, 1]} : vector<8x128xf32> to vector<8x32xf32>
    %335 = arith.mulf %331, %334 : vector<8x32xf32>
    %336 = arith.addf %333, %335 : vector<8x32xf32>
    %337 = math.tanh %336 : vector<8x32xf32>
    %338 = arith.subf %304, %337 : vector<8x32xf32>
    %339 = arith.mulf %332, %338 : vector<8x32xf32>
    %340 = arith.addf %337, %339 : vector<8x32xf32>
    %341 = vector.extract_strided_slice %321 {offsets = [0, 128], sizes = [8, 128], strides = [1, 1]} : vector<8x256xf32> to vector<8x128xf32>
    %342 = vector.extract_strided_slice %316 {offsets = [0, 0], sizes = [8, 64], strides = [1, 1]} : vector<8x128xf32> to vector<8x64xf32>
    %343 = vector.extract_strided_slice %341 {offsets = [0, 0], sizes = [8, 64], strides = [1, 1]} : vector<8x128xf32> to vector<8x64xf32>
    %344 = arith.addf %342, %343 : vector<8x64xf32>
    %345 = arith.negf %344 : vector<8x64xf32>
    %346 = math.exp %345 : vector<8x64xf32>
    %cst_67 = arith.constant 1.000000e+00 : f32
    %347 = vector.broadcast %cst_67 : f32 to vector<8x64xf32>
    %348 = arith.addf %347, %346 : vector<8x64xf32>
    %349 = arith.divf %347, %348 : vector<8x64xf32>
    %350 = vector.extract_strided_slice %349 {offsets = [0, 0], sizes = [8, 32], strides = [1, 1]} : vector<8x64xf32> to vector<8x32xf32>
    %351 = vector.extract_strided_slice %349 {offsets = [0, 32], sizes = [8, 32], strides = [1, 1]} : vector<8x64xf32> to vector<8x32xf32>
    %352 = vector.extract_strided_slice %316 {offsets = [0, 64], sizes = [8, 32], strides = [1, 1]} : vector<8x128xf32> to vector<8x32xf32>
    %353 = vector.extract_strided_slice %341 {offsets = [0, 64], sizes = [8, 32], strides = [1, 1]} : vector<8x128xf32> to vector<8x32xf32>
    %354 = arith.mulf %350, %353 : vector<8x32xf32>
    %355 = arith.addf %352, %354 : vector<8x32xf32>
    %356 = math.tanh %355 : vector<8x32xf32>
    %357 = arith.subf %307, %356 : vector<8x32xf32>
    %358 = arith.mulf %351, %357 : vector<8x32xf32>
    %359 = arith.addf %356, %358 : vector<8x32xf32>
    %360 = vector.broadcast %c4_i32 : i32 to vector<8x1xi32>
    %361 = arith.cmpi slt, %360, %0 : vector<8x1xi32>
    %362 = vector.broadcast %308 : i32 to vector<8x1xi32>
    %363 = arith.cmpi slt, %362, %0 : vector<8x1xi32>
    %cst_68 = arith.constant 0.000000e+00 : f32
    %364 = vector.shape_cast %361 : vector<8x1xi1> to vector<8x1xi1>
    %365 = vector.broadcast %364 : vector<8x1xi1> to vector<8x32xi1>
    %366 = vector.broadcast %cst_68 : f32 to vector<8x32xf32>
    %367 = arith.select %365, %340, %366 : vector<8x32xi1>, vector<8x32xf32>
    %368 = arith.index_cast %310 : i32 to index
    %c0_69 = arith.constant 0 : index
    %369 = vector.load %arg15[%368, %c0_69] : memref<64x64xf32, #tpu.memory_space<vmem>>, vector<8x32xf32>
    tpu.vector_store %arg15[%368, %c0_69], %367 {strides = array<i32>} : memref<64x64xf32, #tpu.memory_space<vmem>>, vector<8x32xf32>,
    %cst_70 = arith.constant 0.000000e+00 : f32
    %370 = vector.shape_cast %363 : vector<8x1xi1> to vector<8x1xi1>
    %371 = vector.broadcast %370 : vector<8x1xi1> to vector<8x32xi1>
    %372 = vector.broadcast %cst_70 : f32 to vector<8x32xf32>
    %373 = arith.select %371, %359, %372 : vector<8x32xi1>, vector<8x32xf32>
    %374 = arith.index_cast %312 : i32 to index
    %c32_71 = arith.constant 32 : index
    %375 = vector.load %arg15[%374, %c32_71] : memref<64x64xf32, #tpu.memory_space<vmem>>, vector<8x32xf32>
    tpu.vector_store %arg15[%374, %c32_71], %373 {strides = array<i32>} : memref<64x64xf32, #tpu.memory_space<vmem>>, vector<8x32xf32>,
    %376 = vector.shape_cast %361 : vector<8x1xi1> to vector<8x1xi1>
    %377 = vector.broadcast %376 : vector<8x1xi1> to vector<8x32xi1>
    %378 = arith.select %377, %340, %304 : vector<8x32xi1>, vector<8x32xf32>
    %379 = vector.shape_cast %363 : vector<8x1xi1> to vector<8x1xi1>
    %380 = vector.broadcast %379 : vector<8x1xi1> to vector<8x32xi1>
    %381 = arith.select %380, %359, %307 : vector<8x32xi1>, vector<8x32xf32>
    %c5_i32 = arith.constant 5 : i32
    %c7_i32_72 = arith.constant 7 : i32
    %382 = arith.subi %c7_i32_72, %c5_i32 : i32
    %c8_i32_73 = arith.constant 8 : i32
    %383 = arith.muli %c5_i32, %c8_i32_73 : i32
    %384 = tpu.assume_multiple %383, 8 : i32
    %c8_i32_74 = arith.constant 8 : i32
    %385 = arith.muli %382, %c8_i32_74 : i32
    %386 = tpu.assume_multiple %385, 8 : i32
    %387 = arith.index_cast %384 : i32 to index
    %c0_75 = arith.constant 0 : index
    %388 = vector.load %arg14[%387, %c0_75] : memref<64x256xf32, #tpu.memory_space<vmem>>, vector<8x128xf32>
    %389 = arith.index_cast %386 : i32 to index
    %c128_76 = arith.constant 128 : index
    %390 = vector.load %arg14[%389, %c128_76] : memref<64x256xf32, #tpu.memory_space<vmem>>, vector<8x128xf32>
    %391 = tpu.concatenate %378, %381 in 1 : vector<8x32xf32>, vector<8x32xf32> -> vector<8x64xf32>
    %392 = arith.truncf %391 : vector<8x64xf32> to vector<8x64xbf16>
    %cst_77 = arith.constant dense<0.000000e+00> : vector<8x256xf32>
    %393 = tpu.matmul %392, %10, %cst_77 {dimension_numbers = #tpu.dot_dimension_numbers<[1], [0], [0], [1], [0, 0, 1, 1], [], []>} : vector<8x64xbf16>, vector<64x256xbf16>, vector<8x256xf32> -> vector<8x256xf32>
    %394 = vector.broadcast %11 : vector<1x256xf32> to vector<8x256xf32>
    %395 = arith.addf %393, %394 : vector<8x256xf32>
    %396 = vector.extract_strided_slice %395 {offsets = [0, 0], sizes = [8, 128], strides = [1, 1]} : vector<8x256xf32> to vector<8x128xf32>
    %397 = vector.extract_strided_slice %388 {offsets = [0, 0], sizes = [8, 64], strides = [1, 1]} : vector<8x128xf32> to vector<8x64xf32>
    %398 = vector.extract_strided_slice %396 {offsets = [0, 0], sizes = [8, 64], strides = [1, 1]} : vector<8x128xf32> to vector<8x64xf32>
    %399 = arith.addf %397, %398 : vector<8x64xf32>
    %400 = arith.negf %399 : vector<8x64xf32>
    %401 = math.exp %400 : vector<8x64xf32>
    %cst_78 = arith.constant 1.000000e+00 : f32
    %402 = vector.broadcast %cst_78 : f32 to vector<8x64xf32>
    %403 = arith.addf %402, %401 : vector<8x64xf32>
    %404 = arith.divf %402, %403 : vector<8x64xf32>
    %405 = vector.extract_strided_slice %404 {offsets = [0, 0], sizes = [8, 32], strides = [1, 1]} : vector<8x64xf32> to vector<8x32xf32>
    %406 = vector.extract_strided_slice %404 {offsets = [0, 32], sizes = [8, 32], strides = [1, 1]} : vector<8x64xf32> to vector<8x32xf32>
    %407 = vector.extract_strided_slice %388 {offsets = [0, 64], sizes = [8, 32], strides = [1, 1]} : vector<8x128xf32> to vector<8x32xf32>
    %408 = vector.extract_strided_slice %396 {offsets = [0, 64], sizes = [8, 32], strides = [1, 1]} : vector<8x128xf32> to vector<8x32xf32>
    %409 = arith.mulf %405, %408 : vector<8x32xf32>
    %410 = arith.addf %407, %409 : vector<8x32xf32>
    %411 = math.tanh %410 : vector<8x32xf32>
    %412 = arith.subf %378, %411 : vector<8x32xf32>
    %413 = arith.mulf %406, %412 : vector<8x32xf32>
    %414 = arith.addf %411, %413 : vector<8x32xf32>
    %415 = vector.extract_strided_slice %395 {offsets = [0, 128], sizes = [8, 128], strides = [1, 1]} : vector<8x256xf32> to vector<8x128xf32>
    %416 = vector.extract_strided_slice %390 {offsets = [0, 0], sizes = [8, 64], strides = [1, 1]} : vector<8x128xf32> to vector<8x64xf32>
    %417 = vector.extract_strided_slice %415 {offsets = [0, 0], sizes = [8, 64], strides = [1, 1]} : vector<8x128xf32> to vector<8x64xf32>
    %418 = arith.addf %416, %417 : vector<8x64xf32>
    %419 = arith.negf %418 : vector<8x64xf32>
    %420 = math.exp %419 : vector<8x64xf32>
    %cst_79 = arith.constant 1.000000e+00 : f32
    %421 = vector.broadcast %cst_79 : f32 to vector<8x64xf32>
    %422 = arith.addf %421, %420 : vector<8x64xf32>
    %423 = arith.divf %421, %422 : vector<8x64xf32>
    %424 = vector.extract_strided_slice %423 {offsets = [0, 0], sizes = [8, 32], strides = [1, 1]} : vector<8x64xf32> to vector<8x32xf32>
    %425 = vector.extract_strided_slice %423 {offsets = [0, 32], sizes = [8, 32], strides = [1, 1]} : vector<8x64xf32> to vector<8x32xf32>
    %426 = vector.extract_strided_slice %390 {offsets = [0, 64], sizes = [8, 32], strides = [1, 1]} : vector<8x128xf32> to vector<8x32xf32>
    %427 = vector.extract_strided_slice %415 {offsets = [0, 64], sizes = [8, 32], strides = [1, 1]} : vector<8x128xf32> to vector<8x32xf32>
    %428 = arith.mulf %424, %427 : vector<8x32xf32>
    %429 = arith.addf %426, %428 : vector<8x32xf32>
    %430 = math.tanh %429 : vector<8x32xf32>
    %431 = arith.subf %381, %430 : vector<8x32xf32>
    %432 = arith.mulf %425, %431 : vector<8x32xf32>
    %433 = arith.addf %430, %432 : vector<8x32xf32>
    %434 = vector.broadcast %c5_i32 : i32 to vector<8x1xi32>
    %435 = arith.cmpi slt, %434, %0 : vector<8x1xi32>
    %436 = vector.broadcast %382 : i32 to vector<8x1xi32>
    %437 = arith.cmpi slt, %436, %0 : vector<8x1xi32>
    %cst_80 = arith.constant 0.000000e+00 : f32
    %438 = vector.shape_cast %435 : vector<8x1xi1> to vector<8x1xi1>
    %439 = vector.broadcast %438 : vector<8x1xi1> to vector<8x32xi1>
    %440 = vector.broadcast %cst_80 : f32 to vector<8x32xf32>
    %441 = arith.select %439, %414, %440 : vector<8x32xi1>, vector<8x32xf32>
    %442 = arith.index_cast %384 : i32 to index
    %c0_81 = arith.constant 0 : index
    %443 = vector.load %arg15[%442, %c0_81] : memref<64x64xf32, #tpu.memory_space<vmem>>, vector<8x32xf32>
    tpu.vector_store %arg15[%442, %c0_81], %441 {strides = array<i32>} : memref<64x64xf32, #tpu.memory_space<vmem>>, vector<8x32xf32>,
    %cst_82 = arith.constant 0.000000e+00 : f32
    %444 = vector.shape_cast %437 : vector<8x1xi1> to vector<8x1xi1>
    %445 = vector.broadcast %444 : vector<8x1xi1> to vector<8x32xi1>
    %446 = vector.broadcast %cst_82 : f32 to vector<8x32xf32>
    %447 = arith.select %445, %433, %446 : vector<8x32xi1>, vector<8x32xf32>
    %448 = arith.index_cast %386 : i32 to index
    %c32_83 = arith.constant 32 : index
    %449 = vector.load %arg15[%448, %c32_83] : memref<64x64xf32, #tpu.memory_space<vmem>>, vector<8x32xf32>
    tpu.vector_store %arg15[%448, %c32_83], %447 {strides = array<i32>} : memref<64x64xf32, #tpu.memory_space<vmem>>, vector<8x32xf32>,
    %450 = vector.shape_cast %435 : vector<8x1xi1> to vector<8x1xi1>
    %451 = vector.broadcast %450 : vector<8x1xi1> to vector<8x32xi1>
    %452 = arith.select %451, %414, %378 : vector<8x32xi1>, vector<8x32xf32>
    %453 = vector.shape_cast %437 : vector<8x1xi1> to vector<8x1xi1>
    %454 = vector.broadcast %453 : vector<8x1xi1> to vector<8x32xi1>
    %455 = arith.select %454, %433, %381 : vector<8x32xi1>, vector<8x32xf32>
    %c6_i32 = arith.constant 6 : i32
    %c7_i32_84 = arith.constant 7 : i32
    %456 = arith.subi %c7_i32_84, %c6_i32 : i32
    %c8_i32_85 = arith.constant 8 : i32
    %457 = arith.muli %c6_i32, %c8_i32_85 : i32
    %458 = tpu.assume_multiple %457, 8 : i32
    %c8_i32_86 = arith.constant 8 : i32
    %459 = arith.muli %456, %c8_i32_86 : i32
    %460 = tpu.assume_multiple %459, 8 : i32
    %461 = arith.index_cast %458 : i32 to index
    %c0_87 = arith.constant 0 : index
    %462 = vector.load %arg14[%461, %c0_87] : memref<64x256xf32, #tpu.memory_space<vmem>>, vector<8x128xf32>
    %463 = arith.index_cast %460 : i32 to index
    %c128_88 = arith.constant 128 : index
    %464 = vector.load %arg14[%463, %c128_88] : memref<64x256xf32, #tpu.memory_space<vmem>>, vector<8x128xf32>
    %465 = tpu.concatenate %452, %455 in 1 : vector<8x32xf32>, vector<8x32xf32> -> vector<8x64xf32>
    %466 = arith.truncf %465 : vector<8x64xf32> to vector<8x64xbf16>
    %cst_89 = arith.constant dense<0.000000e+00> : vector<8x256xf32>
    %467 = tpu.matmul %466, %10, %cst_89 {dimension_numbers = #tpu.dot_dimension_numbers<[1], [0], [0], [1], [0, 0, 1, 1], [], []>} : vector<8x64xbf16>, vector<64x256xbf16>, vector<8x256xf32> -> vector<8x256xf32>
    %468 = vector.broadcast %11 : vector<1x256xf32> to vector<8x256xf32>
    %469 = arith.addf %467, %468 : vector<8x256xf32>
    %470 = vector.extract_strided_slice %469 {offsets = [0, 0], sizes = [8, 128], strides = [1, 1]} : vector<8x256xf32> to vector<8x128xf32>
    %471 = vector.extract_strided_slice %462 {offsets = [0, 0], sizes = [8, 64], strides = [1, 1]} : vector<8x128xf32> to vector<8x64xf32>
    %472 = vector.extract_strided_slice %470 {offsets = [0, 0], sizes = [8, 64], strides = [1, 1]} : vector<8x128xf32> to vector<8x64xf32>
    %473 = arith.addf %471, %472 : vector<8x64xf32>
    %474 = arith.negf %473 : vector<8x64xf32>
    %475 = math.exp %474 : vector<8x64xf32>
    %cst_90 = arith.constant 1.000000e+00 : f32
    %476 = vector.broadcast %cst_90 : f32 to vector<8x64xf32>
    %477 = arith.addf %476, %475 : vector<8x64xf32>
    %478 = arith.divf %476, %477 : vector<8x64xf32>
    %479 = vector.extract_strided_slice %478 {offsets = [0, 0], sizes = [8, 32], strides = [1, 1]} : vector<8x64xf32> to vector<8x32xf32>
    %480 = vector.extract_strided_slice %478 {offsets = [0, 32], sizes = [8, 32], strides = [1, 1]} : vector<8x64xf32> to vector<8x32xf32>
    %481 = vector.extract_strided_slice %462 {offsets = [0, 64], sizes = [8, 32], strides = [1, 1]} : vector<8x128xf32> to vector<8x32xf32>
    %482 = vector.extract_strided_slice %470 {offsets = [0, 64], sizes = [8, 32], strides = [1, 1]} : vector<8x128xf32> to vector<8x32xf32>
    %483 = arith.mulf %479, %482 : vector<8x32xf32>
    %484 = arith.addf %481, %483 : vector<8x32xf32>
    %485 = math.tanh %484 : vector<8x32xf32>
    %486 = arith.subf %452, %485 : vector<8x32xf32>
    %487 = arith.mulf %480, %486 : vector<8x32xf32>
    %488 = arith.addf %485, %487 : vector<8x32xf32>
    %489 = vector.extract_strided_slice %469 {offsets = [0, 128], sizes = [8, 128], strides = [1, 1]} : vector<8x256xf32> to vector<8x128xf32>
    %490 = vector.extract_strided_slice %464 {offsets = [0, 0], sizes = [8, 64], strides = [1, 1]} : vector<8x128xf32> to vector<8x64xf32>
    %491 = vector.extract_strided_slice %489 {offsets = [0, 0], sizes = [8, 64], strides = [1, 1]} : vector<8x128xf32> to vector<8x64xf32>
    %492 = arith.addf %490, %491 : vector<8x64xf32>
    %493 = arith.negf %492 : vector<8x64xf32>
    %494 = math.exp %493 : vector<8x64xf32>
    %cst_91 = arith.constant 1.000000e+00 : f32
    %495 = vector.broadcast %cst_91 : f32 to vector<8x64xf32>
    %496 = arith.addf %495, %494 : vector<8x64xf32>
    %497 = arith.divf %495, %496 : vector<8x64xf32>
    %498 = vector.extract_strided_slice %497 {offsets = [0, 0], sizes = [8, 32], strides = [1, 1]} : vector<8x64xf32> to vector<8x32xf32>
    %499 = vector.extract_strided_slice %497 {offsets = [0, 32], sizes = [8, 32], strides = [1, 1]} : vector<8x64xf32> to vector<8x32xf32>
    %500 = vector.extract_strided_slice %464 {offsets = [0, 64], sizes = [8, 32], strides = [1, 1]} : vector<8x128xf32> to vector<8x32xf32>
    %501 = vector.extract_strided_slice %489 {offsets = [0, 64], sizes = [8, 32], strides = [1, 1]} : vector<8x128xf32> to vector<8x32xf32>
    %502 = arith.mulf %498, %501 : vector<8x32xf32>
    %503 = arith.addf %500, %502 : vector<8x32xf32>
    %504 = math.tanh %503 : vector<8x32xf32>
    %505 = arith.subf %455, %504 : vector<8x32xf32>
    %506 = arith.mulf %499, %505 : vector<8x32xf32>
    %507 = arith.addf %504, %506 : vector<8x32xf32>
    %508 = vector.broadcast %c6_i32 : i32 to vector<8x1xi32>
    %509 = arith.cmpi slt, %508, %0 : vector<8x1xi32>
    %510 = vector.broadcast %456 : i32 to vector<8x1xi32>
    %511 = arith.cmpi slt, %510, %0 : vector<8x1xi32>
    %cst_92 = arith.constant 0.000000e+00 : f32
    %512 = vector.shape_cast %509 : vector<8x1xi1> to vector<8x1xi1>
    %513 = vector.broadcast %512 : vector<8x1xi1> to vector<8x32xi1>
    %514 = vector.broadcast %cst_92 : f32 to vector<8x32xf32>
    %515 = arith.select %513, %488, %514 : vector<8x32xi1>, vector<8x32xf32>
    %516 = arith.index_cast %458 : i32 to index
    %c0_93 = arith.constant 0 : index
    %517 = vector.load %arg15[%516, %c0_93] : memref<64x64xf32, #tpu.memory_space<vmem>>, vector<8x32xf32>
    tpu.vector_store %arg15[%516, %c0_93], %515 {strides = array<i32>} : memref<64x64xf32, #tpu.memory_space<vmem>>, vector<8x32xf32>,
    %cst_94 = arith.constant 0.000000e+00 : f32
    %518 = vector.shape_cast %511 : vector<8x1xi1> to vector<8x1xi1>
    %519 = vector.broadcast %518 : vector<8x1xi1> to vector<8x32xi1>
    %520 = vector.broadcast %cst_94 : f32 to vector<8x32xf32>
    %521 = arith.select %519, %507, %520 : vector<8x32xi1>, vector<8x32xf32>
    %522 = arith.index_cast %460 : i32 to index
    %c32_95 = arith.constant 32 : index
    %523 = vector.load %arg15[%522, %c32_95] : memref<64x64xf32, #tpu.memory_space<vmem>>, vector<8x32xf32>
    tpu.vector_store %arg15[%522, %c32_95], %521 {strides = array<i32>} : memref<64x64xf32, #tpu.memory_space<vmem>>, vector<8x32xf32>,
    %524 = vector.shape_cast %509 : vector<8x1xi1> to vector<8x1xi1>
    %525 = vector.broadcast %524 : vector<8x1xi1> to vector<8x32xi1>
    %526 = arith.select %525, %488, %452 : vector<8x32xi1>, vector<8x32xf32>
    %527 = vector.shape_cast %511 : vector<8x1xi1> to vector<8x1xi1>
    %528 = vector.broadcast %527 : vector<8x1xi1> to vector<8x32xi1>
    %529 = arith.select %528, %507, %455 : vector<8x32xi1>, vector<8x32xf32>
    %c7_i32_96 = arith.constant 7 : i32
    %c7_i32_97 = arith.constant 7 : i32
    %530 = arith.subi %c7_i32_97, %c7_i32_96 : i32
    %c8_i32_98 = arith.constant 8 : i32
    %531 = arith.muli %c7_i32_96, %c8_i32_98 : i32
    %532 = tpu.assume_multiple %531, 8 : i32
    %c8_i32_99 = arith.constant 8 : i32
    %533 = arith.muli %530, %c8_i32_99 : i32
    %534 = tpu.assume_multiple %533, 8 : i32
    %535 = arith.index_cast %532 : i32 to index
    %c0_100 = arith.constant 0 : index
    %536 = vector.load %arg14[%535, %c0_100] : memref<64x256xf32, #tpu.memory_space<vmem>>, vector<8x128xf32>
    %537 = arith.index_cast %534 : i32 to index
    %c128_101 = arith.constant 128 : index
    %538 = vector.load %arg14[%537, %c128_101] : memref<64x256xf32, #tpu.memory_space<vmem>>, vector<8x128xf32>
    %539 = tpu.concatenate %526, %529 in 1 : vector<8x32xf32>, vector<8x32xf32> -> vector<8x64xf32>
    %540 = arith.truncf %539 : vector<8x64xf32> to vector<8x64xbf16>
    %cst_102 = arith.constant dense<0.000000e+00> : vector<8x256xf32>
    %541 = tpu.matmul %540, %10, %cst_102 {dimension_numbers = #tpu.dot_dimension_numbers<[1], [0], [0], [1], [0, 0, 1, 1], [], []>} : vector<8x64xbf16>, vector<64x256xbf16>, vector<8x256xf32> -> vector<8x256xf32>
    %542 = vector.broadcast %11 : vector<1x256xf32> to vector<8x256xf32>
    %543 = arith.addf %541, %542 : vector<8x256xf32>
    %544 = vector.extract_strided_slice %543 {offsets = [0, 0], sizes = [8, 128], strides = [1, 1]} : vector<8x256xf32> to vector<8x128xf32>
    %545 = vector.extract_strided_slice %536 {offsets = [0, 0], sizes = [8, 64], strides = [1, 1]} : vector<8x128xf32> to vector<8x64xf32>
    %546 = vector.extract_strided_slice %544 {offsets = [0, 0], sizes = [8, 64], strides = [1, 1]} : vector<8x128xf32> to vector<8x64xf32>
    %547 = arith.addf %545, %546 : vector<8x64xf32>
    %548 = arith.negf %547 : vector<8x64xf32>
    %549 = math.exp %548 : vector<8x64xf32>
    %cst_103 = arith.constant 1.000000e+00 : f32
    %550 = vector.broadcast %cst_103 : f32 to vector<8x64xf32>
    %551 = arith.addf %550, %549 : vector<8x64xf32>
    %552 = arith.divf %550, %551 : vector<8x64xf32>
    %553 = vector.extract_strided_slice %552 {offsets = [0, 0], sizes = [8, 32], strides = [1, 1]} : vector<8x64xf32> to vector<8x32xf32>
    %554 = vector.extract_strided_slice %552 {offsets = [0, 32], sizes = [8, 32], strides = [1, 1]} : vector<8x64xf32> to vector<8x32xf32>
    %555 = vector.extract_strided_slice %536 {offsets = [0, 64], sizes = [8, 32], strides = [1, 1]} : vector<8x128xf32> to vector<8x32xf32>
    %556 = vector.extract_strided_slice %544 {offsets = [0, 64], sizes = [8, 32], strides = [1, 1]} : vector<8x128xf32> to vector<8x32xf32>
    %557 = arith.mulf %553, %556 : vector<8x32xf32>
    %558 = arith.addf %555, %557 : vector<8x32xf32>
    %559 = math.tanh %558 : vector<8x32xf32>
    %560 = arith.subf %526, %559 : vector<8x32xf32>
    %561 = arith.mulf %554, %560 : vector<8x32xf32>
    %562 = arith.addf %559, %561 : vector<8x32xf32>
    %563 = vector.extract_strided_slice %543 {offsets = [0, 128], sizes = [8, 128], strides = [1, 1]} : vector<8x256xf32> to vector<8x128xf32>
    %564 = vector.extract_strided_slice %538 {offsets = [0, 0], sizes = [8, 64], strides = [1, 1]} : vector<8x128xf32> to vector<8x64xf32>
    %565 = vector.extract_strided_slice %563 {offsets = [0, 0], sizes = [8, 64], strides = [1, 1]} : vector<8x128xf32> to vector<8x64xf32>
    %566 = arith.addf %564, %565 : vector<8x64xf32>
    %567 = arith.negf %566 : vector<8x64xf32>
    %568 = math.exp %567 : vector<8x64xf32>
    %cst_104 = arith.constant 1.000000e+00 : f32
    %569 = vector.broadcast %cst_104 : f32 to vector<8x64xf32>
    %570 = arith.addf %569, %568 : vector<8x64xf32>
    %571 = arith.divf %569, %570 : vector<8x64xf32>
    %572 = vector.extract_strided_slice %571 {offsets = [0, 0], sizes = [8, 32], strides = [1, 1]} : vector<8x64xf32> to vector<8x32xf32>
    %573 = vector.extract_strided_slice %571 {offsets = [0, 32], sizes = [8, 32], strides = [1, 1]} : vector<8x64xf32> to vector<8x32xf32>
    %574 = vector.extract_strided_slice %538 {offsets = [0, 64], sizes = [8, 32], strides = [1, 1]} : vector<8x128xf32> to vector<8x32xf32>
    %575 = vector.extract_strided_slice %563 {offsets = [0, 64], sizes = [8, 32], strides = [1, 1]} : vector<8x128xf32> to vector<8x32xf32>
    %576 = arith.mulf %572, %575 : vector<8x32xf32>
    %577 = arith.addf %574, %576 : vector<8x32xf32>
    %578 = math.tanh %577 : vector<8x32xf32>
    %579 = arith.subf %529, %578 : vector<8x32xf32>
    %580 = arith.mulf %573, %579 : vector<8x32xf32>
    %581 = arith.addf %578, %580 : vector<8x32xf32>
    %582 = vector.broadcast %c7_i32_96 : i32 to vector<8x1xi32>
    %583 = arith.cmpi slt, %582, %0 : vector<8x1xi32>
    %584 = vector.broadcast %530 : i32 to vector<8x1xi32>
    %585 = arith.cmpi slt, %584, %0 : vector<8x1xi32>
    %cst_105 = arith.constant 0.000000e+00 : f32
    %586 = vector.shape_cast %583 : vector<8x1xi1> to vector<8x1xi1>
    %587 = vector.broadcast %586 : vector<8x1xi1> to vector<8x32xi1>
    %588 = vector.broadcast %cst_105 : f32 to vector<8x32xf32>
    %589 = arith.select %587, %562, %588 : vector<8x32xi1>, vector<8x32xf32>
    %590 = arith.index_cast %532 : i32 to index
    %c0_106 = arith.constant 0 : index
    %591 = vector.load %arg15[%590, %c0_106] : memref<64x64xf32, #tpu.memory_space<vmem>>, vector<8x32xf32>
    tpu.vector_store %arg15[%590, %c0_106], %589 {strides = array<i32>} : memref<64x64xf32, #tpu.memory_space<vmem>>, vector<8x32xf32>,
    %cst_107 = arith.constant 0.000000e+00 : f32
    %592 = vector.shape_cast %585 : vector<8x1xi1> to vector<8x1xi1>
    %593 = vector.broadcast %592 : vector<8x1xi1> to vector<8x32xi1>
    %594 = vector.broadcast %cst_107 : f32 to vector<8x32xf32>
    %595 = arith.select %593, %581, %594 : vector<8x32xi1>, vector<8x32xf32>
    %596 = arith.index_cast %534 : i32 to index
    %c32_108 = arith.constant 32 : index
    %597 = vector.load %arg15[%596, %c32_108] : memref<64x64xf32, #tpu.memory_space<vmem>>, vector<8x32xf32>
    tpu.vector_store %arg15[%596, %c32_108], %595 {strides = array<i32>} : memref<64x64xf32, #tpu.memory_space<vmem>>, vector<8x32xf32>,
    %598 = vector.shape_cast %583 : vector<8x1xi1> to vector<8x1xi1>
    %599 = vector.broadcast %598 : vector<8x1xi1> to vector<8x32xi1>
    %600 = arith.select %599, %562, %526 : vector<8x32xi1>, vector<8x32xf32>
    %601 = vector.shape_cast %585 : vector<8x1xi1> to vector<8x1xi1>
    %602 = vector.broadcast %601 : vector<8x1xi1> to vector<8x32xi1>
    %603 = arith.select %602, %581, %529 : vector<8x32xi1>, vector<8x32xf32>
    %c8_i32_109 = arith.constant 8 : i32
    %c0_110 = arith.constant 0 : index
    %c0_111 = arith.constant 0 : index
    %604 = vector.load %arg15[%c0_110, %c0_111] : memref<64x64xf32, #tpu.memory_space<vmem>>, vector<64x64xf32>
    %605 = arith.truncf %604 : vector<64x64xf32> to vector<64x64xbf16>
    %c0_112 = arith.constant 0 : index
    %c0_113 = arith.constant 0 : index
    %606 = vector.load %arg7[%c0_112, %c0_113] : memref<64x256xbf16, #tpu.memory_space<vmem>>, vector<64x256xbf16>
    %cst_114 = arith.constant dense<0.000000e+00> : vector<64x256xf32>
    %607 = tpu.matmul %605, %606, %cst_114 {dimension_numbers = #tpu.dot_dimension_numbers<[1], [0], [0], [1], [0, 0, 1, 1], [], []>} : vector<64x64xbf16>, vector<64x256xbf16>, vector<64x256xf32> -> vector<64x256xf32>
    %c0_115 = arith.constant 0 : index
    %c0_116 = arith.constant 0 : index
    %608 = vector.load %arg8[%c0_115, %c0_116] : memref<1x256xf32, #tpu.memory_space<vmem>>, vector<1x256xf32>
    %609 = vector.broadcast %608 : vector<1x256xf32> to vector<64x256xf32>
    %610 = arith.addf %607, %609 : vector<64x256xf32>
    %c0_117 = arith.constant 0 : index
    %c0_118 = arith.constant 0 : index
    %611 = vector.load %arg14[%c0_117, %c0_118] : memref<64x256xf32, #tpu.memory_space<vmem>>, vector<64x256xf32>
    tpu.vector_store %arg14[%c0_117, %c0_118], %610 {strides = array<i32>} : memref<64x256xf32, #tpu.memory_space<vmem>>, vector<64x256xf32>,
    %c0_119 = arith.constant 0 : index
    %c0_120 = arith.constant 0 : index
    %612 = vector.load %arg9[%c0_119, %c0_120] : memref<64x256xbf16, #tpu.memory_space<vmem>>, vector<64x256xbf16>
    %c0_121 = arith.constant 0 : index
    %c0_122 = arith.constant 0 : index
    %613 = vector.load %arg10[%c0_121, %c0_122] : memref<1x256xf32, #tpu.memory_space<vmem>>, vector<1x256xf32>
    %cst_123 = arith.constant -3.000000e+38 : f32
    %614 = vector.broadcast %cst_123 : f32 to vector<8x32xf32>
    %cst_124 = arith.constant -3.000000e+38 : f32
    %c0_i32_125 = arith.constant 0 : i32
    %c7_i32_126 = arith.constant 7 : i32
    %615 = arith.subi %c7_i32_126, %c0_i32_125 : i32
    %c8_i32_127 = arith.constant 8 : i32
    %616 = arith.muli %c0_i32_125, %c8_i32_127 : i32
    %617 = tpu.assume_multiple %616, 8 : i32
    %c8_i32_128 = arith.constant 8 : i32
    %618 = arith.muli %615, %c8_i32_128 : i32
    %619 = tpu.assume_multiple %618, 8 : i32
    %620 = arith.index_cast %617 : i32 to index
    %c0_129 = arith.constant 0 : index
    %621 = vector.load %arg14[%620, %c0_129] : memref<64x256xf32, #tpu.memory_space<vmem>>, vector<8x128xf32>
    %622 = arith.index_cast %619 : i32 to index
    %c128_130 = arith.constant 128 : index
    %623 = vector.load %arg14[%622, %c128_130] : memref<64x256xf32, #tpu.memory_space<vmem>>, vector<8x128xf32>
    %624 = tpu.concatenate %2, %2 in 1 : vector<8x32xf32>, vector<8x32xf32> -> vector<8x64xf32>
    %625 = arith.truncf %624 : vector<8x64xf32> to vector<8x64xbf16>
    %cst_131 = arith.constant dense<0.000000e+00> : vector<8x256xf32>
    %626 = tpu.matmul %625, %612, %cst_131 {dimension_numbers = #tpu.dot_dimension_numbers<[1], [0], [0], [1], [0, 0, 1, 1], [], []>} : vector<8x64xbf16>, vector<64x256xbf16>, vector<8x256xf32> -> vector<8x256xf32>
    %627 = vector.broadcast %613 : vector<1x256xf32> to vector<8x256xf32>
    %628 = arith.addf %626, %627 : vector<8x256xf32>
    %629 = vector.extract_strided_slice %628 {offsets = [0, 0], sizes = [8, 128], strides = [1, 1]} : vector<8x256xf32> to vector<8x128xf32>
    %630 = vector.extract_strided_slice %621 {offsets = [0, 0], sizes = [8, 64], strides = [1, 1]} : vector<8x128xf32> to vector<8x64xf32>
    %631 = vector.extract_strided_slice %629 {offsets = [0, 0], sizes = [8, 64], strides = [1, 1]} : vector<8x128xf32> to vector<8x64xf32>
    %632 = arith.addf %630, %631 : vector<8x64xf32>
    %633 = arith.negf %632 : vector<8x64xf32>
    %634 = math.exp %633 : vector<8x64xf32>
    %cst_132 = arith.constant 1.000000e+00 : f32
    %635 = vector.broadcast %cst_132 : f32 to vector<8x64xf32>
    %636 = arith.addf %635, %634 : vector<8x64xf32>
    %637 = arith.divf %635, %636 : vector<8x64xf32>
    %638 = vector.extract_strided_slice %637 {offsets = [0, 0], sizes = [8, 32], strides = [1, 1]} : vector<8x64xf32> to vector<8x32xf32>
    %639 = vector.extract_strided_slice %637 {offsets = [0, 32], sizes = [8, 32], strides = [1, 1]} : vector<8x64xf32> to vector<8x32xf32>
    %640 = vector.extract_strided_slice %621 {offsets = [0, 64], sizes = [8, 32], strides = [1, 1]} : vector<8x128xf32> to vector<8x32xf32>
    %641 = vector.extract_strided_slice %629 {offsets = [0, 64], sizes = [8, 32], strides = [1, 1]} : vector<8x128xf32> to vector<8x32xf32>
    %642 = arith.mulf %638, %641 : vector<8x32xf32>
    %643 = arith.addf %640, %642 : vector<8x32xf32>
    %644 = math.tanh %643 : vector<8x32xf32>
    %645 = arith.subf %2, %644 : vector<8x32xf32>
    %646 = arith.mulf %639, %645 : vector<8x32xf32>
    %647 = arith.addf %644, %646 : vector<8x32xf32>
    %648 = vector.extract_strided_slice %628 {offsets = [0, 128], sizes = [8, 128], strides = [1, 1]} : vector<8x256xf32> to vector<8x128xf32>
    %649 = vector.extract_strided_slice %623 {offsets = [0, 0], sizes = [8, 64], strides = [1, 1]} : vector<8x128xf32> to vector<8x64xf32>
    %650 = vector.extract_strided_slice %648 {offsets = [0, 0], sizes = [8, 64], strides = [1, 1]} : vector<8x128xf32> to vector<8x64xf32>
    %651 = arith.addf %649, %650 : vector<8x64xf32>
    %652 = arith.negf %651 : vector<8x64xf32>
    %653 = math.exp %652 : vector<8x64xf32>
    %cst_133 = arith.constant 1.000000e+00 : f32
    %654 = vector.broadcast %cst_133 : f32 to vector<8x64xf32>
    %655 = arith.addf %654, %653 : vector<8x64xf32>
    %656 = arith.divf %654, %655 : vector<8x64xf32>
    %657 = vector.extract_strided_slice %656 {offsets = [0, 0], sizes = [8, 32], strides = [1, 1]} : vector<8x64xf32> to vector<8x32xf32>
    %658 = vector.extract_strided_slice %656 {offsets = [0, 32], sizes = [8, 32], strides = [1, 1]} : vector<8x64xf32> to vector<8x32xf32>
    %659 = vector.extract_strided_slice %623 {offsets = [0, 64], sizes = [8, 32], strides = [1, 1]} : vector<8x128xf32> to vector<8x32xf32>
    %660 = vector.extract_strided_slice %648 {offsets = [0, 64], sizes = [8, 32], strides = [1, 1]} : vector<8x128xf32> to vector<8x32xf32>
    %661 = arith.mulf %657, %660 : vector<8x32xf32>
    %662 = arith.addf %659, %661 : vector<8x32xf32>
    %663 = math.tanh %662 : vector<8x32xf32>
    %664 = arith.subf %2, %663 : vector<8x32xf32>
    %665 = arith.mulf %658, %664 : vector<8x32xf32>
    %666 = arith.addf %663, %665 : vector<8x32xf32>
    %667 = vector.broadcast %c0_i32_125 : i32 to vector<8x1xi32>
    %668 = arith.cmpi slt, %667, %0 : vector<8x1xi32>
    %669 = vector.broadcast %615 : i32 to vector<8x1xi32>
    %670 = arith.cmpi slt, %669, %0 : vector<8x1xi32>
    %cst_134 = arith.constant 0.000000e+00 : f32
    %671 = vector.shape_cast %668 : vector<8x1xi1> to vector<8x1xi1>
    %672 = vector.broadcast %671 : vector<8x1xi1> to vector<8x32xi1>
    %673 = vector.broadcast %cst_134 : f32 to vector<8x32xf32>
    %674 = arith.select %672, %647, %673 : vector<8x32xi1>, vector<8x32xf32>
    %cst_135 = arith.constant 0.000000e+00 : f32
    %675 = vector.shape_cast %670 : vector<8x1xi1> to vector<8x1xi1>
    %676 = vector.broadcast %675 : vector<8x1xi1> to vector<8x32xi1>
    %677 = vector.broadcast %cst_135 : f32 to vector<8x32xf32>
    %678 = arith.select %676, %666, %677 : vector<8x32xi1>, vector<8x32xf32>
    %679 = vector.broadcast %c0_i32_125 : i32 to vector<8x1xi32>
    %680 = arith.cmpi slt, %679, %1 : vector<8x1xi32>
    %681 = vector.shape_cast %680 : vector<8x1xi1> to vector<8x1xi1>
    %682 = vector.broadcast %681 : vector<8x1xi1> to vector<8x32xi1>
    %683 = vector.broadcast %cst_124 : f32 to vector<8x32xf32>
    %684 = arith.select %682, %674, %683 : vector<8x32xi1>, vector<8x32xf32>
    %685 = arith.maximumf %614, %684 : vector<8x32xf32>
    %686 = vector.broadcast %615 : i32 to vector<8x1xi32>
    %687 = arith.cmpi slt, %686, %1 : vector<8x1xi32>
    %688 = vector.shape_cast %687 : vector<8x1xi1> to vector<8x1xi1>
    %689 = vector.broadcast %688 : vector<8x1xi1> to vector<8x32xi1>
    %690 = vector.broadcast %cst_124 : f32 to vector<8x32xf32>
    %691 = arith.select %689, %678, %690 : vector<8x32xi1>, vector<8x32xf32>
    %692 = arith.maximumf %614, %691 : vector<8x32xf32>
    %693 = vector.shape_cast %668 : vector<8x1xi1> to vector<8x1xi1>
    %694 = vector.broadcast %693 : vector<8x1xi1> to vector<8x32xi1>
    %695 = arith.select %694, %647, %2 : vector<8x32xi1>, vector<8x32xf32>
    %696 = vector.shape_cast %670 : vector<8x1xi1> to vector<8x1xi1>
    %697 = vector.broadcast %696 : vector<8x1xi1> to vector<8x32xi1>
    %698 = arith.select %697, %666, %2 : vector<8x32xi1>, vector<8x32xf32>
    %c1_i32_136 = arith.constant 1 : i32
    %c7_i32_137 = arith.constant 7 : i32
    %699 = arith.subi %c7_i32_137, %c1_i32_136 : i32
    %c8_i32_138 = arith.constant 8 : i32
    %700 = arith.muli %c1_i32_136, %c8_i32_138 : i32
    %701 = tpu.assume_multiple %700, 8 : i32
    %c8_i32_139 = arith.constant 8 : i32
    %702 = arith.muli %699, %c8_i32_139 : i32
    %703 = tpu.assume_multiple %702, 8 : i32
    %704 = arith.index_cast %701 : i32 to index
    %c0_140 = arith.constant 0 : index
    %705 = vector.load %arg14[%704, %c0_140] : memref<64x256xf32, #tpu.memory_space<vmem>>, vector<8x128xf32>
    %706 = arith.index_cast %703 : i32 to index
    %c128_141 = arith.constant 128 : index
    %707 = vector.load %arg14[%706, %c128_141] : memref<64x256xf32, #tpu.memory_space<vmem>>, vector<8x128xf32>
    %708 = tpu.concatenate %695, %698 in 1 : vector<8x32xf32>, vector<8x32xf32> -> vector<8x64xf32>
    %709 = arith.truncf %708 : vector<8x64xf32> to vector<8x64xbf16>
    %cst_142 = arith.constant dense<0.000000e+00> : vector<8x256xf32>
    %710 = tpu.matmul %709, %612, %cst_142 {dimension_numbers = #tpu.dot_dimension_numbers<[1], [0], [0], [1], [0, 0, 1, 1], [], []>} : vector<8x64xbf16>, vector<64x256xbf16>, vector<8x256xf32> -> vector<8x256xf32>
    %711 = vector.broadcast %613 : vector<1x256xf32> to vector<8x256xf32>
    %712 = arith.addf %710, %711 : vector<8x256xf32>
    %713 = vector.extract_strided_slice %712 {offsets = [0, 0], sizes = [8, 128], strides = [1, 1]} : vector<8x256xf32> to vector<8x128xf32>
    %714 = vector.extract_strided_slice %705 {offsets = [0, 0], sizes = [8, 64], strides = [1, 1]} : vector<8x128xf32> to vector<8x64xf32>
    %715 = vector.extract_strided_slice %713 {offsets = [0, 0], sizes = [8, 64], strides = [1, 1]} : vector<8x128xf32> to vector<8x64xf32>
    %716 = arith.addf %714, %715 : vector<8x64xf32>
    %717 = arith.negf %716 : vector<8x64xf32>
    %718 = math.exp %717 : vector<8x64xf32>
    %cst_143 = arith.constant 1.000000e+00 : f32
    %719 = vector.broadcast %cst_143 : f32 to vector<8x64xf32>
    %720 = arith.addf %719, %718 : vector<8x64xf32>
    %721 = arith.divf %719, %720 : vector<8x64xf32>
    %722 = vector.extract_strided_slice %721 {offsets = [0, 0], sizes = [8, 32], strides = [1, 1]} : vector<8x64xf32> to vector<8x32xf32>
    %723 = vector.extract_strided_slice %721 {offsets = [0, 32], sizes = [8, 32], strides = [1, 1]} : vector<8x64xf32> to vector<8x32xf32>
    %724 = vector.extract_strided_slice %705 {offsets = [0, 64], sizes = [8, 32], strides = [1, 1]} : vector<8x128xf32> to vector<8x32xf32>
    %725 = vector.extract_strided_slice %713 {offsets = [0, 64], sizes = [8, 32], strides = [1, 1]} : vector<8x128xf32> to vector<8x32xf32>
    %726 = arith.mulf %722, %725 : vector<8x32xf32>
    %727 = arith.addf %724, %726 : vector<8x32xf32>
    %728 = math.tanh %727 : vector<8x32xf32>
    %729 = arith.subf %695, %728 : vector<8x32xf32>
    %730 = arith.mulf %723, %729 : vector<8x32xf32>
    %731 = arith.addf %728, %730 : vector<8x32xf32>
    %732 = vector.extract_strided_slice %712 {offsets = [0, 128], sizes = [8, 128], strides = [1, 1]} : vector<8x256xf32> to vector<8x128xf32>
    %733 = vector.extract_strided_slice %707 {offsets = [0, 0], sizes = [8, 64], strides = [1, 1]} : vector<8x128xf32> to vector<8x64xf32>
    %734 = vector.extract_strided_slice %732 {offsets = [0, 0], sizes = [8, 64], strides = [1, 1]} : vector<8x128xf32> to vector<8x64xf32>
    %735 = arith.addf %733, %734 : vector<8x64xf32>
    %736 = arith.negf %735 : vector<8x64xf32>
    %737 = math.exp %736 : vector<8x64xf32>
    %cst_144 = arith.constant 1.000000e+00 : f32
    %738 = vector.broadcast %cst_144 : f32 to vector<8x64xf32>
    %739 = arith.addf %738, %737 : vector<8x64xf32>
    %740 = arith.divf %738, %739 : vector<8x64xf32>
    %741 = vector.extract_strided_slice %740 {offsets = [0, 0], sizes = [8, 32], strides = [1, 1]} : vector<8x64xf32> to vector<8x32xf32>
    %742 = vector.extract_strided_slice %740 {offsets = [0, 32], sizes = [8, 32], strides = [1, 1]} : vector<8x64xf32> to vector<8x32xf32>
    %743 = vector.extract_strided_slice %707 {offsets = [0, 64], sizes = [8, 32], strides = [1, 1]} : vector<8x128xf32> to vector<8x32xf32>
    %744 = vector.extract_strided_slice %732 {offsets = [0, 64], sizes = [8, 32], strides = [1, 1]} : vector<8x128xf32> to vector<8x32xf32>
    %745 = arith.mulf %741, %744 : vector<8x32xf32>
    %746 = arith.addf %743, %745 : vector<8x32xf32>
    %747 = math.tanh %746 : vector<8x32xf32>
    %748 = arith.subf %698, %747 : vector<8x32xf32>
    %749 = arith.mulf %742, %748 : vector<8x32xf32>
    %750 = arith.addf %747, %749 : vector<8x32xf32>
    %751 = vector.broadcast %c1_i32_136 : i32 to vector<8x1xi32>
    %752 = arith.cmpi slt, %751, %0 : vector<8x1xi32>
    %753 = vector.broadcast %699 : i32 to vector<8x1xi32>
    %754 = arith.cmpi slt, %753, %0 : vector<8x1xi32>
    %cst_145 = arith.constant 0.000000e+00 : f32
    %755 = vector.shape_cast %752 : vector<8x1xi1> to vector<8x1xi1>
    %756 = vector.broadcast %755 : vector<8x1xi1> to vector<8x32xi1>
    %757 = vector.broadcast %cst_145 : f32 to vector<8x32xf32>
    %758 = arith.select %756, %731, %757 : vector<8x32xi1>, vector<8x32xf32>
    %cst_146 = arith.constant 0.000000e+00 : f32
    %759 = vector.shape_cast %754 : vector<8x1xi1> to vector<8x1xi1>
    %760 = vector.broadcast %759 : vector<8x1xi1> to vector<8x32xi1>
    %761 = vector.broadcast %cst_146 : f32 to vector<8x32xf32>
    %762 = arith.select %760, %750, %761 : vector<8x32xi1>, vector<8x32xf32>
    %763 = vector.broadcast %c1_i32_136 : i32 to vector<8x1xi32>
    %764 = arith.cmpi slt, %763, %1 : vector<8x1xi32>
    %765 = vector.shape_cast %764 : vector<8x1xi1> to vector<8x1xi1>
    %766 = vector.broadcast %765 : vector<8x1xi1> to vector<8x32xi1>
    %767 = vector.broadcast %cst_124 : f32 to vector<8x32xf32>
    %768 = arith.select %766, %758, %767 : vector<8x32xi1>, vector<8x32xf32>
    %769 = arith.maximumf %685, %768 : vector<8x32xf32>
    %770 = vector.broadcast %699 : i32 to vector<8x1xi32>
    %771 = arith.cmpi slt, %770, %1 : vector<8x1xi32>
    %772 = vector.shape_cast %771 : vector<8x1xi1> to vector<8x1xi1>
    %773 = vector.broadcast %772 : vector<8x1xi1> to vector<8x32xi1>
    %774 = vector.broadcast %cst_124 : f32 to vector<8x32xf32>
    %775 = arith.select %773, %762, %774 : vector<8x32xi1>, vector<8x32xf32>
    %776 = arith.maximumf %692, %775 : vector<8x32xf32>
    %777 = vector.shape_cast %752 : vector<8x1xi1> to vector<8x1xi1>
    %778 = vector.broadcast %777 : vector<8x1xi1> to vector<8x32xi1>
    %779 = arith.select %778, %731, %695 : vector<8x32xi1>, vector<8x32xf32>
    %780 = vector.shape_cast %754 : vector<8x1xi1> to vector<8x1xi1>
    %781 = vector.broadcast %780 : vector<8x1xi1> to vector<8x32xi1>
    %782 = arith.select %781, %750, %698 : vector<8x32xi1>, vector<8x32xf32>
    %c2_i32_147 = arith.constant 2 : i32
    %c7_i32_148 = arith.constant 7 : i32
    %783 = arith.subi %c7_i32_148, %c2_i32_147 : i32
    %c8_i32_149 = arith.constant 8 : i32
    %784 = arith.muli %c2_i32_147, %c8_i32_149 : i32
    %785 = tpu.assume_multiple %784, 8 : i32
    %c8_i32_150 = arith.constant 8 : i32
    %786 = arith.muli %783, %c8_i32_150 : i32
    %787 = tpu.assume_multiple %786, 8 : i32
    %788 = arith.index_cast %785 : i32 to index
    %c0_151 = arith.constant 0 : index
    %789 = vector.load %arg14[%788, %c0_151] : memref<64x256xf32, #tpu.memory_space<vmem>>, vector<8x128xf32>
    %790 = arith.index_cast %787 : i32 to index
    %c128_152 = arith.constant 128 : index
    %791 = vector.load %arg14[%790, %c128_152] : memref<64x256xf32, #tpu.memory_space<vmem>>, vector<8x128xf32>
    %792 = tpu.concatenate %779, %782 in 1 : vector<8x32xf32>, vector<8x32xf32> -> vector<8x64xf32>
    %793 = arith.truncf %792 : vector<8x64xf32> to vector<8x64xbf16>
    %cst_153 = arith.constant dense<0.000000e+00> : vector<8x256xf32>
    %794 = tpu.matmul %793, %612, %cst_153 {dimension_numbers = #tpu.dot_dimension_numbers<[1], [0], [0], [1], [0, 0, 1, 1], [], []>} : vector<8x64xbf16>, vector<64x256xbf16>, vector<8x256xf32> -> vector<8x256xf32>
    %795 = vector.broadcast %613 : vector<1x256xf32> to vector<8x256xf32>
    %796 = arith.addf %794, %795 : vector<8x256xf32>
    %797 = vector.extract_strided_slice %796 {offsets = [0, 0], sizes = [8, 128], strides = [1, 1]} : vector<8x256xf32> to vector<8x128xf32>
    %798 = vector.extract_strided_slice %789 {offsets = [0, 0], sizes = [8, 64], strides = [1, 1]} : vector<8x128xf32> to vector<8x64xf32>
    %799 = vector.extract_strided_slice %797 {offsets = [0, 0], sizes = [8, 64], strides = [1, 1]} : vector<8x128xf32> to vector<8x64xf32>
    %800 = arith.addf %798, %799 : vector<8x64xf32>
    %801 = arith.negf %800 : vector<8x64xf32>
    %802 = math.exp %801 : vector<8x64xf32>
    %cst_154 = arith.constant 1.000000e+00 : f32
    %803 = vector.broadcast %cst_154 : f32 to vector<8x64xf32>
    %804 = arith.addf %803, %802 : vector<8x64xf32>
    %805 = arith.divf %803, %804 : vector<8x64xf32>
    %806 = vector.extract_strided_slice %805 {offsets = [0, 0], sizes = [8, 32], strides = [1, 1]} : vector<8x64xf32> to vector<8x32xf32>
    %807 = vector.extract_strided_slice %805 {offsets = [0, 32], sizes = [8, 32], strides = [1, 1]} : vector<8x64xf32> to vector<8x32xf32>
    %808 = vector.extract_strided_slice %789 {offsets = [0, 64], sizes = [8, 32], strides = [1, 1]} : vector<8x128xf32> to vector<8x32xf32>
    %809 = vector.extract_strided_slice %797 {offsets = [0, 64], sizes = [8, 32], strides = [1, 1]} : vector<8x128xf32> to vector<8x32xf32>
    %810 = arith.mulf %806, %809 : vector<8x32xf32>
    %811 = arith.addf %808, %810 : vector<8x32xf32>
    %812 = math.tanh %811 : vector<8x32xf32>
    %813 = arith.subf %779, %812 : vector<8x32xf32>
    %814 = arith.mulf %807, %813 : vector<8x32xf32>
    %815 = arith.addf %812, %814 : vector<8x32xf32>
    %816 = vector.extract_strided_slice %796 {offsets = [0, 128], sizes = [8, 128], strides = [1, 1]} : vector<8x256xf32> to vector<8x128xf32>
    %817 = vector.extract_strided_slice %791 {offsets = [0, 0], sizes = [8, 64], strides = [1, 1]} : vector<8x128xf32> to vector<8x64xf32>
    %818 = vector.extract_strided_slice %816 {offsets = [0, 0], sizes = [8, 64], strides = [1, 1]} : vector<8x128xf32> to vector<8x64xf32>
    %819 = arith.addf %817, %818 : vector<8x64xf32>
    %820 = arith.negf %819 : vector<8x64xf32>
    %821 = math.exp %820 : vector<8x64xf32>
    %cst_155 = arith.constant 1.000000e+00 : f32
    %822 = vector.broadcast %cst_155 : f32 to vector<8x64xf32>
    %823 = arith.addf %822, %821 : vector<8x64xf32>
    %824 = arith.divf %822, %823 : vector<8x64xf32>
    %825 = vector.extract_strided_slice %824 {offsets = [0, 0], sizes = [8, 32], strides = [1, 1]} : vector<8x64xf32> to vector<8x32xf32>
    %826 = vector.extract_strided_slice %824 {offsets = [0, 32], sizes = [8, 32], strides = [1, 1]} : vector<8x64xf32> to vector<8x32xf32>
    %827 = vector.extract_strided_slice %791 {offsets = [0, 64], sizes = [8, 32], strides = [1, 1]} : vector<8x128xf32> to vector<8x32xf32>
    %828 = vector.extract_strided_slice %816 {offsets = [0, 64], sizes = [8, 32], strides = [1, 1]} : vector<8x128xf32> to vector<8x32xf32>
    %829 = arith.mulf %825, %828 : vector<8x32xf32>
    %830 = arith.addf %827, %829 : vector<8x32xf32>
    %831 = math.tanh %830 : vector<8x32xf32>
    %832 = arith.subf %782, %831 : vector<8x32xf32>
    %833 = arith.mulf %826, %832 : vector<8x32xf32>
    %834 = arith.addf %831, %833 : vector<8x32xf32>
    %835 = vector.broadcast %c2_i32_147 : i32 to vector<8x1xi32>
    %836 = arith.cmpi slt, %835, %0 : vector<8x1xi32>
    %837 = vector.broadcast %783 : i32 to vector<8x1xi32>
    %838 = arith.cmpi slt, %837, %0 : vector<8x1xi32>
    %cst_156 = arith.constant 0.000000e+00 : f32
    %839 = vector.shape_cast %836 : vector<8x1xi1> to vector<8x1xi1>
    %840 = vector.broadcast %839 : vector<8x1xi1> to vector<8x32xi1>
    %841 = vector.broadcast %cst_156 : f32 to vector<8x32xf32>
    %842 = arith.select %840, %815, %841 : vector<8x32xi1>, vector<8x32xf32>
    %cst_157 = arith.constant 0.000000e+00 : f32
    %843 = vector.shape_cast %838 : vector<8x1xi1> to vector<8x1xi1>
    %844 = vector.broadcast %843 : vector<8x1xi1> to vector<8x32xi1>
    %845 = vector.broadcast %cst_157 : f32 to vector<8x32xf32>
    %846 = arith.select %844, %834, %845 : vector<8x32xi1>, vector<8x32xf32>
    %847 = vector.broadcast %c2_i32_147 : i32 to vector<8x1xi32>
    %848 = arith.cmpi slt, %847, %1 : vector<8x1xi32>
    %849 = vector.shape_cast %848 : vector<8x1xi1> to vector<8x1xi1>
    %850 = vector.broadcast %849 : vector<8x1xi1> to vector<8x32xi1>
    %851 = vector.broadcast %cst_124 : f32 to vector<8x32xf32>
    %852 = arith.select %850, %842, %851 : vector<8x32xi1>, vector<8x32xf32>
    %853 = arith.maximumf %769, %852 : vector<8x32xf32>
    %854 = vector.broadcast %783 : i32 to vector<8x1xi32>
    %855 = arith.cmpi slt, %854, %1 : vector<8x1xi32>
    %856 = vector.shape_cast %855 : vector<8x1xi1> to vector<8x1xi1>
    %857 = vector.broadcast %856 : vector<8x1xi1> to vector<8x32xi1>
    %858 = vector.broadcast %cst_124 : f32 to vector<8x32xf32>
    %859 = arith.select %857, %846, %858 : vector<8x32xi1>, vector<8x32xf32>
    %860 = arith.maximumf %776, %859 : vector<8x32xf32>
    %861 = vector.shape_cast %836 : vector<8x1xi1> to vector<8x1xi1>
    %862 = vector.broadcast %861 : vector<8x1xi1> to vector<8x32xi1>
    %863 = arith.select %862, %815, %779 : vector<8x32xi1>, vector<8x32xf32>
    %864 = vector.shape_cast %838 : vector<8x1xi1> to vector<8x1xi1>
    %865 = vector.broadcast %864 : vector<8x1xi1> to vector<8x32xi1>
    %866 = arith.select %865, %834, %782 : vector<8x32xi1>, vector<8x32xf32>
    %c3_i32_158 = arith.constant 3 : i32
    %c7_i32_159 = arith.constant 7 : i32
    %867 = arith.subi %c7_i32_159, %c3_i32_158 : i32
    %c8_i32_160 = arith.constant 8 : i32
    %868 = arith.muli %c3_i32_158, %c8_i32_160 : i32
    %869 = tpu.assume_multiple %868, 8 : i32
    %c8_i32_161 = arith.constant 8 : i32
    %870 = arith.muli %867, %c8_i32_161 : i32
    %871 = tpu.assume_multiple %870, 8 : i32
    %872 = arith.index_cast %869 : i32 to index
    %c0_162 = arith.constant 0 : index
    %873 = vector.load %arg14[%872, %c0_162] : memref<64x256xf32, #tpu.memory_space<vmem>>, vector<8x128xf32>
    %874 = arith.index_cast %871 : i32 to index
    %c128_163 = arith.constant 128 : index
    %875 = vector.load %arg14[%874, %c128_163] : memref<64x256xf32, #tpu.memory_space<vmem>>, vector<8x128xf32>
    %876 = tpu.concatenate %863, %866 in 1 : vector<8x32xf32>, vector<8x32xf32> -> vector<8x64xf32>
    %877 = arith.truncf %876 : vector<8x64xf32> to vector<8x64xbf16>
    %cst_164 = arith.constant dense<0.000000e+00> : vector<8x256xf32>
    %878 = tpu.matmul %877, %612, %cst_164 {dimension_numbers = #tpu.dot_dimension_numbers<[1], [0], [0], [1], [0, 0, 1, 1], [], []>} : vector<8x64xbf16>, vector<64x256xbf16>, vector<8x256xf32> -> vector<8x256xf32>
    %879 = vector.broadcast %613 : vector<1x256xf32> to vector<8x256xf32>
    %880 = arith.addf %878, %879 : vector<8x256xf32>
    %881 = vector.extract_strided_slice %880 {offsets = [0, 0], sizes = [8, 128], strides = [1, 1]} : vector<8x256xf32> to vector<8x128xf32>
    %882 = vector.extract_strided_slice %873 {offsets = [0, 0], sizes = [8, 64], strides = [1, 1]} : vector<8x128xf32> to vector<8x64xf32>
    %883 = vector.extract_strided_slice %881 {offsets = [0, 0], sizes = [8, 64], strides = [1, 1]} : vector<8x128xf32> to vector<8x64xf32>
    %884 = arith.addf %882, %883 : vector<8x64xf32>
    %885 = arith.negf %884 : vector<8x64xf32>
    %886 = math.exp %885 : vector<8x64xf32>
    %cst_165 = arith.constant 1.000000e+00 : f32
    %887 = vector.broadcast %cst_165 : f32 to vector<8x64xf32>
    %888 = arith.addf %887, %886 : vector<8x64xf32>
    %889 = arith.divf %887, %888 : vector<8x64xf32>
    %890 = vector.extract_strided_slice %889 {offsets = [0, 0], sizes = [8, 32], strides = [1, 1]} : vector<8x64xf32> to vector<8x32xf32>
    %891 = vector.extract_strided_slice %889 {offsets = [0, 32], sizes = [8, 32], strides = [1, 1]} : vector<8x64xf32> to vector<8x32xf32>
    %892 = vector.extract_strided_slice %873 {offsets = [0, 64], sizes = [8, 32], strides = [1, 1]} : vector<8x128xf32> to vector<8x32xf32>
    %893 = vector.extract_strided_slice %881 {offsets = [0, 64], sizes = [8, 32], strides = [1, 1]} : vector<8x128xf32> to vector<8x32xf32>
    %894 = arith.mulf %890, %893 : vector<8x32xf32>
    %895 = arith.addf %892, %894 : vector<8x32xf32>
    %896 = math.tanh %895 : vector<8x32xf32>
    %897 = arith.subf %863, %896 : vector<8x32xf32>
    %898 = arith.mulf %891, %897 : vector<8x32xf32>
    %899 = arith.addf %896, %898 : vector<8x32xf32>
    %900 = vector.extract_strided_slice %880 {offsets = [0, 128], sizes = [8, 128], strides = [1, 1]} : vector<8x256xf32> to vector<8x128xf32>
    %901 = vector.extract_strided_slice %875 {offsets = [0, 0], sizes = [8, 64], strides = [1, 1]} : vector<8x128xf32> to vector<8x64xf32>
    %902 = vector.extract_strided_slice %900 {offsets = [0, 0], sizes = [8, 64], strides = [1, 1]} : vector<8x128xf32> to vector<8x64xf32>
    %903 = arith.addf %901, %902 : vector<8x64xf32>
    %904 = arith.negf %903 : vector<8x64xf32>
    %905 = math.exp %904 : vector<8x64xf32>
    %cst_166 = arith.constant 1.000000e+00 : f32
    %906 = vector.broadcast %cst_166 : f32 to vector<8x64xf32>
    %907 = arith.addf %906, %905 : vector<8x64xf32>
    %908 = arith.divf %906, %907 : vector<8x64xf32>
    %909 = vector.extract_strided_slice %908 {offsets = [0, 0], sizes = [8, 32], strides = [1, 1]} : vector<8x64xf32> to vector<8x32xf32>
    %910 = vector.extract_strided_slice %908 {offsets = [0, 32], sizes = [8, 32], strides = [1, 1]} : vector<8x64xf32> to vector<8x32xf32>
    %911 = vector.extract_strided_slice %875 {offsets = [0, 64], sizes = [8, 32], strides = [1, 1]} : vector<8x128xf32> to vector<8x32xf32>
    %912 = vector.extract_strided_slice %900 {offsets = [0, 64], sizes = [8, 32], strides = [1, 1]} : vector<8x128xf32> to vector<8x32xf32>
    %913 = arith.mulf %909, %912 : vector<8x32xf32>
    %914 = arith.addf %911, %913 : vector<8x32xf32>
    %915 = math.tanh %914 : vector<8x32xf32>
    %916 = arith.subf %866, %915 : vector<8x32xf32>
    %917 = arith.mulf %910, %916 : vector<8x32xf32>
    %918 = arith.addf %915, %917 : vector<8x32xf32>
    %919 = vector.broadcast %c3_i32_158 : i32 to vector<8x1xi32>
    %920 = arith.cmpi slt, %919, %0 : vector<8x1xi32>
    %921 = vector.broadcast %867 : i32 to vector<8x1xi32>
    %922 = arith.cmpi slt, %921, %0 : vector<8x1xi32>
    %cst_167 = arith.constant 0.000000e+00 : f32
    %923 = vector.shape_cast %920 : vector<8x1xi1> to vector<8x1xi1>
    %924 = vector.broadcast %923 : vector<8x1xi1> to vector<8x32xi1>
    %925 = vector.broadcast %cst_167 : f32 to vector<8x32xf32>
    %926 = arith.select %924, %899, %925 : vector<8x32xi1>, vector<8x32xf32>
    %cst_168 = arith.constant 0.000000e+00 : f32
    %927 = vector.shape_cast %922 : vector<8x1xi1> to vector<8x1xi1>
    %928 = vector.broadcast %927 : vector<8x1xi1> to vector<8x32xi1>
    %929 = vector.broadcast %cst_168 : f32 to vector<8x32xf32>
    %930 = arith.select %928, %918, %929 : vector<8x32xi1>, vector<8x32xf32>
    %931 = vector.broadcast %c3_i32_158 : i32 to vector<8x1xi32>
    %932 = arith.cmpi slt, %931, %1 : vector<8x1xi32>
    %933 = vector.shape_cast %932 : vector<8x1xi1> to vector<8x1xi1>
    %934 = vector.broadcast %933 : vector<8x1xi1> to vector<8x32xi1>
    %935 = vector.broadcast %cst_124 : f32 to vector<8x32xf32>
    %936 = arith.select %934, %926, %935 : vector<8x32xi1>, vector<8x32xf32>
    %937 = arith.maximumf %853, %936 : vector<8x32xf32>
    %938 = vector.broadcast %867 : i32 to vector<8x1xi32>
    %939 = arith.cmpi slt, %938, %1 : vector<8x1xi32>
    %940 = vector.shape_cast %939 : vector<8x1xi1> to vector<8x1xi1>
    %941 = vector.broadcast %940 : vector<8x1xi1> to vector<8x32xi1>
    %942 = vector.broadcast %cst_124 : f32 to vector<8x32xf32>
    %943 = arith.select %941, %930, %942 : vector<8x32xi1>, vector<8x32xf32>
    %944 = arith.maximumf %860, %943 : vector<8x32xf32>
    %945 = vector.shape_cast %920 : vector<8x1xi1> to vector<8x1xi1>
    %946 = vector.broadcast %945 : vector<8x1xi1> to vector<8x32xi1>
    %947 = arith.select %946, %899, %863 : vector<8x32xi1>, vector<8x32xf32>
    %948 = vector.shape_cast %922 : vector<8x1xi1> to vector<8x1xi1>
    %949 = vector.broadcast %948 : vector<8x1xi1> to vector<8x32xi1>
    %950 = arith.select %949, %918, %866 : vector<8x32xi1>, vector<8x32xf32>
    %c4_i32_169 = arith.constant 4 : i32
    %c7_i32_170 = arith.constant 7 : i32
    %951 = arith.subi %c7_i32_170, %c4_i32_169 : i32
    %c8_i32_171 = arith.constant 8 : i32
    %952 = arith.muli %c4_i32_169, %c8_i32_171 : i32
    %953 = tpu.assume_multiple %952, 8 : i32
    %c8_i32_172 = arith.constant 8 : i32
    %954 = arith.muli %951, %c8_i32_172 : i32
    %955 = tpu.assume_multiple %954, 8 : i32
    %956 = arith.index_cast %953 : i32 to index
    %c0_173 = arith.constant 0 : index
    %957 = vector.load %arg14[%956, %c0_173] : memref<64x256xf32, #tpu.memory_space<vmem>>, vector<8x128xf32>
    %958 = arith.index_cast %955 : i32 to index
    %c128_174 = arith.constant 128 : index
    %959 = vector.load %arg14[%958, %c128_174] : memref<64x256xf32, #tpu.memory_space<vmem>>, vector<8x128xf32>
    %960 = tpu.concatenate %947, %950 in 1 : vector<8x32xf32>, vector<8x32xf32> -> vector<8x64xf32>
    %961 = arith.truncf %960 : vector<8x64xf32> to vector<8x64xbf16>
    %cst_175 = arith.constant dense<0.000000e+00> : vector<8x256xf32>
    %962 = tpu.matmul %961, %612, %cst_175 {dimension_numbers = #tpu.dot_dimension_numbers<[1], [0], [0], [1], [0, 0, 1, 1], [], []>} : vector<8x64xbf16>, vector<64x256xbf16>, vector<8x256xf32> -> vector<8x256xf32>
    %963 = vector.broadcast %613 : vector<1x256xf32> to vector<8x256xf32>
    %964 = arith.addf %962, %963 : vector<8x256xf32>
    %965 = vector.extract_strided_slice %964 {offsets = [0, 0], sizes = [8, 128], strides = [1, 1]} : vector<8x256xf32> to vector<8x128xf32>
    %966 = vector.extract_strided_slice %957 {offsets = [0, 0], sizes = [8, 64], strides = [1, 1]} : vector<8x128xf32> to vector<8x64xf32>
    %967 = vector.extract_strided_slice %965 {offsets = [0, 0], sizes = [8, 64], strides = [1, 1]} : vector<8x128xf32> to vector<8x64xf32>
    %968 = arith.addf %966, %967 : vector<8x64xf32>
    %969 = arith.negf %968 : vector<8x64xf32>
    %970 = math.exp %969 : vector<8x64xf32>
    %cst_176 = arith.constant 1.000000e+00 : f32
    %971 = vector.broadcast %cst_176 : f32 to vector<8x64xf32>
    %972 = arith.addf %971, %970 : vector<8x64xf32>
    %973 = arith.divf %971, %972 : vector<8x64xf32>
    %974 = vector.extract_strided_slice %973 {offsets = [0, 0], sizes = [8, 32], strides = [1, 1]} : vector<8x64xf32> to vector<8x32xf32>
    %975 = vector.extract_strided_slice %973 {offsets = [0, 32], sizes = [8, 32], strides = [1, 1]} : vector<8x64xf32> to vector<8x32xf32>
    %976 = vector.extract_strided_slice %957 {offsets = [0, 64], sizes = [8, 32], strides = [1, 1]} : vector<8x128xf32> to vector<8x32xf32>
    %977 = vector.extract_strided_slice %965 {offsets = [0, 64], sizes = [8, 32], strides = [1, 1]} : vector<8x128xf32> to vector<8x32xf32>
    %978 = arith.mulf %974, %977 : vector<8x32xf32>
    %979 = arith.addf %976, %978 : vector<8x32xf32>
    %980 = math.tanh %979 : vector<8x32xf32>
    %981 = arith.subf %947, %980 : vector<8x32xf32>
    %982 = arith.mulf %975, %981 : vector<8x32xf32>
    %983 = arith.addf %980, %982 : vector<8x32xf32>
    %984 = vector.extract_strided_slice %964 {offsets = [0, 128], sizes = [8, 128], strides = [1, 1]} : vector<8x256xf32> to vector<8x128xf32>
    %985 = vector.extract_strided_slice %959 {offsets = [0, 0], sizes = [8, 64], strides = [1, 1]} : vector<8x128xf32> to vector<8x64xf32>
    %986 = vector.extract_strided_slice %984 {offsets = [0, 0], sizes = [8, 64], strides = [1, 1]} : vector<8x128xf32> to vector<8x64xf32>
    %987 = arith.addf %985, %986 : vector<8x64xf32>
    %988 = arith.negf %987 : vector<8x64xf32>
    %989 = math.exp %988 : vector<8x64xf32>
    %cst_177 = arith.constant 1.000000e+00 : f32
    %990 = vector.broadcast %cst_177 : f32 to vector<8x64xf32>
    %991 = arith.addf %990, %989 : vector<8x64xf32>
    %992 = arith.divf %990, %991 : vector<8x64xf32>
    %993 = vector.extract_strided_slice %992 {offsets = [0, 0], sizes = [8, 32], strides = [1, 1]} : vector<8x64xf32> to vector<8x32xf32>
    %994 = vector.extract_strided_slice %992 {offsets = [0, 32], sizes = [8, 32], strides = [1, 1]} : vector<8x64xf32> to vector<8x32xf32>
    %995 = vector.extract_strided_slice %959 {offsets = [0, 64], sizes = [8, 32], strides = [1, 1]} : vector<8x128xf32> to vector<8x32xf32>
    %996 = vector.extract_strided_slice %984 {offsets = [0, 64], sizes = [8, 32], strides = [1, 1]} : vector<8x128xf32> to vector<8x32xf32>
    %997 = arith.mulf %993, %996 : vector<8x32xf32>
    %998 = arith.addf %995, %997 : vector<8x32xf32>
    %999 = math.tanh %998 : vector<8x32xf32>
    %1000 = arith.subf %950, %999 : vector<8x32xf32>
    %1001 = arith.mulf %994, %1000 : vector<8x32xf32>
    %1002 = arith.addf %999, %1001 : vector<8x32xf32>
    %1003 = vector.broadcast %c4_i32_169 : i32 to vector<8x1xi32>
    %1004 = arith.cmpi slt, %1003, %0 : vector<8x1xi32>
    %1005 = vector.broadcast %951 : i32 to vector<8x1xi32>
    %1006 = arith.cmpi slt, %1005, %0 : vector<8x1xi32>
    %cst_178 = arith.constant 0.000000e+00 : f32
    %1007 = vector.shape_cast %1004 : vector<8x1xi1> to vector<8x1xi1>
    %1008 = vector.broadcast %1007 : vector<8x1xi1> to vector<8x32xi1>
    %1009 = vector.broadcast %cst_178 : f32 to vector<8x32xf32>
    %1010 = arith.select %1008, %983, %1009 : vector<8x32xi1>, vector<8x32xf32>
    %cst_179 = arith.constant 0.000000e+00 : f32
    %1011 = vector.shape_cast %1006 : vector<8x1xi1> to vector<8x1xi1>
    %1012 = vector.broadcast %1011 : vector<8x1xi1> to vector<8x32xi1>
    %1013 = vector.broadcast %cst_179 : f32 to vector<8x32xf32>
    %1014 = arith.select %1012, %1002, %1013 : vector<8x32xi1>, vector<8x32xf32>
    %1015 = vector.broadcast %c4_i32_169 : i32 to vector<8x1xi32>
    %1016 = arith.cmpi slt, %1015, %1 : vector<8x1xi32>
    %1017 = vector.shape_cast %1016 : vector<8x1xi1> to vector<8x1xi1>
    %1018 = vector.broadcast %1017 : vector<8x1xi1> to vector<8x32xi1>
    %1019 = vector.broadcast %cst_124 : f32 to vector<8x32xf32>
    %1020 = arith.select %1018, %1010, %1019 : vector<8x32xi1>, vector<8x32xf32>
    %1021 = arith.maximumf %937, %1020 : vector<8x32xf32>
    %1022 = vector.broadcast %951 : i32 to vector<8x1xi32>
    %1023 = arith.cmpi slt, %1022, %1 : vector<8x1xi32>
    %1024 = vector.shape_cast %1023 : vector<8x1xi1> to vector<8x1xi1>
    %1025 = vector.broadcast %1024 : vector<8x1xi1> to vector<8x32xi1>
    %1026 = vector.broadcast %cst_124 : f32 to vector<8x32xf32>
    %1027 = arith.select %1025, %1014, %1026 : vector<8x32xi1>, vector<8x32xf32>
    %1028 = arith.maximumf %944, %1027 : vector<8x32xf32>
    %1029 = vector.shape_cast %1004 : vector<8x1xi1> to vector<8x1xi1>
    %1030 = vector.broadcast %1029 : vector<8x1xi1> to vector<8x32xi1>
    %1031 = arith.select %1030, %983, %947 : vector<8x32xi1>, vector<8x32xf32>
    %1032 = vector.shape_cast %1006 : vector<8x1xi1> to vector<8x1xi1>
    %1033 = vector.broadcast %1032 : vector<8x1xi1> to vector<8x32xi1>
    %1034 = arith.select %1033, %1002, %950 : vector<8x32xi1>, vector<8x32xf32>
    %c5_i32_180 = arith.constant 5 : i32
    %c7_i32_181 = arith.constant 7 : i32
    %1035 = arith.subi %c7_i32_181, %c5_i32_180 : i32
    %c8_i32_182 = arith.constant 8 : i32
    %1036 = arith.muli %c5_i32_180, %c8_i32_182 : i32
    %1037 = tpu.assume_multiple %1036, 8 : i32
    %c8_i32_183 = arith.constant 8 : i32
    %1038 = arith.muli %1035, %c8_i32_183 : i32
    %1039 = tpu.assume_multiple %1038, 8 : i32
    %1040 = arith.index_cast %1037 : i32 to index
    %c0_184 = arith.constant 0 : index
    %1041 = vector.load %arg14[%1040, %c0_184] : memref<64x256xf32, #tpu.memory_space<vmem>>, vector<8x128xf32>
    %1042 = arith.index_cast %1039 : i32 to index
    %c128_185 = arith.constant 128 : index
    %1043 = vector.load %arg14[%1042, %c128_185] : memref<64x256xf32, #tpu.memory_space<vmem>>, vector<8x128xf32>
    %1044 = tpu.concatenate %1031, %1034 in 1 : vector<8x32xf32>, vector<8x32xf32> -> vector<8x64xf32>
    %1045 = arith.truncf %1044 : vector<8x64xf32> to vector<8x64xbf16>
    %cst_186 = arith.constant dense<0.000000e+00> : vector<8x256xf32>
    %1046 = tpu.matmul %1045, %612, %cst_186 {dimension_numbers = #tpu.dot_dimension_numbers<[1], [0], [0], [1], [0, 0, 1, 1], [], []>} : vector<8x64xbf16>, vector<64x256xbf16>, vector<8x256xf32> -> vector<8x256xf32>
    %1047 = vector.broadcast %613 : vector<1x256xf32> to vector<8x256xf32>
    %1048 = arith.addf %1046, %1047 : vector<8x256xf32>
    %1049 = vector.extract_strided_slice %1048 {offsets = [0, 0], sizes = [8, 128], strides = [1, 1]} : vector<8x256xf32> to vector<8x128xf32>
    %1050 = vector.extract_strided_slice %1041 {offsets = [0, 0], sizes = [8, 64], strides = [1, 1]} : vector<8x128xf32> to vector<8x64xf32>
    %1051 = vector.extract_strided_slice %1049 {offsets = [0, 0], sizes = [8, 64], strides = [1, 1]} : vector<8x128xf32> to vector<8x64xf32>
    %1052 = arith.addf %1050, %1051 : vector<8x64xf32>
    %1053 = arith.negf %1052 : vector<8x64xf32>
    %1054 = math.exp %1053 : vector<8x64xf32>
    %cst_187 = arith.constant 1.000000e+00 : f32
    %1055 = vector.broadcast %cst_187 : f32 to vector<8x64xf32>
    %1056 = arith.addf %1055, %1054 : vector<8x64xf32>
    %1057 = arith.divf %1055, %1056 : vector<8x64xf32>
    %1058 = vector.extract_strided_slice %1057 {offsets = [0, 0], sizes = [8, 32], strides = [1, 1]} : vector<8x64xf32> to vector<8x32xf32>
    %1059 = vector.extract_strided_slice %1057 {offsets = [0, 32], sizes = [8, 32], strides = [1, 1]} : vector<8x64xf32> to vector<8x32xf32>
    %1060 = vector.extract_strided_slice %1041 {offsets = [0, 64], sizes = [8, 32], strides = [1, 1]} : vector<8x128xf32> to vector<8x32xf32>
    %1061 = vector.extract_strided_slice %1049 {offsets = [0, 64], sizes = [8, 32], strides = [1, 1]} : vector<8x128xf32> to vector<8x32xf32>
    %1062 = arith.mulf %1058, %1061 : vector<8x32xf32>
    %1063 = arith.addf %1060, %1062 : vector<8x32xf32>
    %1064 = math.tanh %1063 : vector<8x32xf32>
    %1065 = arith.subf %1031, %1064 : vector<8x32xf32>
    %1066 = arith.mulf %1059, %1065 : vector<8x32xf32>
    %1067 = arith.addf %1064, %1066 : vector<8x32xf32>
    %1068 = vector.extract_strided_slice %1048 {offsets = [0, 128], sizes = [8, 128], strides = [1, 1]} : vector<8x256xf32> to vector<8x128xf32>
    %1069 = vector.extract_strided_slice %1043 {offsets = [0, 0], sizes = [8, 64], strides = [1, 1]} : vector<8x128xf32> to vector<8x64xf32>
    %1070 = vector.extract_strided_slice %1068 {offsets = [0, 0], sizes = [8, 64], strides = [1, 1]} : vector<8x128xf32> to vector<8x64xf32>
    %1071 = arith.addf %1069, %1070 : vector<8x64xf32>
    %1072 = arith.negf %1071 : vector<8x64xf32>
    %1073 = math.exp %1072 : vector<8x64xf32>
    %cst_188 = arith.constant 1.000000e+00 : f32
    %1074 = vector.broadcast %cst_188 : f32 to vector<8x64xf32>
    %1075 = arith.addf %1074, %1073 : vector<8x64xf32>
    %1076 = arith.divf %1074, %1075 : vector<8x64xf32>
    %1077 = vector.extract_strided_slice %1076 {offsets = [0, 0], sizes = [8, 32], strides = [1, 1]} : vector<8x64xf32> to vector<8x32xf32>
    %1078 = vector.extract_strided_slice %1076 {offsets = [0, 32], sizes = [8, 32], strides = [1, 1]} : vector<8x64xf32> to vector<8x32xf32>
    %1079 = vector.extract_strided_slice %1043 {offsets = [0, 64], sizes = [8, 32], strides = [1, 1]} : vector<8x128xf32> to vector<8x32xf32>
    %1080 = vector.extract_strided_slice %1068 {offsets = [0, 64], sizes = [8, 32], strides = [1, 1]} : vector<8x128xf32> to vector<8x32xf32>
    %1081 = arith.mulf %1077, %1080 : vector<8x32xf32>
    %1082 = arith.addf %1079, %1081 : vector<8x32xf32>
    %1083 = math.tanh %1082 : vector<8x32xf32>
    %1084 = arith.subf %1034, %1083 : vector<8x32xf32>
    %1085 = arith.mulf %1078, %1084 : vector<8x32xf32>
    %1086 = arith.addf %1083, %1085 : vector<8x32xf32>
    %1087 = vector.broadcast %c5_i32_180 : i32 to vector<8x1xi32>
    %1088 = arith.cmpi slt, %1087, %0 : vector<8x1xi32>
    %1089 = vector.broadcast %1035 : i32 to vector<8x1xi32>
    %1090 = arith.cmpi slt, %1089, %0 : vector<8x1xi32>
    %cst_189 = arith.constant 0.000000e+00 : f32
    %1091 = vector.shape_cast %1088 : vector<8x1xi1> to vector<8x1xi1>
    %1092 = vector.broadcast %1091 : vector<8x1xi1> to vector<8x32xi1>
    %1093 = vector.broadcast %cst_189 : f32 to vector<8x32xf32>
    %1094 = arith.select %1092, %1067, %1093 : vector<8x32xi1>, vector<8x32xf32>
    %cst_190 = arith.constant 0.000000e+00 : f32
    %1095 = vector.shape_cast %1090 : vector<8x1xi1> to vector<8x1xi1>
    %1096 = vector.broadcast %1095 : vector<8x1xi1> to vector<8x32xi1>
    %1097 = vector.broadcast %cst_190 : f32 to vector<8x32xf32>
    %1098 = arith.select %1096, %1086, %1097 : vector<8x32xi1>, vector<8x32xf32>
    %1099 = vector.broadcast %c5_i32_180 : i32 to vector<8x1xi32>
    %1100 = arith.cmpi slt, %1099, %1 : vector<8x1xi32>
    %1101 = vector.shape_cast %1100 : vector<8x1xi1> to vector<8x1xi1>
    %1102 = vector.broadcast %1101 : vector<8x1xi1> to vector<8x32xi1>
    %1103 = vector.broadcast %cst_124 : f32 to vector<8x32xf32>
    %1104 = arith.select %1102, %1094, %1103 : vector<8x32xi1>, vector<8x32xf32>
    %1105 = arith.maximumf %1021, %1104 : vector<8x32xf32>
    %1106 = vector.broadcast %1035 : i32 to vector<8x1xi32>
    %1107 = arith.cmpi slt, %1106, %1 : vector<8x1xi32>
    %1108 = vector.shape_cast %1107 : vector<8x1xi1> to vector<8x1xi1>
    %1109 = vector.broadcast %1108 : vector<8x1xi1> to vector<8x32xi1>
    %1110 = vector.broadcast %cst_124 : f32 to vector<8x32xf32>
    %1111 = arith.select %1109, %1098, %1110 : vector<8x32xi1>, vector<8x32xf32>
    %1112 = arith.maximumf %1028, %1111 : vector<8x32xf32>
    %1113 = vector.shape_cast %1088 : vector<8x1xi1> to vector<8x1xi1>
    %1114 = vector.broadcast %1113 : vector<8x1xi1> to vector<8x32xi1>
    %1115 = arith.select %1114, %1067, %1031 : vector<8x32xi1>, vector<8x32xf32>
    %1116 = vector.shape_cast %1090 : vector<8x1xi1> to vector<8x1xi1>
    %1117 = vector.broadcast %1116 : vector<8x1xi1> to vector<8x32xi1>
    %1118 = arith.select %1117, %1086, %1034 : vector<8x32xi1>, vector<8x32xf32>
    %c6_i32_191 = arith.constant 6 : i32
    %c7_i32_192 = arith.constant 7 : i32
    %1119 = arith.subi %c7_i32_192, %c6_i32_191 : i32
    %c8_i32_193 = arith.constant 8 : i32
    %1120 = arith.muli %c6_i32_191, %c8_i32_193 : i32
    %1121 = tpu.assume_multiple %1120, 8 : i32
    %c8_i32_194 = arith.constant 8 : i32
    %1122 = arith.muli %1119, %c8_i32_194 : i32
    %1123 = tpu.assume_multiple %1122, 8 : i32
    %1124 = arith.index_cast %1121 : i32 to index
    %c0_195 = arith.constant 0 : index
    %1125 = vector.load %arg14[%1124, %c0_195] : memref<64x256xf32, #tpu.memory_space<vmem>>, vector<8x128xf32>
    %1126 = arith.index_cast %1123 : i32 to index
    %c128_196 = arith.constant 128 : index
    %1127 = vector.load %arg14[%1126, %c128_196] : memref<64x256xf32, #tpu.memory_space<vmem>>, vector<8x128xf32>
    %1128 = tpu.concatenate %1115, %1118 in 1 : vector<8x32xf32>, vector<8x32xf32> -> vector<8x64xf32>
    %1129 = arith.truncf %1128 : vector<8x64xf32> to vector<8x64xbf16>
    %cst_197 = arith.constant dense<0.000000e+00> : vector<8x256xf32>
    %1130 = tpu.matmul %1129, %612, %cst_197 {dimension_numbers = #tpu.dot_dimension_numbers<[1], [0], [0], [1], [0, 0, 1, 1], [], []>} : vector<8x64xbf16>, vector<64x256xbf16>, vector<8x256xf32> -> vector<8x256xf32>
    %1131 = vector.broadcast %613 : vector<1x256xf32> to vector<8x256xf32>
    %1132 = arith.addf %1130, %1131 : vector<8x256xf32>
    %1133 = vector.extract_strided_slice %1132 {offsets = [0, 0], sizes = [8, 128], strides = [1, 1]} : vector<8x256xf32> to vector<8x128xf32>
    %1134 = vector.extract_strided_slice %1125 {offsets = [0, 0], sizes = [8, 64], strides = [1, 1]} : vector<8x128xf32> to vector<8x64xf32>
    %1135 = vector.extract_strided_slice %1133 {offsets = [0, 0], sizes = [8, 64], strides = [1, 1]} : vector<8x128xf32> to vector<8x64xf32>
    %1136 = arith.addf %1134, %1135 : vector<8x64xf32>
    %1137 = arith.negf %1136 : vector<8x64xf32>
    %1138 = math.exp %1137 : vector<8x64xf32>
    %cst_198 = arith.constant 1.000000e+00 : f32
    %1139 = vector.broadcast %cst_198 : f32 to vector<8x64xf32>
    %1140 = arith.addf %1139, %1138 : vector<8x64xf32>
    %1141 = arith.divf %1139, %1140 : vector<8x64xf32>
    %1142 = vector.extract_strided_slice %1141 {offsets = [0, 0], sizes = [8, 32], strides = [1, 1]} : vector<8x64xf32> to vector<8x32xf32>
    %1143 = vector.extract_strided_slice %1141 {offsets = [0, 32], sizes = [8, 32], strides = [1, 1]} : vector<8x64xf32> to vector<8x32xf32>
    %1144 = vector.extract_strided_slice %1125 {offsets = [0, 64], sizes = [8, 32], strides = [1, 1]} : vector<8x128xf32> to vector<8x32xf32>
    %1145 = vector.extract_strided_slice %1133 {offsets = [0, 64], sizes = [8, 32], strides = [1, 1]} : vector<8x128xf32> to vector<8x32xf32>
    %1146 = arith.mulf %1142, %1145 : vector<8x32xf32>
    %1147 = arith.addf %1144, %1146 : vector<8x32xf32>
    %1148 = math.tanh %1147 : vector<8x32xf32>
    %1149 = arith.subf %1115, %1148 : vector<8x32xf32>
    %1150 = arith.mulf %1143, %1149 : vector<8x32xf32>
    %1151 = arith.addf %1148, %1150 : vector<8x32xf32>
    %1152 = vector.extract_strided_slice %1132 {offsets = [0, 128], sizes = [8, 128], strides = [1, 1]} : vector<8x256xf32> to vector<8x128xf32>
    %1153 = vector.extract_strided_slice %1127 {offsets = [0, 0], sizes = [8, 64], strides = [1, 1]} : vector<8x128xf32> to vector<8x64xf32>
    %1154 = vector.extract_strided_slice %1152 {offsets = [0, 0], sizes = [8, 64], strides = [1, 1]} : vector<8x128xf32> to vector<8x64xf32>
    %1155 = arith.addf %1153, %1154 : vector<8x64xf32>
    %1156 = arith.negf %1155 : vector<8x64xf32>
    %1157 = math.exp %1156 : vector<8x64xf32>
    %cst_199 = arith.constant 1.000000e+00 : f32
    %1158 = vector.broadcast %cst_199 : f32 to vector<8x64xf32>
    %1159 = arith.addf %1158, %1157 : vector<8x64xf32>
    %1160 = arith.divf %1158, %1159 : vector<8x64xf32>
    %1161 = vector.extract_strided_slice %1160 {offsets = [0, 0], sizes = [8, 32], strides = [1, 1]} : vector<8x64xf32> to vector<8x32xf32>
    %1162 = vector.extract_strided_slice %1160 {offsets = [0, 32], sizes = [8, 32], strides = [1, 1]} : vector<8x64xf32> to vector<8x32xf32>
    %1163 = vector.extract_strided_slice %1127 {offsets = [0, 64], sizes = [8, 32], strides = [1, 1]} : vector<8x128xf32> to vector<8x32xf32>
    %1164 = vector.extract_strided_slice %1152 {offsets = [0, 64], sizes = [8, 32], strides = [1, 1]} : vector<8x128xf32> to vector<8x32xf32>
    %1165 = arith.mulf %1161, %1164 : vector<8x32xf32>
    %1166 = arith.addf %1163, %1165 : vector<8x32xf32>
    %1167 = math.tanh %1166 : vector<8x32xf32>
    %1168 = arith.subf %1118, %1167 : vector<8x32xf32>
    %1169 = arith.mulf %1162, %1168 : vector<8x32xf32>
    %1170 = arith.addf %1167, %1169 : vector<8x32xf32>
    %1171 = vector.broadcast %c6_i32_191 : i32 to vector<8x1xi32>
    %1172 = arith.cmpi slt, %1171, %0 : vector<8x1xi32>
    %1173 = vector.broadcast %1119 : i32 to vector<8x1xi32>
    %1174 = arith.cmpi slt, %1173, %0 : vector<8x1xi32>
    %cst_200 = arith.constant 0.000000e+00 : f32
    %1175 = vector.shape_cast %1172 : vector<8x1xi1> to vector<8x1xi1>
    %1176 = vector.broadcast %1175 : vector<8x1xi1> to vector<8x32xi1>
    %1177 = vector.broadcast %cst_200 : f32 to vector<8x32xf32>
    %1178 = arith.select %1176, %1151, %1177 : vector<8x32xi1>, vector<8x32xf32>
    %cst_201 = arith.constant 0.000000e+00 : f32
    %1179 = vector.shape_cast %1174 : vector<8x1xi1> to vector<8x1xi1>
    %1180 = vector.broadcast %1179 : vector<8x1xi1> to vector<8x32xi1>
    %1181 = vector.broadcast %cst_201 : f32 to vector<8x32xf32>
    %1182 = arith.select %1180, %1170, %1181 : vector<8x32xi1>, vector<8x32xf32>
    %1183 = vector.broadcast %c6_i32_191 : i32 to vector<8x1xi32>
    %1184 = arith.cmpi slt, %1183, %1 : vector<8x1xi32>
    %1185 = vector.shape_cast %1184 : vector<8x1xi1> to vector<8x1xi1>
    %1186 = vector.broadcast %1185 : vector<8x1xi1> to vector<8x32xi1>
    %1187 = vector.broadcast %cst_124 : f32 to vector<8x32xf32>
    %1188 = arith.select %1186, %1178, %1187 : vector<8x32xi1>, vector<8x32xf32>
    %1189 = arith.maximumf %1105, %1188 : vector<8x32xf32>
    %1190 = vector.broadcast %1119 : i32 to vector<8x1xi32>
    %1191 = arith.cmpi slt, %1190, %1 : vector<8x1xi32>
    %1192 = vector.shape_cast %1191 : vector<8x1xi1> to vector<8x1xi1>
    %1193 = vector.broadcast %1192 : vector<8x1xi1> to vector<8x32xi1>
    %1194 = vector.broadcast %cst_124 : f32 to vector<8x32xf32>
    %1195 = arith.select %1193, %1182, %1194 : vector<8x32xi1>, vector<8x32xf32>
    %1196 = arith.maximumf %1112, %1195 : vector<8x32xf32>
    %1197 = vector.shape_cast %1172 : vector<8x1xi1> to vector<8x1xi1>
    %1198 = vector.broadcast %1197 : vector<8x1xi1> to vector<8x32xi1>
    %1199 = arith.select %1198, %1151, %1115 : vector<8x32xi1>, vector<8x32xf32>
    %1200 = vector.shape_cast %1174 : vector<8x1xi1> to vector<8x1xi1>
    %1201 = vector.broadcast %1200 : vector<8x1xi1> to vector<8x32xi1>
    %1202 = arith.select %1201, %1170, %1118 : vector<8x32xi1>, vector<8x32xf32>
    %c7_i32_202 = arith.constant 7 : i32
    %c7_i32_203 = arith.constant 7 : i32
    %1203 = arith.subi %c7_i32_203, %c7_i32_202 : i32
    %c8_i32_204 = arith.constant 8 : i32
    %1204 = arith.muli %c7_i32_202, %c8_i32_204 : i32
    %1205 = tpu.assume_multiple %1204, 8 : i32
    %c8_i32_205 = arith.constant 8 : i32
    %1206 = arith.muli %1203, %c8_i32_205 : i32
    %1207 = tpu.assume_multiple %1206, 8 : i32
    %1208 = arith.index_cast %1205 : i32 to index
    %c0_206 = arith.constant 0 : index
    %1209 = vector.load %arg14[%1208, %c0_206] : memref<64x256xf32, #tpu.memory_space<vmem>>, vector<8x128xf32>
    %1210 = arith.index_cast %1207 : i32 to index
    %c128_207 = arith.constant 128 : index
    %1211 = vector.load %arg14[%1210, %c128_207] : memref<64x256xf32, #tpu.memory_space<vmem>>, vector<8x128xf32>
    %1212 = tpu.concatenate %1199, %1202 in 1 : vector<8x32xf32>, vector<8x32xf32> -> vector<8x64xf32>
    %1213 = arith.truncf %1212 : vector<8x64xf32> to vector<8x64xbf16>
    %cst_208 = arith.constant dense<0.000000e+00> : vector<8x256xf32>
    %1214 = tpu.matmul %1213, %612, %cst_208 {dimension_numbers = #tpu.dot_dimension_numbers<[1], [0], [0], [1], [0, 0, 1, 1], [], []>} : vector<8x64xbf16>, vector<64x256xbf16>, vector<8x256xf32> -> vector<8x256xf32>
    %1215 = vector.broadcast %613 : vector<1x256xf32> to vector<8x256xf32>
    %1216 = arith.addf %1214, %1215 : vector<8x256xf32>
    %1217 = vector.extract_strided_slice %1216 {offsets = [0, 0], sizes = [8, 128], strides = [1, 1]} : vector<8x256xf32> to vector<8x128xf32>
    %1218 = vector.extract_strided_slice %1209 {offsets = [0, 0], sizes = [8, 64], strides = [1, 1]} : vector<8x128xf32> to vector<8x64xf32>
    %1219 = vector.extract_strided_slice %1217 {offsets = [0, 0], sizes = [8, 64], strides = [1, 1]} : vector<8x128xf32> to vector<8x64xf32>
    %1220 = arith.addf %1218, %1219 : vector<8x64xf32>
    %1221 = arith.negf %1220 : vector<8x64xf32>
    %1222 = math.exp %1221 : vector<8x64xf32>
    %cst_209 = arith.constant 1.000000e+00 : f32
    %1223 = vector.broadcast %cst_209 : f32 to vector<8x64xf32>
    %1224 = arith.addf %1223, %1222 : vector<8x64xf32>
    %1225 = arith.divf %1223, %1224 : vector<8x64xf32>
    %1226 = vector.extract_strided_slice %1225 {offsets = [0, 0], sizes = [8, 32], strides = [1, 1]} : vector<8x64xf32> to vector<8x32xf32>
    %1227 = vector.extract_strided_slice %1225 {offsets = [0, 32], sizes = [8, 32], strides = [1, 1]} : vector<8x64xf32> to vector<8x32xf32>
    %1228 = vector.extract_strided_slice %1209 {offsets = [0, 64], sizes = [8, 32], strides = [1, 1]} : vector<8x128xf32> to vector<8x32xf32>
    %1229 = vector.extract_strided_slice %1217 {offsets = [0, 64], sizes = [8, 32], strides = [1, 1]} : vector<8x128xf32> to vector<8x32xf32>
    %1230 = arith.mulf %1226, %1229 : vector<8x32xf32>
    %1231 = arith.addf %1228, %1230 : vector<8x32xf32>
    %1232 = math.tanh %1231 : vector<8x32xf32>
    %1233 = arith.subf %1199, %1232 : vector<8x32xf32>
    %1234 = arith.mulf %1227, %1233 : vector<8x32xf32>
    %1235 = arith.addf %1232, %1234 : vector<8x32xf32>
    %1236 = vector.extract_strided_slice %1216 {offsets = [0, 128], sizes = [8, 128], strides = [1, 1]} : vector<8x256xf32> to vector<8x128xf32>
    %1237 = vector.extract_strided_slice %1211 {offsets = [0, 0], sizes = [8, 64], strides = [1, 1]} : vector<8x128xf32> to vector<8x64xf32>
    %1238 = vector.extract_strided_slice %1236 {offsets = [0, 0], sizes = [8, 64], strides = [1, 1]} : vector<8x128xf32> to vector<8x64xf32>
    %1239 = arith.addf %1237, %1238 : vector<8x64xf32>
    %1240 = arith.negf %1239 : vector<8x64xf32>
    %1241 = math.exp %1240 : vector<8x64xf32>
    %cst_210 = arith.constant 1.000000e+00 : f32
    %1242 = vector.broadcast %cst_210 : f32 to vector<8x64xf32>
    %1243 = arith.addf %1242, %1241 : vector<8x64xf32>
    %1244 = arith.divf %1242, %1243 : vector<8x64xf32>
    %1245 = vector.extract_strided_slice %1244 {offsets = [0, 0], sizes = [8, 32], strides = [1, 1]} : vector<8x64xf32> to vector<8x32xf32>
    %1246 = vector.extract_strided_slice %1244 {offsets = [0, 32], sizes = [8, 32], strides = [1, 1]} : vector<8x64xf32> to vector<8x32xf32>
    %1247 = vector.extract_strided_slice %1211 {offsets = [0, 64], sizes = [8, 32], strides = [1, 1]} : vector<8x128xf32> to vector<8x32xf32>
    %1248 = vector.extract_strided_slice %1236 {offsets = [0, 64], sizes = [8, 32], strides = [1, 1]} : vector<8x128xf32> to vector<8x32xf32>
    %1249 = arith.mulf %1245, %1248 : vector<8x32xf32>
    %1250 = arith.addf %1247, %1249 : vector<8x32xf32>
    %1251 = math.tanh %1250 : vector<8x32xf32>
    %1252 = arith.subf %1202, %1251 : vector<8x32xf32>
    %1253 = arith.mulf %1246, %1252 : vector<8x32xf32>
    %1254 = arith.addf %1251, %1253 : vector<8x32xf32>
    %1255 = vector.broadcast %c7_i32_202 : i32 to vector<8x1xi32>
    %1256 = arith.cmpi slt, %1255, %0 : vector<8x1xi32>
    %1257 = vector.broadcast %1203 : i32 to vector<8x1xi32>
    %1258 = arith.cmpi slt, %1257, %0 : vector<8x1xi32>
    %cst_211 = arith.constant 0.000000e+00 : f32
    %1259 = vector.shape_cast %1256 : vector<8x1xi1> to vector<8x1xi1>
    %1260 = vector.broadcast %1259 : vector<8x1xi1> to vector<8x32xi1>
    %1261 = vector.broadcast %cst_211 : f32 to vector<8x32xf32>
    %1262 = arith.select %1260, %1235, %1261 : vector<8x32xi1>, vector<8x32xf32>
    %cst_212 = arith.constant 0.000000e+00 : f32
    %1263 = vector.shape_cast %1258 : vector<8x1xi1> to vector<8x1xi1>
    %1264 = vector.broadcast %1263 : vector<8x1xi1> to vector<8x32xi1>
    %1265 = vector.broadcast %cst_212 : f32 to vector<8x32xf32>
    %1266 = arith.select %1264, %1254, %1265 : vector<8x32xi1>, vector<8x32xf32>
    %1267 = vector.broadcast %c7_i32_202 : i32 to vector<8x1xi32>
    %1268 = arith.cmpi slt, %1267, %1 : vector<8x1xi32>
    %1269 = vector.shape_cast %1268 : vector<8x1xi1> to vector<8x1xi1>
    %1270 = vector.broadcast %1269 : vector<8x1xi1> to vector<8x32xi1>
    %1271 = vector.broadcast %cst_124 : f32 to vector<8x32xf32>
    %1272 = arith.select %1270, %1262, %1271 : vector<8x32xi1>, vector<8x32xf32>
    %1273 = arith.maximumf %1189, %1272 : vector<8x32xf32>
    %1274 = vector.broadcast %1203 : i32 to vector<8x1xi32>
    %1275 = arith.cmpi slt, %1274, %1 : vector<8x1xi32>
    %1276 = vector.shape_cast %1275 : vector<8x1xi1> to vector<8x1xi1>
    %1277 = vector.broadcast %1276 : vector<8x1xi1> to vector<8x32xi1>
    %1278 = vector.broadcast %cst_124 : f32 to vector<8x32xf32>
    %1279 = arith.select %1277, %1266, %1278 : vector<8x32xi1>, vector<8x32xf32>
    %1280 = arith.maximumf %1196, %1279 : vector<8x32xf32>
    %1281 = vector.shape_cast %1256 : vector<8x1xi1> to vector<8x1xi1>
    %1282 = vector.broadcast %1281 : vector<8x1xi1> to vector<8x32xi1>
    %1283 = arith.select %1282, %1235, %1199 : vector<8x32xi1>, vector<8x32xf32>
    %1284 = vector.shape_cast %1258 : vector<8x1xi1> to vector<8x1xi1>
    %1285 = vector.broadcast %1284 : vector<8x1xi1> to vector<8x32xi1>
    %1286 = arith.select %1285, %1254, %1202 : vector<8x32xi1>, vector<8x32xf32>
    %c8_i32_213 = arith.constant 8 : i32
    %1287 = vector.extract_strided_slice %1273 {offsets = [0, 0], sizes = [2, 32], strides = [1, 1]} : vector<8x32xf32> to vector<2x32xf32>
    %1288 = vector.extract_strided_slice %1280 {offsets = [0, 0], sizes = [2, 32], strides = [1, 1]} : vector<8x32xf32> to vector<2x32xf32>
    %1289 = tpu.concatenate %1287, %1288 in 1 : vector<2x32xf32>, vector<2x32xf32> -> vector<2x64xf32>
    %1290 = vector.extract_strided_slice %1273 {offsets = [2, 0], sizes = [2, 32], strides = [1, 1]} : vector<8x32xf32> to vector<2x32xf32>
    %1291 = vector.extract_strided_slice %1280 {offsets = [2, 0], sizes = [2, 32], strides = [1, 1]} : vector<8x32xf32> to vector<2x32xf32>
    %1292 = tpu.concatenate %1290, %1291 in 1 : vector<2x32xf32>, vector<2x32xf32> -> vector<2x64xf32>
    %1293 = arith.mulf %1289, %1292 : vector<2x64xf32>
    %1294 = arith.subf %1289, %1292 : vector<2x64xf32>
    %1295 = math.absf %1294 : vector<2x64xf32>
    %1296 = tpu.concatenate %1289, %1293, %1295, %1292 in 1 : vector<2x64xf32>, vector<2x64xf32>, vector<2x64xf32>, vector<2x64xf32> -> vector<2x256xf32>
    %1297 = arith.truncf %1296 : vector<2x256xf32> to vector<2x256xbf16>
    %c0_214 = arith.constant 0 : index
    %c0_215 = arith.constant 0 : index
    %1298 = vector.load %arg11[%c0_214, %c0_215] : memref<256x128xbf16, #tpu.memory_space<vmem>>, vector<256x128xbf16>
    %cst_216 = arith.constant dense<0.000000e+00> : vector<2x128xf32>
    %1299 = tpu.matmul %1297, %1298, %cst_216 {dimension_numbers = #tpu.dot_dimension_numbers<[1], [0], [0], [1], [0, 0, 1, 1], [], []>} : vector<2x256xbf16>, vector<256x128xbf16>, vector<2x128xf32> -> vector<2x128xf32>
    %c0_217 = arith.constant 0 : index
    %c0_218 = arith.constant 0 : index
    %1300 = vector.load %arg12[%c0_217, %c0_218] : memref<1x128xf32, #tpu.memory_space<vmem>>, vector<1x128xf32>
    %1301 = vector.broadcast %1300 : vector<1x128xf32> to vector<2x128xf32>
    %1302 = arith.addf %1299, %1301 : vector<2x128xf32>
    %c0_219 = arith.constant 0 : index
    %c0_220 = arith.constant 0 : index
    %1303 = vector.load %arg13[%c0_219, %c0_220] : memref<2x128xf32, #tpu.memory_space<vmem>>, vector<2x128xf32>
    tpu.vector_store %arg13[%c0_219, %c0_220], %1302 {strides = array<i32>} : memref<2x128xf32, #tpu.memory_space<vmem>>, vector<2x128xf32>,
    return
  }
}

</mosaic_0001>

<llo_original>
// kernel: siamese_gru_forward.1
$region0: #{siamese_gru_forward.1}
  #allocation0 [shape = 'u32[]', space=smem, size = 0x4, offset = 0x4, fixed_abs, tag = 'smem constant byte address 0x4 - core index']
  #allocation1 [shape = 'u32[144,128]{1,0:T(1,128)}', space=vmem, size = 0x12000, scoped, tag = 'internal scratch']
  #allocation2 [shape = 'f32[64,256]{1,0:T(8,128)}', space=vmem, size = 0x10000, scoped, tag = 'scratch operand']
  #allocation3 [shape = 'f32[64,64]{1,0:T(8,128)}', space=vmem, size = 0x8000, scoped, tag = 'scratch operand']
  %s0 = inlined_call_operand.vmem [shape: bf16[64,32], index: 0, kind: input, shape index: {}]
  %s1 = inlined_call_operand.vmem [shape: s32[8,1], index: 1, kind: input, shape index: {}]
  %s2 = inlined_call_operand.vmem [shape: s32[8,1], index: 2, kind: input, shape index: {}]
  %s3 = inlined_call_operand.vmem [shape: bf16[32,256], index: 3, kind: input, shape index: {}]
  %s4 = inlined_call_operand.vmem [shape: f32[1,256], index: 4, kind: input, shape index: {}]
  %s5 = inlined_call_operand.vmem [shape: bf16[64,256], index: 5, kind: input, shape index: {}]
  %s6 = inlined_call_operand.vmem [shape: f32[1,256], index: 6, kind: input, shape index: {}]
  %s7 = inlined_call_operand.vmem [shape: bf16[64,256], index: 7, kind: input, shape index: {}]
  %s8 = inlined_call_operand.vmem [shape: f32[1,256], index: 8, kind: input, shape index: {}]
  %s9 = inlined_call_operand.vmem [shape: bf16[64,256], index: 9, kind: input, shape index: {}]
  %s10 = inlined_call_operand.vmem [shape: f32[1,256], index: 10, kind: input, shape index: {}]
  %s11 = inlined_call_operand.vmem [shape: bf16[256,128], index: 11, kind: input, shape index: {}]
  %s12 = inlined_call_operand.vmem [shape: f32[1,128], index: 12, kind: input, shape index: {}]
  %s13 = inlined_call_operand.hbm [shape: f32[2,128], index: 13, kind: output, shape index: {}]
  %s14 = sld [smem:[#allocation0]]
  $region62: #{siamese_gru_forward.1} parent=0
    _
  %s16 = ssub.s32 1, %s14
  %s17 = scalar_select 0, %s16, %s14
  $region1: #{siamese_gru_forward.1} parent=0
    #allocation4 [shape = 'u8[1024]{0}', space=vmem, size = 0x400, scoped, tag = 'output window, operand 0, single buffered']
    #allocation5 [shape = 's32[1]{0}', space=sflag, size = 0x4, scoped, tag = 'scoped memory for siamese_gru_forward.1']
    %18 = vsyncpa [#allocation5], 0
    // Predicated region
    $region2: #{siamese_gru_forward.1} parent=1 // pred_check
      _
    $region3: #{siamese_gru_forward.1} parent=1 // pred_check_branch
      %20 = sbr.rel (0) target = $region5
    $region4: #{siamese_gru_forward.1} parent=1 // pred_region
      _
    $region5: #{siamese_gru_forward.1} parent=1 // pred_fallthru
      _
    // Predicated region
    $region6: #{siamese_gru_forward.1} parent=1 // pred_check
      _
    $region7: #{siamese_gru_forward.1} parent=1 // pred_check_branch
      %22 = sbr.rel (0) target = $region9
    $region8: #{siamese_gru_forward.1} parent=1 // pred_region
      _
    $region9: #{siamese_gru_forward.1} parent=1 // pred_fallthru
      _
    // Predicated region
    $region10: #{siamese_gru_forward.1} parent=1 // pred_check
      _
    $region11: #{siamese_gru_forward.1} parent=1 // pred_check_branch
      %24 = sbr.rel (0) target = $region13
    $region12: #{siamese_gru_forward.1} parent=1 // pred_region
      _
    $region13: #{siamese_gru_forward.1} parent=1 // pred_fallthru
      _
    // Predicated region
    $region14: #{siamese_gru_forward.1} parent=1 // pred_check
      _
    $region15: #{siamese_gru_forward.1} parent=1 // pred_check_branch
      %26 = sbr.rel (0) target = $region17
    $region16: #{siamese_gru_forward.1} parent=1 // pred_region
      _
    $region17: #{siamese_gru_forward.1} parent=1 // pred_fallthru
      _
    // Predicated region
    $region18: #{siamese_gru_forward.1} parent=1 // pred_check
      _
    $region19: #{siamese_gru_forward.1} parent=1 // pred_check_branch
      %28 = sbr.rel (0) target = $region21
    $region20: #{siamese_gru_forward.1} parent=1 // pred_region
      _
    $region21: #{siamese_gru_forward.1} parent=1 // pred_fallthru
      _
    // Predicated region
    $region22: #{siamese_gru_forward.1} parent=1 // pred_check
      _
    $region23: #{siamese_gru_forward.1} parent=1 // pred_check_branch
      %30 = sbr.rel (0) target = $region25
    $region24: #{siamese_gru_forward.1} parent=1 // pred_region
      _
    $region25: #{siamese_gru_forward.1} parent=1 // pred_fallthru
      _
    // Predicated region
    $region26: #{siamese_gru_forward.1} parent=1 // pred_check
      _
    $region27: #{siamese_gru_forward.1} parent=1 // pred_check_branch
      %32 = sbr.rel (0) target = $region29
    $region28: #{siamese_gru_forward.1} parent=1 // pred_region
      _
    $region29: #{siamese_gru_forward.1} parent=1 // pred_fallthru
      _
    // Predicated region
    $region30: #{siamese_gru_forward.1} parent=1 // pred_check
      _
    $region31: #{siamese_gru_forward.1} parent=1 // pred_check_branch
      %34 = sbr.rel (0) target = $region33
    $region32: #{siamese_gru_forward.1} parent=1 // pred_region
      _
    $region33: #{siamese_gru_forward.1} parent=1 // pred_fallthru
      _
    // Predicated region
    $region34: #{siamese_gru_forward.1} parent=1 // pred_check
      _
    $region35: #{siamese_gru_forward.1} parent=1 // pred_check_branch
      %36 = sbr.rel (0) target = $region37
    $region36: #{siamese_gru_forward.1} parent=1 // pred_region
      _
    $region37: #{siamese_gru_forward.1} parent=1 // pred_fallthru
      _
    // Predicated region
    $region38: #{siamese_gru_forward.1} parent=1 // pred_check
      _
    $region39: #{siamese_gru_forward.1} parent=1 // pred_check_branch
      %38 = sbr.rel (0) target = $region41
    $region40: #{siamese_gru_forward.1} parent=1 // pred_region
      _
    $region41: #{siamese_gru_forward.1} parent=1 // pred_fallthru
      _
    // Predicated region
    $region42: #{siamese_gru_forward.1} parent=1 // pred_check
      _
    $region43: #{siamese_gru_forward.1} parent=1 // pred_check_branch
      %40 = sbr.rel (0) target = $region45
    $region44: #{siamese_gru_forward.1} parent=1 // pred_region
      _
    $region45: #{siamese_gru_forward.1} parent=1 // pred_fallthru
      _
    // Predicated region
    $region46: #{siamese_gru_forward.1} parent=1 // pred_check
      _
    $region47: #{siamese_gru_forward.1} parent=1 // pred_check_branch
      %42 = sbr.rel (0) target = $region49
    $region48: #{siamese_gru_forward.1} parent=1 // pred_region
      _
    $region49: #{siamese_gru_forward.1} parent=1 // pred_fallthru
      _
    // Predicated region
    $region50: #{siamese_gru_forward.1} parent=1 // pred_check
      _
    $region51: #{siamese_gru_forward.1} parent=1 // pred_check_branch
      %44 = sbr.rel (0) target = $region53
    $region52: #{siamese_gru_forward.1} parent=1 // pred_region
      _
    $region53: #{siamese_gru_forward.1} parent=1 // pred_fallthru
      _
    %v46 = vld [vmem:[%s1] sm:$0xff]
    %v47 = vld [vmem:[%s2] sm:$0xff]
    %v48 = vld [vmem:[%s0] sm:$0xf]
    %v49 = vld [vmem:[%s0 + $0x4] sm:$0xf]
    %v50 = vld [vmem:[%s0 + $0x8] sm:$0xf]
    %v51 = vld [vmem:[%s0 + $0xc] sm:$0xf]
    %v52 = vld [vmem:[%s0 + $0x10] sm:$0xf]
    %v53 = vld [vmem:[%s0 + $0x14] sm:$0xf]
    %v54 = vld [vmem:[%s0 + $0x18] sm:$0xf]
    %v55 = vld [vmem:[%s0 + $0x1c] sm:$0xf]
    %v56 = vld [vmem:[%s3] sm:$0xff]
    %v57 = vld [vmem:[%s3 + $0x8] sm:$0xff]
    %v58 = vld [vmem:[%s3 + $0x10] sm:$0xff]
    %v59 = vld [vmem:[%s3 + $0x18] sm:$0xff]
    %v60 = vld [vmem:[%s4] sm:$0x3]
    %v62 = vlaneseq
    %v63 = vshrl.u32 %v62, 7
    %v64 = vsub.s32 0, %v63
    %v65 = vrot.slane %v60, %v64
    %v66 = vlaneseq
    %v67 = vshrl.u32 %v66, 7
    %v68 = vsub.s32 1, %v67
    %v69 = vrot.slane %v60, %v68
    %v80 = vunpack.c.l.b16 %v48
    %v81 = vunpack.c.l.b16 %v49
    %v82 = vunpack.c.l.b16 %v50
    %v83 = vunpack.c.l.b16 %v51
    %v84 = vunpack.c.l.b16 %v52
    %v85 = vunpack.c.l.b16 %v53
    %v86 = vunpack.c.l.b16 %v54
    %v87 = vunpack.c.l.b16 %v55
    %v88 = vpack.c.b16 %v81, %v80
    %v89 = vpack.c.b16 %v83, %v82
    %v90 = vpack.c.b16 %v85, %v84
    %v91 = vpack.c.b16 %v87, %v86
    %v96 = vunpack.c.l.b16 %v56
    %v97 = vunpack.c.h.b16 %v56
    %v98 = vunpack.c.l.b16 %v57
    %v99 = vunpack.c.h.b16 %v57
    %v100 = vunpack.c.l.b16 %v58
    %v101 = vunpack.c.h.b16 %v58
    %v102 = vunpack.c.l.b16 %v59
    %v103 = vunpack.c.h.b16 %v59
    %v104 = vpack.c.b16 %v98, %v96
    %v105 = vpack.c.b16 %v99, %v97
    %v106 = vpack.c.b16 %v102, %v100
    %v107 = vpack.c.b16 %v103, %v101
    %vm112 = vcmask 261120
    %v114 = vsel %vm112, %v88, 0
    %v117 = vsel %vm112, %v89, 0
    %v120 = vsel %vm112, %v90, 0
    %v123 = vsel %vm112, %v91, 0
    %125 = vmatprep.subr.bf16.mxu0 %v105
    %126 = vmatpush1.bf16.msra.mxu0 %v104
    %127 = vmatprep.subr.bf16.mxu0 %v107
    %128 = vmatpush1.bf16.msra.mxu0 %v106
    %129 = vmatprep.subr.bf16.mxu0 0
    %130 = vmatpush1.bf16.msra.mxu0 0
    %131 = vmatprep.subr.bf16.mxu0 0
    %132 = vmatpush1.bf16.msra.mxu0 0
    %133 = vmatprep.subr.bf16.mxu0 0
    %134 = vmatpush1.bf16.msra.mxu0 0
    %135 = vmatprep.subr.bf16.mxu0 0
    %136 = vmatpush1.bf16.msra.mxu0 0
    %137 = vmatprep.subr.bf16.mxu0 0
    %138 = vmatpush1.bf16.msra.mxu0 0
    %139 = vmatprep.subr.bf16.mxu0 0
    %140 = vmatpush1.bf16.msra.mxu0 0
    %141 = vmatprep.subr.bf16.mxu0 0
    %142 = vmatpush1.bf16.msra.mxu0 0
    %143 = vmatprep.subr.bf16.mxu0 0
    %144 = vmatpush1.bf16.msra.mxu0 0
    %145 = vmatprep.subr.bf16.mxu0 0
    %146 = vmatpush1.bf16.msra.mxu0 0
    %147 = vmatprep.subr.bf16.mxu0 0
    %148 = vmatpush1.bf16.msra.mxu0 0
    %149 = vmatprep.subr.bf16.mxu0 0
    %150 = vmatpush1.bf16.msra.mxu0 0
    %151 = vmatprep.subr.bf16.mxu0 0
    %152 = vmatpush1.bf16.msra.mxu0 0
    %153 = vmatprep.subr.bf16.mxu0 0
    %154 = vmatpush1.bf16.msra.mxu0 0
    %155 = vmatprep.subr.bf16.mxu0 0
    %156 = vmatpush1.bf16.msra.mxu0 0
    %157 = vmatprep.mubr.bf16.mxu0 0
    %158 = vmatmul.mubr.bf16.gmra.mrb[0].mxu0 %v114
    %v159 = vpop.f32.mrb[0].mxu0
    %v160 = vadd.f32 %v65, %v159
    %v161 = vpop.f32.mrb[0].mxu0
    %v162 = vadd.f32 %v69, %v161
    %v163 = vpop.f32.mrb[0].mxu0
    %v164 = vadd.f32 %v65, %v163
    %v165 = vpop.f32.mrb[0].mxu0
    %v166 = vadd.f32 %v69, %v165
    %167 = vmatprep.mubr.bf16.mxu0 0
    %168 = vmatmul.mubr.bf16.gmra.mrb[0].mxu0 %v117
    %v169 = vpop.f32.mrb[0].mxu0
    %v170 = vadd.f32 %v65, %v169
    %v171 = vpop.f32.mrb[0].mxu0
    %v172 = vadd.f32 %v69, %v171
    %v173 = vpop.f32.mrb[0].mxu0
    %v174 = vadd.f32 %v65, %v173
    %v175 = vpop.f32.mrb[0].mxu0
    %v176 = vadd.f32 %v69, %v175
    %177 = vmatprep.mubr.bf16.mxu0 0
    %178 = vmatmul.mubr.bf16.gmra.mrb[0].mxu0 %v120
    %v179 = vpop.f32.mrb[0].mxu0
    %v180 = vadd.f32 %v65, %v179
    %v181 = vpop.f32.mrb[0].mxu0
    %v182 = vadd.f32 %v69, %v181
    %v183 = vpop.f32.mrb[0].mxu0
    %v184 = vadd.f32 %v65, %v183
    %v185 = vpop.f32.mrb[0].mxu0
    %v186 = vadd.f32 %v69, %v185
    %187 = vmatprep.mubr.bf16.mxu0 0
    %188 = vmatmul.mubr.bf16.gmra.mrb[0].mxu0 %v123
    %v189 = vpop.f32.mrb[0].mxu0
    %v190 = vadd.f32 %v65, %v189
    %v191 = vpop.f32.mrb[0].mxu0
    %v192 = vadd.f32 %v69, %v191
    %v193 = vpop.f32.mrb[0].mxu0
    %v194 = vadd.f32 %v65, %v193
    %v195 = vpop.f32.mrb[0].mxu0
    %v196 = vadd.f32 %v69, %v195
    %197 = vdwg.mxu0
    %198 = vst [vmem:[#allocation2] sm:$0xff] %v160
    %199 = vst [vmem:[#allocation2 + $0x8] sm:$0xff] %v162
    %200 = vst [vmem:[#allocation2 + $0x10] sm:$0xff] %v164
    %201 = vst [vmem:[#allocation2 + $0x18] sm:$0xff] %v166
    %202 = vst [vmem:[#allocation2 + $0x20] sm:$0xff] %v170
    %203 = vst [vmem:[#allocation2 + $0x28] sm:$0xff] %v172
    %204 = vst [vmem:[#allocation2 + $0x30] sm:$0xff] %v174
    %205 = vst [vmem:[#allocation2 + $0x38] sm:$0xff] %v176
    %206 = vst [vmem:[#allocation2 + $0x40] sm:$0xff] %v180
    %207 = vst [vmem:[#allocation2 + $0x48] sm:$0xff] %v182
    %208 = vst [vmem:[#allocation2 + $0x50] sm:$0xff] %v184
    %209 = vst [vmem:[#allocation2 + $0x58] sm:$0xff] %v186
    %210 = vst [vmem:[#allocation2 + $0x60] sm:$0xff] %v190
    %211 = vst [vmem:[#allocation2 + $0x68] sm:$0xff] %v192
    %212 = vst [vmem:[#allocation2 + $0x70] sm:$0xff] %v194
    %213 = vst [vmem:[#allocation2 + $0x78] sm:$0xff] %v196
    %v214 = vld [vmem:[%s5] sm:$0xff]
    %v215 = vld [vmem:[%s5 + $0x8] sm:$0xff]
    %v216 = vld [vmem:[%s5 + $0x10] sm:$0xff]
    %v217 = vld [vmem:[%s5 + $0x18] sm:$0xff]
    %v218 = vld [vmem:[%s5 + $0x20] sm:$0xff]
    %v219 = vld [vmem:[%s5 + $0x28] sm:$0xff]
    %v220 = vld [vmem:[%s5 + $0x30] sm:$0xff]
    %v221 = vld [vmem:[%s5 + $0x38] sm:$0xff]
    %v222 = vld [vmem:[%s6] sm:$0x3]
    %s223 = smul.u32 0, 2
    %s224 = smul.addr %s223, 8
    %s225 = scalar_lea.vmem [#allocation2], %s224
    %v226 = vld [vmem:[%s225] sm:$0xff]
    %s227 = smul.u32 7, 2
    %s228 = smul.addr %s227, 8
    %s229 = scalar_lea.vmem [#allocation2], %s228
    %v230 = vld [vmem:[%s229 + $0x8] sm:$0xff]
    %v231 = vpack.c.bf16 0.0, 0.0
    %v233 = vlaneseq
    %v234 = vshrl.u32 %v233, 7
    %v235 = vsub.s32 0, %v234
    %v236 = vrot.slane %v222, %v235
    %v237 = vlaneseq
    %v238 = vshrl.u32 %v237, 7
    %v239 = vsub.s32 1, %v238
    %v240 = vrot.slane %v222, %v239
    %v251 = vunpack.c.l.b16 %v214
    %v252 = vunpack.c.h.b16 %v214
    %v253 = vunpack.c.l.b16 %v215
    %v254 = vunpack.c.h.b16 %v215
    %v255 = vunpack.c.l.b16 %v216
    %v256 = vunpack.c.h.b16 %v216
    %v257 = vunpack.c.l.b16 %v217
    %v258 = vunpack.c.h.b16 %v217
    %v259 = vunpack.c.l.b16 %v218
    %v260 = vunpack.c.h.b16 %v218
    %v261 = vunpack.c.l.b16 %v219
    %v262 = vunpack.c.h.b16 %v219
    %v263 = vunpack.c.l.b16 %v220
    %v264 = vunpack.c.h.b16 %v220
    %v265 = vunpack.c.l.b16 %v221
    %v266 = vunpack.c.h.b16 %v221
    %v267 = vpack.c.b16 %v253, %v251
    %v268 = vpack.c.b16 %v254, %v252
    %v269 = vpack.c.b16 %v257, %v255
    %v270 = vpack.c.b16 %v258, %v256
    %v271 = vpack.c.b16 %v261, %v259
    %v272 = vpack.c.b16 %v262, %v260
    %v273 = vpack.c.b16 %v265, %v263
    %v274 = vpack.c.b16 %v266, %v264
    %vm283 = vcmask 523264
    %v285 = vsel %vm283, %v231, 0
    %287 = vmatprep.subr.bf16.mxu0 %v268
    %288 = vmatpush1.bf16.msra.mxu0 %v267
    %289 = vmatprep.subr.bf16.mxu0 %v270
    %290 = vmatpush1.bf16.msra.mxu0 %v269
    %291 = vmatprep.subr.bf16.mxu0 %v272
    %292 = vmatpush1.bf16.msra.mxu0 %v271
    %293 = vmatprep.subr.bf16.mxu0 %v274
    %294 = vmatpush1.bf16.msra.mxu0 %v273
    %295 = vmatprep.subr.bf16.mxu0 0
    %296 = vmatpush1.bf16.msra.mxu0 0
    %297 = vmatprep.subr.bf16.mxu0 0
    %298 = vmatpush1.bf16.msra.mxu0 0
    %299 = vmatprep.subr.bf16.mxu0 0
    %300 = vmatpush1.bf16.msra.mxu0 0
    %301 = vmatprep.subr.bf16.mxu0 0
    %302 = vmatpush1.bf16.msra.mxu0 0
    %303 = vmatprep.subr.bf16.mxu0 0
    %304 = vmatpush1.bf16.msra.mxu0 0
    %305 = vmatprep.subr.bf16.mxu0 0
    %306 = vmatpush1.bf16.msra.mxu0 0
    %307 = vmatprep.subr.bf16.mxu0 0
    %308 = vmatpush1.bf16.msra.mxu0 0
    %309 = vmatprep.subr.bf16.mxu0 0
    %310 = vmatpush1.bf16.msra.mxu0 0
    %311 = vmatprep.subr.bf16.mxu0 0
    %312 = vmatpush1.bf16.msra.mxu0 0
    %313 = vmatprep.subr.bf16.mxu0 0
    %314 = vmatpush1.bf16.msra.mxu0 0
    %315 = vmatprep.subr.bf16.mxu0 0
    %316 = vmatpush1.bf16.msra.mxu0 0
    %317 = vmatprep.subr.bf16.mxu0 0
    %318 = vmatpush1.bf16.msra.mxu0 0
    %319 = vmatprep.mubr.bf16.mxu0 0
    %320 = vmatmul.mubr.bf16.gmra.mrb[0].mxu0 %v285
    %v321 = vpop.f32.mrb[0].mxu0
    %v322 = vadd.f32 %v236, %v321
    %v323 = vpop.f32.mrb[0].mxu0
    %v324 = vadd.f32 %v240, %v323
    %v325 = vpop.f32.mrb[0].mxu0
    %v326 = vpop.f32.mrb[0].mxu0
    %327 = vdwg.mxu0
    %v328 = vadd.f32 %v226, %v322
    %v329 = vxor.u32 %v328, 2147483648
    %v330 = vmul.f32 %v329, 1.442695
    %v331 = vpow.pop %v330
    %v332 = vadd.f32 %v331, 1.0
    %v333 = vrcp.pop %v332
    %v334 = vmul.f32 1.0, %v333
    %336 = vrot.lane.b32.xlu0 %v322, 64
    %v337 = vpop.permute.xlu0 %336
    %v339 = vmul.f32 %v334, %v337
    %341 = vrot.lane.b32.xlu0 %v339, 64
    %v342 = vpop.permute.xlu0 %341
    %v344 = vadd.f32 %v226, %v342
    %v345 = vtanh.pop %v344
    %v346 = vsub.f32 0.0, %v345
    %348 = vrot.lane.b32.xlu0 %v346, 96
    %v349 = vpop.permute.xlu0 %348
    %v351 = vmul.f32 %v334, %v349
    %353 = vrot.lane.b32.xlu0 %v351, 32
    %v354 = vpop.permute.xlu0 %353
    %v356 = vadd.f32 %v345, %v354
    %v357 = vadd.f32 %v230, %v324
    %v358 = vxor.u32 %v357, 2147483648
    %v359 = vmul.f32 %v358, 1.442695
    %v360 = vpow.pop %v359
    %v361 = vadd.f32 %v360, 1.0
    %v362 = vrcp.pop %v361
    %v363 = vmul.f32 1.0, %v362
    %365 = vrot.lane.b32.xlu0 %v324, 64
    %v366 = vpop.permute.xlu0 %365
    %v368 = vmul.f32 %v363, %v366
    %370 = vrot.lane.b32.xlu0 %v368, 64
    %v371 = vpop.permute.xlu0 %370
    %v373 = vadd.f32 %v230, %v371
    %v374 = vtanh.pop %v373
    %v375 = vsub.f32 0.0, %v374
    %377 = vrot.lane.b32.xlu0 %v375, 96
    %v378 = vpop.permute.xlu0 %377
    %v380 = vmul.f32 %v363, %v378
    %382 = vrot.lane.b32.xlu0 %v380, 32
    %v383 = vpop.permute.xlu0 %382
    %v385 = vadd.f32 %v374, %v383
    %vm386 = vcmp.gt.s32.totalorder %v46, 0
    %vm387 = vcmp.gt.s32.totalorder %v46, 7
    %v388 = vsel %vm386, 1, 0
    %389 = vset.pattern.permute.xlu0 0
    %390 = vperm.xlu0 %389, %v388
    %v391 = vpop.permute.xlu0 %390
    %vm392 = vcmp.eq.s32.totalorder %v391, 1
    %v393 = vsel %vm392, %v356, 0.0
    %395 = vrot.lane.b32.xlu0 %v393, 64
    %v396 = vpop.permute.xlu0 %395
    %398 = vst.msk [vmem:[#allocation3] sm:$0xff] %vm112, %v396
    %v399 = vsel %vm387, 1, 0
    %400 = vset.pattern.permute.xlu0 0
    %401 = vperm.xlu0 %400, %v399
    %v402 = vpop.permute.xlu0 %401
    %vm403 = vcmp.eq.s32.totalorder %v402, 1
    %v404 = vsel %vm403, %v385, 0.0
    %406 = vrot.lane.b32.xlu0 %v404, 96
    %v407 = vpop.permute.xlu0 %406
    %s409 = scalar_lea.vmem [#allocation3], 56
    %vm410 = vcmask 523520
    %411 = vst.msk [vmem:[%s409] sm:$0xff] %vm410, %v407
    %s412 = smul.u32 1, 2
    %s413 = smul.addr %s412, 8
    %s414 = scalar_lea.vmem [#allocation2], %s413
    %v415 = vld [vmem:[%s414] sm:$0xff]
    %s416 = smul.u32 6, 2
    %s417 = smul.addr %s416, 8
    %s418 = scalar_lea.vmem [#allocation2], %s417
    %v419 = vld [vmem:[%s418 + $0x8] sm:$0xff]
    %v420 = vsel %vm112, %v396, %v407
    %v421 = vpack.c.bf16 %v420, %v420
    %v423 = vsel %vm283, %v421, 0
    %425 = vmatprep.subr.bf16.mxu0 %v268
    %426 = vmatpush1.bf16.msra.mxu0 %v267
    %427 = vmatprep.subr.bf16.mxu0 %v270
    %428 = vmatpush1.bf16.msra.mxu0 %v269
    %429 = vmatprep.subr.bf16.mxu0 %v272
    %430 = vmatpush1.bf16.msra.mxu0 %v271
    %431 = vmatprep.subr.bf16.mxu0 %v274
    %432 = vmatpush1.bf16.msra.mxu0 %v273
    %433 = vmatprep.subr.bf16.mxu0 0
    %434 = vmatpush1.bf16.msra.mxu0 0
    %435 = vmatprep.subr.bf16.mxu0 0
    %436 = vmatpush1.bf16.msra.mxu0 0
    %437 = vmatprep.subr.bf16.mxu0 0
    %438 = vmatpush1.bf16.msra.mxu0 0
    %439 = vmatprep.subr.bf16.mxu0 0
    %440 = vmatpush1.bf16.msra.mxu0 0
    %441 = vmatprep.subr.bf16.mxu0 0
    %442 = vmatpush1.bf16.msra.mxu0 0
    %443 = vmatprep.subr.bf16.mxu0 0
    %444 = vmatpush1.bf16.msra.mxu0 0
    %445 = vmatprep.subr.bf16.mxu0 0
    %446 = vmatpush1.bf16.msra.mxu0 0
    %447 = vmatprep.subr.bf16.mxu0 0
    %448 = vmatpush1.bf16.msra.mxu0 0
    %449 = vmatprep.subr.bf16.mxu0 0
    %450 = vmatpush1.bf16.msra.mxu0 0
    %451 = vmatprep.subr.bf16.mxu0 0
    %452 = vmatpush1.bf16.msra.mxu0 0
    %453 = vmatprep.subr.bf16.mxu0 0
    %454 = vmatpush1.bf16.msra.mxu0 0
    %455 = vmatprep.subr.bf16.mxu0 0
    %456 = vmatpush1.bf16.msra.mxu0 0
    %457 = vmatprep.mubr.bf16.mxu0 0
    %458 = vmatmul.mubr.bf16.gmra.mrb[0].mxu0 %v423
    %v459 = vpop.f32.mrb[0].mxu0
    %v460 = vadd.f32 %v236, %v459
    %v461 = vpop.f32.mrb[0].mxu0
    %v462 = vadd.f32 %v240, %v461
    %v463 = vpop.f32.mrb[0].mxu0
    %v464 = vpop.f32.mrb[0].mxu0
    %465 = vdwg.mxu0
    %v466 = vadd.f32 %v415, %v460
    %v467 = vxor.u32 %v466, 2147483648
    %v468 = vmul.f32 %v467, 1.442695
    %v469 = vpow.pop %v468
    %v470 = vadd.f32 %v469, 1.0
    %v471 = vrcp.pop %v470
    %v472 = vmul.f32 1.0, %v471
    %474 = vrot.lane.b32.xlu0 %v460, 64
    %v475 = vpop.permute.xlu0 %474
    %v477 = vmul.f32 %v472, %v475
    %479 = vrot.lane.b32.xlu0 %v477, 64
    %v480 = vpop.permute.xlu0 %479
    %v482 = vadd.f32 %v415, %v480
    %v483 = vtanh.pop %v482
    %v484 = vsub.f32 %v393, %v483
    %486 = vrot.lane.b32.xlu0 %v484, 96
    %v487 = vpop.permute.xlu0 %486
    %v489 = vmul.f32 %v472, %v487
    %491 = vrot.lane.b32.xlu0 %v489, 32
    %v492 = vpop.permute.xlu0 %491
    %v494 = vadd.f32 %v483, %v492
    %v495 = vadd.f32 %v419, %v462
    %v496 = vxor.u32 %v495, 2147483648
    %v497 = vmul.f32 %v496, 1.442695
    %v498 = vpow.pop %v497
    %v499 = vadd.f32 %v498, 1.0
    %v500 = vrcp.pop %v499
    %v501 = vmul.f32 1.0, %v500
    %503 = vrot.lane.b32.xlu0 %v462, 64
    %v504 = vpop.permute.xlu0 %503
    %v506 = vmul.f32 %v501, %v504
    %508 = vrot.lane.b32.xlu0 %v506, 64
    %v509 = vpop.permute.xlu0 %508
    %v511 = vadd.f32 %v419, %v509
    %v512 = vtanh.pop %v511
    %v513 = vsub.f32 %v404, %v512
    %515 = vrot.lane.b32.xlu0 %v513, 96
    %v516 = vpop.permute.xlu0 %515
    %v518 = vmul.f32 %v501, %v516
    %520 = vrot.lane.b32.xlu0 %v518, 32
    %v521 = vpop.permute.xlu0 %520
    %v523 = vadd.f32 %v512, %v521
    %vm524 = vcmp.gt.s32.totalorder %v46, 1
    %vm525 = vcmp.gt.s32.totalorder %v46, 6
    %v526 = vsel %vm524, 1, 0
    %527 = vset.pattern.permute.xlu0 0
    %528 = vperm.xlu0 %527, %v526
    %v529 = vpop.permute.xlu0 %528
    %vm530 = vcmp.eq.s32.totalorder %v529, 1
    %v531 = vsel %vm530, %v494, 0.0
    %533 = vrot.lane.b32.xlu0 %v531, 64
    %v534 = vpop.permute.xlu0 %533
    %s536 = scalar_lea.vmem [#allocation3], 8
    %537 = vst.msk [vmem:[%s536] sm:$0xff] %vm112, %v534
    %v538 = vsel %vm525, 1, 0
    %539 = vset.pattern.permute.xlu0 0
    %540 = vperm.xlu0 %539, %v538
    %v541 = vpop.permute.xlu0 %540
    %vm542 = vcmp.eq.s32.totalorder %v541, 1
    %v543 = vsel %vm542, %v523, 0.0
    %545 = vrot.lane.b32.xlu0 %v543, 96
    %v546 = vpop.permute.xlu0 %545
    %s548 = scalar_lea.vmem [#allocation3], 48
    %549 = vst.msk [vmem:[%s548] sm:$0xff] %vm410, %v546
    %v550 = vsel %vm530, %v494, %v393
    %v551 = vsel %vm542, %v523, %v404
    %s552 = smul.u32 2, 2
    %s553 = smul.addr %s552, 8
    %s554 = scalar_lea.vmem [#allocation2], %s553
    %v555 = vld [vmem:[%s554] sm:$0xff]
    %s556 = smul.u32 5, 2
    %s557 = smul.addr %s556, 8
    %s558 = scalar_lea.vmem [#allocation2], %s557
    %v559 = vld [vmem:[%s558 + $0x8] sm:$0xff]
    %561 = vrot.lane.b32.xlu0 %v550, 64
    %v562 = vpop.permute.xlu0 %561
    %565 = vrot.lane.b32.xlu0 %v551, 96
    %v566 = vpop.permute.xlu0 %565
    %v568 = vsel %vm112, %v562, %v566
    %v569 = vpack.c.bf16 %v568, %v568
    %v571 = vsel %vm283, %v569, 0
    %573 = vmatprep.subr.bf16.mxu0 %v268
    %574 = vmatpush1.bf16.msra.mxu0 %v267
    %575 = vmatprep.subr.bf16.mxu0 %v270
    %576 = vmatpush1.bf16.msra.mxu0 %v269
    %577 = vmatprep.subr.bf16.mxu0 %v272
    %578 = vmatpush1.bf16.msra.mxu0 %v271
    %579 = vmatprep.subr.bf16.mxu0 %v274
    %580 = vmatpush1.bf16.msra.mxu0 %v273
    %581 = vmatprep.subr.bf16.mxu0 0
    %582 = vmatpush1.bf16.msra.mxu0 0
    %583 = vmatprep.subr.bf16.mxu0 0
    %584 = vmatpush1.bf16.msra.mxu0 0
    %585 = vmatprep.subr.bf16.mxu0 0
    %586 = vmatpush1.bf16.msra.mxu0 0
    %587 = vmatprep.subr.bf16.mxu0 0
    %588 = vmatpush1.bf16.msra.mxu0 0
    %589 = vmatprep.subr.bf16.mxu0 0
    %590 = vmatpush1.bf16.msra.mxu0 0
    %591 = vmatprep.subr.bf16.mxu0 0
    %592 = vmatpush1.bf16.msra.mxu0 0
    %593 = vmatprep.subr.bf16.mxu0 0
    %594 = vmatpush1.bf16.msra.mxu0 0
    %595 = vmatprep.subr.bf16.mxu0 0
    %596 = vmatpush1.bf16.msra.mxu0 0
    %597 = vmatprep.subr.bf16.mxu0 0
    %598 = vmatpush1.bf16.msra.mxu0 0
    %599 = vmatprep.subr.bf16.mxu0 0
    %600 = vmatpush1.bf16.msra.mxu0 0
    %601 = vmatprep.subr.bf16.mxu0 0
    %602 = vmatpush1.bf16.msra.mxu0 0
    %603 = vmatprep.subr.bf16.mxu0 0
    %604 = vmatpush1.bf16.msra.mxu0 0
    %605 = vmatprep.mubr.bf16.mxu0 0
    %606 = vmatmul.mubr.bf16.gmra.mrb[0].mxu0 %v571
    %v607 = vpop.f32.mrb[0].mxu0
    %v608 = vadd.f32 %v236, %v607
    %v609 = vpop.f32.mrb[0].mxu0
    %v610 = vadd.f32 %v240, %v609
    %v611 = vpop.f32.mrb[0].mxu0
    %v612 = vpop.f32.mrb[0].mxu0
    %613 = vdwg.mxu0
    %v614 = vadd.f32 %v555, %v608
    %v615 = vxor.u32 %v614, 2147483648
    %v616 = vmul.f32 %v615, 1.442695
    %v617 = vpow.pop %v616
    %v618 = vadd.f32 %v617, 1.0
    %v619 = vrcp.pop %v618
    %v620 = vmul.f32 1.0, %v619
    %622 = vrot.lane.b32.xlu0 %v608, 64
    %v623 = vpop.permute.xlu0 %622
    %v625 = vmul.f32 %v620, %v623
    %627 = vrot.lane.b32.xlu0 %v625, 64
    %v628 = vpop.permute.xlu0 %627
    %v630 = vadd.f32 %v555, %v628
    %v631 = vtanh.pop %v630
    %v632 = vsub.f32 %v550, %v631
    %634 = vrot.lane.b32.xlu0 %v632, 96
    %v635 = vpop.permute.xlu0 %634
    %v637 = vmul.f32 %v620, %v635
    %639 = vrot.lane.b32.xlu0 %v637, 32
    %v640 = vpop.permute.xlu0 %639
    %v642 = vadd.f32 %v631, %v640
    %v643 = vadd.f32 %v559, %v610
    %v644 = vxor.u32 %v643, 2147483648
    %v645 = vmul.f32 %v644, 1.442695
    %v646 = vpow.pop %v645
    %v647 = vadd.f32 %v646, 1.0
    %v648 = vrcp.pop %v647
    %v649 = vmul.f32 1.0, %v648
    %651 = vrot.lane.b32.xlu0 %v610, 64
    %v652 = vpop.permute.xlu0 %651
    %v654 = vmul.f32 %v649, %v652
    %656 = vrot.lane.b32.xlu0 %v654, 64
    %v657 = vpop.permute.xlu0 %656
    %v659 = vadd.f32 %v559, %v657
    %v660 = vtanh.pop %v659
    %v661 = vsub.f32 %v551, %v660
    %663 = vrot.lane.b32.xlu0 %v661, 96
    %v664 = vpop.permute.xlu0 %663
    %v666 = vmul.f32 %v649, %v664
    %668 = vrot.lane.b32.xlu0 %v666, 32
    %v669 = vpop.permute.xlu0 %668
    %v671 = vadd.f32 %v660, %v669
    %vm672 = vcmp.gt.s32.totalorder %v46, 2
    %vm673 = vcmp.gt.s32.totalorder %v46, 5
    %v674 = vsel %vm672, 1, 0
    %675 = vset.pattern.permute.xlu0 0
    %676 = vperm.xlu0 %675, %v674
    %v677 = vpop.permute.xlu0 %676
    %vm678 = vcmp.eq.s32.totalorder %v677, 1
    %v679 = vsel %vm678, %v642, 0.0
    %681 = vrot.lane.b32.xlu0 %v679, 64
    %v682 = vpop.permute.xlu0 %681
    %s684 = scalar_lea.vmem [#allocation3], 16
    %685 = vst.msk [vmem:[%s684] sm:$0xff] %vm112, %v682
    %v686 = vsel %vm673, 1, 0
    %687 = vset.pattern.permute.xlu0 0
    %688 = vperm.xlu0 %687, %v686
    %v689 = vpop.permute.xlu0 %688
    %vm690 = vcmp.eq.s32.totalorder %v689, 1
    %v691 = vsel %vm690, %v671, 0.0
    %693 = vrot.lane.b32.xlu0 %v691, 96
    %v694 = vpop.permute.xlu0 %693
    %s696 = scalar_lea.vmem [#allocation3], 40
    %697 = vst.msk [vmem:[%s696] sm:$0xff] %vm410, %v694
    %v698 = vsel %vm678, %v642, %v550
    %v699 = vsel %vm690, %v671, %v551
    %s700 = smul.u32 3, 2
    %s701 = smul.addr %s700, 8
    %s702 = scalar_lea.vmem [#allocation2], %s701
    %v703 = vld [vmem:[%s702] sm:$0xff]
    %s704 = smul.u32 4, 2
    %s705 = smul.addr %s704, 8
    %s706 = scalar_lea.vmem [#allocation2], %s705
    %v707 = vld [vmem:[%s706 + $0x8] sm:$0xff]
    %709 = vrot.lane.b32.xlu0 %v698, 64
    %v710 = vpop.permute.xlu0 %709
    %713 = vrot.lane.b32.xlu0 %v699, 96
    %v714 = vpop.permute.xlu0 %713
    %v716 = vsel %vm112, %v710, %v714
    %v717 = vpack.c.bf16 %v716, %v716
    %v719 = vsel %vm283, %v717, 0
    %721 = vmatprep.subr.bf16.mxu0 %v268
    %722 = vmatpush1.bf16.msra.mxu0 %v267
    %723 = vmatprep.subr.bf16.mxu0 %v270
    %724 = vmatpush1.bf16.msra.mxu0 %v269
    %725 = vmatprep.subr.bf16.mxu0 %v272
    %726 = vmatpush1.bf16.msra.mxu0 %v271
    %727 = vmatprep.subr.bf16.mxu0 %v274
    %728 = vmatpush1.bf16.msra.mxu0 %v273
    %729 = vmatprep.subr.bf16.mxu0 0
    %730 = vmatpush1.bf16.msra.mxu0 0
    %731 = vmatprep.subr.bf16.mxu0 0
    %732 = vmatpush1.bf16.msra.mxu0 0
    %733 = vmatprep.subr.bf16.mxu0 0
    %734 = vmatpush1.bf16.msra.mxu0 0
    %735 = vmatprep.subr.bf16.mxu0 0
    %736 = vmatpush1.bf16.msra.mxu0 0
    %737 = vmatprep.subr.bf16.mxu0 0
    %738 = vmatpush1.bf16.msra.mxu0 0
    %739 = vmatprep.subr.bf16.mxu0 0
    %740 = vmatpush1.bf16.msra.mxu0 0
    %741 = vmatprep.subr.bf16.mxu0 0
    %742 = vmatpush1.bf16.msra.mxu0 0
    %743 = vmatprep.subr.bf16.mxu0 0
    %744 = vmatpush1.bf16.msra.mxu0 0
    %745 = vmatprep.subr.bf16.mxu0 0
    %746 = vmatpush1.bf16.msra.mxu0 0
    %747 = vmatprep.subr.bf16.mxu0 0
    %748 = vmatpush1.bf16.msra.mxu0 0
    %749 = vmatprep.subr.bf16.mxu0 0
    %750 = vmatpush1.bf16.msra.mxu0 0
    %751 = vmatprep.subr.bf16.mxu0 0
    %752 = vmatpush1.bf16.msra.mxu0 0
    %753 = vmatprep.mubr.bf16.mxu0 0
    %754 = vmatmul.mubr.bf16.gmra.mrb[0].mxu0 %v719
    %v755 = vpop.f32.mrb[0].mxu0
    %v756 = vadd.f32 %v236, %v755
    %v757 = vpop.f32.mrb[0].mxu0
    %v758 = vadd.f32 %v240, %v757
    %v759 = vpop.f32.mrb[0].mxu0
    %v760 = vpop.f32.mrb[0].mxu0
    %761 = vdwg.mxu0
    %v762 = vadd.f32 %v703, %v756
    %v763 = vxor.u32 %v762, 2147483648
    %v764 = vmul.f32 %v763, 1.442695
    %v765 = vpow.pop %v764
    %v766 = vadd.f32 %v765, 1.0
    %v767 = vrcp.pop %v766
    %v768 = vmul.f32 1.0, %v767
    %770 = vrot.lane.b32.xlu0 %v756, 64
    %v771 = vpop.permute.xlu0 %770
    %v773 = vmul.f32 %v768, %v771
    %775 = vrot.lane.b32.xlu0 %v773, 64
    %v776 = vpop.permute.xlu0 %775
    %v778 = vadd.f32 %v703, %v776
    %v779 = vtanh.pop %v778
    %v780 = vsub.f32 %v698, %v779
    %782 = vrot.lane.b32.xlu0 %v780, 96
    %v783 = vpop.permute.xlu0 %782
    %v785 = vmul.f32 %v768, %v783
    %787 = vrot.lane.b32.xlu0 %v785, 32
    %v788 = vpop.permute.xlu0 %787
    %v790 = vadd.f32 %v779, %v788
    %v791 = vadd.f32 %v707, %v758
    %v792 = vxor.u32 %v791, 2147483648
    %v793 = vmul.f32 %v792, 1.442695
    %v794 = vpow.pop %v793
    %v795 = vadd.f32 %v794, 1.0
    %v796 = vrcp.pop %v795
    %v797 = vmul.f32 1.0, %v796
    %799 = vrot.lane.b32.xlu0 %v758, 64
    %v800 = vpop.permute.xlu0 %799
    %v802 = vmul.f32 %v797, %v800
    %804 = vrot.lane.b32.xlu0 %v802, 64
    %v805 = vpop.permute.xlu0 %804
    %v807 = vadd.f32 %v707, %v805
    %v808 = vtanh.pop %v807
    %v809 = vsub.f32 %v699, %v808
    %811 = vrot.lane.b32.xlu0 %v809, 96
    %v812 = vpop.permute.xlu0 %811
    %v814 = vmul.f32 %v797, %v812
    %816 = vrot.lane.b32.xlu0 %v814, 32
    %v817 = vpop.permute.xlu0 %816
    %v819 = vadd.f32 %v808, %v817
    %vm820 = vcmp.gt.s32.totalorder %v46, 3
    %vm821 = vcmp.gt.s32.totalorder %v46, 4
    %v822 = vsel %vm820, 1, 0
    %823 = vset.pattern.permute.xlu0 0
    %824 = vperm.xlu0 %823, %v822
    %v825 = vpop.permute.xlu0 %824
    %vm826 = vcmp.eq.s32.totalorder %v825, 1
    %v827 = vsel %vm826, %v790, 0.0
    %829 = vrot.lane.b32.xlu0 %v827, 64
    %v830 = vpop.permute.xlu0 %829
    %s832 = scalar_lea.vmem [#allocation3], 24
    %833 = vst.msk [vmem:[%s832] sm:$0xff] %vm112, %v830
    %v834 = vsel %vm821, 1, 0
    %835 = vset.pattern.permute.xlu0 0
    %836 = vperm.xlu0 %835, %v834
    %v837 = vpop.permute.xlu0 %836
    %vm838 = vcmp.eq.s32.totalorder %v837, 1
    %v839 = vsel %vm838, %v819, 0.0
    %841 = vrot.lane.b32.xlu0 %v839, 96
    %v842 = vpop.permute.xlu0 %841
    %s844 = scalar_lea.vmem [#allocation3], 32
    %845 = vst.msk [vmem:[%s844] sm:$0xff] %vm410, %v842
    %v846 = vsel %vm826, %v790, %v698
    %v847 = vsel %vm838, %v819, %v699
    %v848 = vld [vmem:[%s706] sm:$0xff]
    %v849 = vld [vmem:[%s702 + $0x8] sm:$0xff]
    %851 = vrot.lane.b32.xlu0 %v846, 64
    %v852 = vpop.permute.xlu0 %851
    %855 = vrot.lane.b32.xlu0 %v847, 96
    %v856 = vpop.permute.xlu0 %855
    %v858 = vsel %vm112, %v852, %v856
    %v859 = vpack.c.bf16 %v858, %v858
    %v861 = vsel %vm283, %v859, 0
    %863 = vmatprep.subr.bf16.mxu0 %v268
    %864 = vmatpush1.bf16.msra.mxu0 %v267
    %865 = vmatprep.subr.bf16.mxu0 %v270
    %866 = vmatpush1.bf16.msra.mxu0 %v269
    %867 = vmatprep.subr.bf16.mxu0 %v272
    %868 = vmatpush1.bf16.msra.mxu0 %v271
    %869 = vmatprep.subr.bf16.mxu0 %v274
    %870 = vmatpush1.bf16.msra.mxu0 %v273
    %871 = vmatprep.subr.bf16.mxu0 0
    %872 = vmatpush1.bf16.msra.mxu0 0
    %873 = vmatprep.subr.bf16.mxu0 0
    %874 = vmatpush1.bf16.msra.mxu0 0
    %875 = vmatprep.subr.bf16.mxu0 0
    %876 = vmatpush1.bf16.msra.mxu0 0
    %877 = vmatprep.subr.bf16.mxu0 0
    %878 = vmatpush1.bf16.msra.mxu0 0
    %879 = vmatprep.subr.bf16.mxu0 0
    %880 = vmatpush1.bf16.msra.mxu0 0
    %881 = vmatprep.subr.bf16.mxu0 0
    %882 = vmatpush1.bf16.msra.mxu0 0
    %883 = vmatprep.subr.bf16.mxu0 0
    %884 = vmatpush1.bf16.msra.mxu0 0
    %885 = vmatprep.subr.bf16.mxu0 0
    %886 = vmatpush1.bf16.msra.mxu0 0
    %887 = vmatprep.subr.bf16.mxu0 0
    %888 = vmatpush1.bf16.msra.mxu0 0
    %889 = vmatprep.subr.bf16.mxu0 0
    %890 = vmatpush1.bf16.msra.mxu0 0
    %891 = vmatprep.subr.bf16.mxu0 0
    %892 = vmatpush1.bf16.msra.mxu0 0
    %893 = vmatprep.subr.bf16.mxu0 0
    %894 = vmatpush1.bf16.msra.mxu0 0
    %895 = vmatprep.mubr.bf16.mxu0 0
    %896 = vmatmul.mubr.bf16.gmra.mrb[0].mxu0 %v861
    %v897 = vpop.f32.mrb[0].mxu0
    %v898 = vadd.f32 %v236, %v897
    %v899 = vpop.f32.mrb[0].mxu0
    %v900 = vadd.f32 %v240, %v899
    %v901 = vpop.f32.mrb[0].mxu0
    %v902 = vpop.f32.mrb[0].mxu0
    %903 = vdwg.mxu0
    %v904 = vadd.f32 %v848, %v898
    %v905 = vxor.u32 %v904, 2147483648
    %v906 = vmul.f32 %v905, 1.442695
    %v907 = vpow.pop %v906
    %v908 = vadd.f32 %v907, 1.0
    %v909 = vrcp.pop %v908
    %v910 = vmul.f32 1.0, %v909
    %912 = vrot.lane.b32.xlu0 %v898, 64
    %v913 = vpop.permute.xlu0 %912
    %v915 = vmul.f32 %v910, %v913
    %917 = vrot.lane.b32.xlu0 %v915, 64
    %v918 = vpop.permute.xlu0 %917
    %v920 = vadd.f32 %v848, %v918
    %v921 = vtanh.pop %v920
    %v922 = vsub.f32 %v846, %v921
    %924 = vrot.lane.b32.xlu0 %v922, 96
    %v925 = vpop.permute.xlu0 %924
    %v927 = vmul.f32 %v910, %v925
    %929 = vrot.lane.b32.xlu0 %v927, 32
    %v930 = vpop.permute.xlu0 %929
    %v932 = vadd.f32 %v921, %v930
    %v933 = vadd.f32 %v849, %v900
    %v934 = vxor.u32 %v933, 2147483648
    %v935 = vmul.f32 %v934, 1.442695
    %v936 = vpow.pop %v935
    %v937 = vadd.f32 %v936, 1.0
    %v938 = vrcp.pop %v937
    %v939 = vmul.f32 1.0, %v938
    %941 = vrot.lane.b32.xlu0 %v900, 64
    %v942 = vpop.permute.xlu0 %941
    %v944 = vmul.f32 %v939, %v942
    %946 = vrot.lane.b32.xlu0 %v944, 64
    %v947 = vpop.permute.xlu0 %946
    %v949 = vadd.f32 %v849, %v947
    %v950 = vtanh.pop %v949
    %v951 = vsub.f32 %v847, %v950
    %953 = vrot.lane.b32.xlu0 %v951, 96
    %v954 = vpop.permute.xlu0 %953
    %v956 = vmul.f32 %v939, %v954
    %958 = vrot.lane.b32.xlu0 %v956, 32
    %v959 = vpop.permute.xlu0 %958
    %v961 = vadd.f32 %v950, %v959
    %v962 = vsel %vm838, %v932, 0.0
    %964 = vrot.lane.b32.xlu0 %v962, 64
    %v965 = vpop.permute.xlu0 %964
    %967 = vst.msk [vmem:[%s844] sm:$0xff] %vm112, %v965
    %v968 = vsel %vm826, %v961, 0.0
    %970 = vrot.lane.b32.xlu0 %v968, 96
    %v971 = vpop.permute.xlu0 %970
    %973 = vst.msk [vmem:[%s832] sm:$0xff] %vm410, %v971
    %v974 = vsel %vm838, %v932, %v846
    %v975 = vsel %vm826, %v961, %v847
    %v976 = vld [vmem:[%s558] sm:$0xff]
    %v977 = vld [vmem:[%s554 + $0x8] sm:$0xff]
    %979 = vrot.lane.b32.xlu0 %v974, 64
    %v980 = vpop.permute.xlu0 %979
    %983 = vrot.lane.b32.xlu0 %v975, 96
    %v984 = vpop.permute.xlu0 %983
    %v986 = vsel %vm112, %v980, %v984
    %v987 = vpack.c.bf16 %v986, %v986
    %v989 = vsel %vm283, %v987, 0
    %991 = vmatprep.subr.bf16.mxu0 %v268
    %992 = vmatpush1.bf16.msra.mxu0 %v267
    %993 = vmatprep.subr.bf16.mxu0 %v270
    %994 = vmatpush1.bf16.msra.mxu0 %v269
    %995 = vmatprep.subr.bf16.mxu0 %v272
    %996 = vmatpush1.bf16.msra.mxu0 %v271
    %997 = vmatprep.subr.bf16.mxu0 %v274
    %998 = vmatpush1.bf16.msra.mxu0 %v273
    %999 = vmatprep.subr.bf16.mxu0 0
    %1000 = vmatpush1.bf16.msra.mxu0 0
    %1001 = vmatprep.subr.bf16.mxu0 0
    %1002 = vmatpush1.bf16.msra.mxu0 0
    %1003 = vmatprep.subr.bf16.mxu0 0
    %1004 = vmatpush1.bf16.msra.mxu0 0
    %1005 = vmatprep.subr.bf16.mxu0 0
    %1006 = vmatpush1.bf16.msra.mxu0 0
    %1007 = vmatprep.subr.bf16.mxu0 0
    %1008 = vmatpush1.bf16.msra.mxu0 0
    %1009 = vmatprep.subr.bf16.mxu0 0
    %1010 = vmatpush1.bf16.msra.mxu0 0
    %1011 = vmatprep.subr.bf16.mxu0 0
    %1012 = vmatpush1.bf16.msra.mxu0 0
    %1013 = vmatprep.subr.bf16.mxu0 0
    %1014 = vmatpush1.bf16.msra.mxu0 0
    %1015 = vmatprep.subr.bf16.mxu0 0
    %1016 = vmatpush1.bf16.msra.mxu0 0
    %1017 = vmatprep.subr.bf16.mxu0 0
    %1018 = vmatpush1.bf16.msra.mxu0 0
    %1019 = vmatprep.subr.bf16.mxu0 0
    %1020 = vmatpush1.bf16.msra.mxu0 0
    %1021 = vmatprep.subr.bf16.mxu0 0
    %1022 = vmatpush1.bf16.msra.mxu0 0
    %1023 = vmatprep.mubr.bf16.mxu0 0
    %1024 = vmatmul.mubr.bf16.gmra.mrb[0].mxu0 %v989
    %v1025 = vpop.f32.mrb[0].mxu0
    %v1026 = vadd.f32 %v236, %v1025
    %v1027 = vpop.f32.mrb[0].mxu0
    %v1028 = vadd.f32 %v240, %v1027
    %v1029 = vpop.f32.mrb[0].mxu0
    %v1030 = vpop.f32.mrb[0].mxu0
    %1031 = vdwg.mxu0
    %v1032 = vadd.f32 %v976, %v1026
    %v1033 = vxor.u32 %v1032, 2147483648
    %v1034 = vmul.f32 %v1033, 1.442695
    %v1035 = vpow.pop %v1034
    %v1036 = vadd.f32 %v1035, 1.0
    %v1037 = vrcp.pop %v1036
    %v1038 = vmul.f32 1.0, %v1037
    %1040 = vrot.lane.b32.xlu0 %v1026, 64
    %v1041 = vpop.permute.xlu0 %1040
    %v1043 = vmul.f32 %v1038, %v1041
    %1045 = vrot.lane.b32.xlu0 %v1043, 64
    %v1046 = vpop.permute.xlu0 %1045
    %v1048 = vadd.f32 %v976, %v1046
    %v1049 = vtanh.pop %v1048
    %v1050 = vsub.f32 %v974, %v1049
    %1052 = vrot.lane.b32.xlu0 %v1050, 96
    %v1053 = vpop.permute.xlu0 %1052
    %v1055 = vmul.f32 %v1038, %v1053
    %1057 = vrot.lane.b32.xlu0 %v1055, 32
    %v1058 = vpop.permute.xlu0 %1057
    %v1060 = vadd.f32 %v1049, %v1058
    %v1061 = vadd.f32 %v977, %v1028
    %v1062 = vxor.u32 %v1061, 2147483648
    %v1063 = vmul.f32 %v1062, 1.442695
    %v1064 = vpow.pop %v1063
    %v1065 = vadd.f32 %v1064, 1.0
    %v1066 = vrcp.pop %v1065
    %v1067 = vmul.f32 1.0, %v1066
    %1069 = vrot.lane.b32.xlu0 %v1028, 64
    %v1070 = vpop.permute.xlu0 %1069
    %v1072 = vmul.f32 %v1067, %v1070
    %1074 = vrot.lane.b32.xlu0 %v1072, 64
    %v1075 = vpop.permute.xlu0 %1074
    %v1077 = vadd.f32 %v977, %v1075
    %v1078 = vtanh.pop %v1077
    %v1079 = vsub.f32 %v975, %v1078
    %1081 = vrot.lane.b32.xlu0 %v1079, 96
    %v1082 = vpop.permute.xlu0 %1081
    %v1084 = vmul.f32 %v1067, %v1082
    %1086 = vrot.lane.b32.xlu0 %v1084, 32
    %v1087 = vpop.permute.xlu0 %1086
    %v1089 = vadd.f32 %v1078, %v1087
    %v1090 = vsel %vm690, %v1060, 0.0
    %1092 = vrot.lane.b32.xlu0 %v1090, 64
    %v1093 = vpop.permute.xlu0 %1092
    %1095 = vst.msk [vmem:[%s696] sm:$0xff] %vm112, %v1093
    %v1096 = vsel %vm678, %v1089, 0.0
    %1098 = vrot.lane.b32.xlu0 %v1096, 96
    %v1099 = vpop.permute.xlu0 %1098
    %1101 = vst.msk [vmem:[%s684] sm:$0xff] %vm410, %v1099
    %v1102 = vsel %vm690, %v1060, %v974
    %v1103 = vsel %vm678, %v1089, %v975
    %v1104 = vld [vmem:[%s418] sm:$0xff]
    %v1105 = vld [vmem:[%s414 + $0x8] sm:$0xff]
    %1107 = vrot.lane.b32.xlu0 %v1102, 64
    %v1108 = vpop.permute.xlu0 %1107
    %1111 = vrot.lane.b32.xlu0 %v1103, 96
    %v1112 = vpop.permute.xlu0 %1111
    %v1114 = vsel %vm112, %v1108, %v1112
    %v1115 = vpack.c.bf16 %v1114, %v1114
    %v1117 = vsel %vm283, %v1115, 0
    %1119 = vmatprep.subr.bf16.mxu0 %v268
    %1120 = vmatpush1.bf16.msra.mxu0 %v267
    %1121 = vmatprep.subr.bf16.mxu0 %v270
    %1122 = vmatpush1.bf16.msra.mxu0 %v269
    %1123 = vmatprep.subr.bf16.mxu0 %v272
    %1124 = vmatpush1.bf16.msra.mxu0 %v271
    %1125 = vmatprep.subr.bf16.mxu0 %v274
    %1126 = vmatpush1.bf16.msra.mxu0 %v273
    %1127 = vmatprep.subr.bf16.mxu0 0
    %1128 = vmatpush1.bf16.msra.mxu0 0
    %1129 = vmatprep.subr.bf16.mxu0 0
    %1130 = vmatpush1.bf16.msra.mxu0 0
    %1131 = vmatprep.subr.bf16.mxu0 0
    %1132 = vmatpush1.bf16.msra.mxu0 0
    %1133 = vmatprep.subr.bf16.mxu0 0
    %1134 = vmatpush1.bf16.msra.mxu0 0
    %1135 = vmatprep.subr.bf16.mxu0 0
    %1136 = vmatpush1.bf16.msra.mxu0 0
    %1137 = vmatprep.subr.bf16.mxu0 0
    %1138 = vmatpush1.bf16.msra.mxu0 0
    %1139 = vmatprep.subr.bf16.mxu0 0
    %1140 = vmatpush1.bf16.msra.mxu0 0
    %1141 = vmatprep.subr.bf16.mxu0 0
    %1142 = vmatpush1.bf16.msra.mxu0 0
    %1143 = vmatprep.subr.bf16.mxu0 0
    %1144 = vmatpush1.bf16.msra.mxu0 0
    %1145 = vmatprep.subr.bf16.mxu0 0
    %1146 = vmatpush1.bf16.msra.mxu0 0
    %1147 = vmatprep.subr.bf16.mxu0 0
    %1148 = vmatpush1.bf16.msra.mxu0 0
    %1149 = vmatprep.subr.bf16.mxu0 0
    %1150 = vmatpush1.bf16.msra.mxu0 0
    %1151 = vmatprep.mubr.bf16.mxu0 0
    %1152 = vmatmul.mubr.bf16.gmra.mrb[0].mxu0 %v1117
    %v1153 = vpop.f32.mrb[0].mxu0
    %v1154 = vadd.f32 %v236, %v1153
    %v1155 = vpop.f32.mrb[0].mxu0
    %v1156 = vadd.f32 %v240, %v1155
    %v1157 = vpop.f32.mrb[0].mxu0
    %v1158 = vpop.f32.mrb[0].mxu0
    %1159 = vdwg.mxu0
    %v1160 = vadd.f32 %v1104, %v1154
    %v1161 = vxor.u32 %v1160, 2147483648
    %v1162 = vmul.f32 %v1161, 1.442695
    %v1163 = vpow.pop %v1162
    %v1164 = vadd.f32 %v1163, 1.0
    %v1165 = vrcp.pop %v1164
    %v1166 = vmul.f32 1.0, %v1165
    %1168 = vrot.lane.b32.xlu0 %v1154, 64
    %v1169 = vpop.permute.xlu0 %1168
    %v1171 = vmul.f32 %v1166, %v1169
    %1173 = vrot.lane.b32.xlu0 %v1171, 64
    %v1174 = vpop.permute.xlu0 %1173
    %v1176 = vadd.f32 %v1104, %v1174
    %v1177 = vtanh.pop %v1176
    %v1178 = vsub.f32 %v1102, %v1177
    %1180 = vrot.lane.b32.xlu0 %v1178, 96
    %v1181 = vpop.permute.xlu0 %1180
    %v1183 = vmul.f32 %v1166, %v1181
    %1185 = vrot.lane.b32.xlu0 %v1183, 32
    %v1186 = vpop.permute.xlu0 %1185
    %v1188 = vadd.f32 %v1177, %v1186
    %v1189 = vadd.f32 %v1105, %v1156
    %v1190 = vxor.u32 %v1189, 2147483648
    %v1191 = vmul.f32 %v1190, 1.442695
    %v1192 = vpow.pop %v1191
    %v1193 = vadd.f32 %v1192, 1.0
    %v1194 = vrcp.pop %v1193
    %v1195 = vmul.f32 1.0, %v1194
    %1197 = vrot.lane.b32.xlu0 %v1156, 64
    %v1198 = vpop.permute.xlu0 %1197
    %v1200 = vmul.f32 %v1195, %v1198
    %1202 = vrot.lane.b32.xlu0 %v1200, 64
    %v1203 = vpop.permute.xlu0 %1202
    %v1205 = vadd.f32 %v1105, %v1203
    %v1206 = vtanh.pop %v1205
    %v1207 = vsub.f32 %v1103, %v1206
    %1209 = vrot.lane.b32.xlu0 %v1207, 96
    %v1210 = vpop.permute.xlu0 %1209
    %v1212 = vmul.f32 %v1195, %v1210
    %1214 = vrot.lane.b32.xlu0 %v1212, 32
    %v1215 = vpop.permute.xlu0 %1214
    %v1217 = vadd.f32 %v1206, %v1215
    %v1218 = vsel %vm542, %v1188, 0.0
    %1220 = vrot.lane.b32.xlu0 %v1218, 64
    %v1221 = vpop.permute.xlu0 %1220
    %1223 = vst.msk [vmem:[%s548] sm:$0xff] %vm112, %v1221
    %v1224 = vsel %vm530, %v1217, 0.0
    %1226 = vrot.lane.b32.xlu0 %v1224, 96
    %v1227 = vpop.permute.xlu0 %1226
    %1229 = vst.msk [vmem:[%s536] sm:$0xff] %vm410, %v1227
    %v1230 = vsel %vm542, %v1188, %v1102
    %v1231 = vsel %vm530, %v1217, %v1103
    %v1232 = vld [vmem:[%s229] sm:$0xff]
    %v1233 = vld [vmem:[%s225 + $0x8] sm:$0xff]
    %1235 = vrot.lane.b32.xlu0 %v1230, 64
    %v1236 = vpop.permute.xlu0 %1235
    %1239 = vrot.lane.b32.xlu0 %v1231, 96
    %v1240 = vpop.permute.xlu0 %1239
    %v1242 = vsel %vm112, %v1236, %v1240
    %v1243 = vpack.c.bf16 %v1242, %v1242
    %v1245 = vsel %vm283, %v1243, 0
    %1247 = vmatprep.subr.bf16.mxu0 %v268
    %1248 = vmatpush1.bf16.msra.mxu0 %v267
    %1249 = vmatprep.subr.bf16.mxu0 %v270
    %1250 = vmatpush1.bf16.msra.mxu0 %v269
    %1251 = vmatprep.subr.bf16.mxu0 %v272
    %1252 = vmatpush1.bf16.msra.mxu0 %v271
    %1253 = vmatprep.subr.bf16.mxu0 %v274
    %1254 = vmatpush1.bf16.msra.mxu0 %v273
    %1255 = vmatprep.subr.bf16.mxu0 0
    %1256 = vmatpush1.bf16.msra.mxu0 0
    %1257 = vmatprep.subr.bf16.mxu0 0
    %1258 = vmatpush1.bf16.msra.mxu0 0
    %1259 = vmatprep.subr.bf16.mxu0 0
    %1260 = vmatpush1.bf16.msra.mxu0 0
    %1261 = vmatprep.subr.bf16.mxu0 0
    %1262 = vmatpush1.bf16.msra.mxu0 0
    %1263 = vmatprep.subr.bf16.mxu0 0
    %1264 = vmatpush1.bf16.msra.mxu0 0
    %1265 = vmatprep.subr.bf16.mxu0 0
    %1266 = vmatpush1.bf16.msra.mxu0 0
    %1267 = vmatprep.subr.bf16.mxu0 0
    %1268 = vmatpush1.bf16.msra.mxu0 0
    %1269 = vmatprep.subr.bf16.mxu0 0
    %1270 = vmatpush1.bf16.msra.mxu0 0
    %1271 = vmatprep.subr.bf16.mxu0 0
    %1272 = vmatpush1.bf16.msra.mxu0 0
    %1273 = vmatprep.subr.bf16.mxu0 0
    %1274 = vmatpush1.bf16.msra.mxu0 0
    %1275 = vmatprep.subr.bf16.mxu0 0
    %1276 = vmatpush1.bf16.msra.mxu0 0
    %1277 = vmatprep.subr.bf16.mxu0 0
    %1278 = vmatpush1.bf16.msra.mxu0 0
    %1279 = vmatprep.mubr.bf16.mxu0 0
    %1280 = vmatmul.mubr.bf16.gmra.mrb[0].mxu0 %v1245
    %v1281 = vpop.f32.mrb[0].mxu0
    %v1282 = vadd.f32 %v236, %v1281
    %v1283 = vpop.f32.mrb[0].mxu0
    %v1284 = vadd.f32 %v240, %v1283
    %v1285 = vpop.f32.mrb[0].mxu0
    %v1286 = vpop.f32.mrb[0].mxu0
    %1287 = vdwg.mxu0
    %v1288 = vadd.f32 %v1232, %v1282
    %v1289 = vxor.u32 %v1288, 2147483648
    %v1290 = vmul.f32 %v1289, 1.442695
    %v1291 = vpow.pop %v1290
    %v1292 = vadd.f32 %v1291, 1.0
    %v1293 = vrcp.pop %v1292
    %v1294 = vmul.f32 1.0, %v1293
    %1296 = vrot.lane.b32.xlu0 %v1282, 64
    %v1297 = vpop.permute.xlu0 %1296
    %v1299 = vmul.f32 %v1294, %v1297
    %1301 = vrot.lane.b32.xlu0 %v1299, 64
    %v1302 = vpop.permute.xlu0 %1301
    %v1304 = vadd.f32 %v1232, %v1302
    %v1305 = vtanh.pop %v1304
    %v1306 = vsub.f32 %v1230, %v1305
    %1308 = vrot.lane.b32.xlu0 %v1306, 96
    %v1309 = vpop.permute.xlu0 %1308
    %v1311 = vmul.f32 %v1294, %v1309
    %1313 = vrot.lane.b32.xlu0 %v1311, 32
    %v1314 = vpop.permute.xlu0 %1313
    %v1316 = vadd.f32 %v1305, %v1314
    %v1317 = vadd.f32 %v1233, %v1284
    %v1318 = vxor.u32 %v1317, 2147483648
    %v1319 = vmul.f32 %v1318, 1.442695
    %v1320 = vpow.pop %v1319
    %v1321 = vadd.f32 %v1320, 1.0
    %v1322 = vrcp.pop %v1321
    %v1323 = vmul.f32 1.0, %v1322
    %1325 = vrot.lane.b32.xlu0 %v1284, 64
    %v1326 = vpop.permute.xlu0 %1325
    %v1328 = vmul.f32 %v1323, %v1326
    %1330 = vrot.lane.b32.xlu0 %v1328, 64
    %v1331 = vpop.permute.xlu0 %1330
    %v1333 = vadd.f32 %v1233, %v1331
    %v1334 = vtanh.pop %v1333
    %v1335 = vsub.f32 %v1231, %v1334
    %1337 = vrot.lane.b32.xlu0 %v1335, 96
    %v1338 = vpop.permute.xlu0 %1337
    %v1340 = vmul.f32 %v1323, %v1338
    %1342 = vrot.lane.b32.xlu0 %v1340, 32
    %v1343 = vpop.permute.xlu0 %1342
    %v1345 = vadd.f32 %v1334, %v1343
    %v1346 = vsel %vm403, %v1316, 0.0
    %1348 = vrot.lane.b32.xlu0 %v1346, 64
    %v1349 = vpop.permute.xlu0 %1348
    %1351 = vst.msk [vmem:[%s409] sm:$0xff] %vm112, %v1349
    %v1352 = vsel %vm392, %v1345, 0.0
    %1354 = vrot.lane.b32.xlu0 %v1352, 96
    %v1355 = vpop.permute.xlu0 %1354
    %1357 = vst.msk [vmem:[#allocation3] sm:$0xff] %vm410, %v1355
    %v1358 = vld [vmem:[#allocation3] sm:$0xff]
    %v1359 = vld [vmem:[#allocation3 + $0x8] sm:$0xff]
    %v1360 = vld [vmem:[#allocation3 + $0x10] sm:$0xff]
    %v1361 = vld [vmem:[#allocation3 + $0x18] sm:$0xff]
    %v1362 = vld [vmem:[#allocation3 + $0x20] sm:$0xff]
    %v1363 = vld [vmem:[#allocation3 + $0x28] sm:$0xff]
    %v1364 = vld [vmem:[#allocation3 + $0x30] sm:$0xff]
    %v1365 = vld [vmem:[#allocation3 + $0x38] sm:$0xff]
    %v1366 = vpack.c.bf16 %v1359, %v1358
    %v1367 = vpack.c.bf16 %v1361, %v1360
    %v1368 = vpack.c.bf16 %v1363, %v1362
    %v1369 = vpack.c.bf16 %v1365, %v1364
    %v1370 = vld [vmem:[%s7] sm:$0xff]
    %v1371 = vld [vmem:[%s7 + $0x8] sm:$0xff]
    %v1372 = vld [vmem:[%s7 + $0x10] sm:$0xff]
    %v1373 = vld [vmem:[%s7 + $0x18] sm:$0xff]
    %v1374 = vld [vmem:[%s7 + $0x20] sm:$0xff]
    %v1375 = vld [vmem:[%s7 + $0x28] sm:$0xff]
    %v1376 = vld [vmem:[%s7 + $0x30] sm:$0xff]
    %v1377 = vld [vmem:[%s7 + $0x38] sm:$0xff]
    %v1378 = vld [vmem:[%s8] sm:$0x3]
    %v1380 = vlaneseq
    %v1381 = vshrl.u32 %v1380, 7
    %v1382 = vsub.s32 0, %v1381
    %v1383 = vrot.slane %v1378, %v1382
    %v1384 = vlaneseq
    %v1385 = vshrl.u32 %v1384, 7
    %v1386 = vsub.s32 1, %v1385
    %v1387 = vrot.slane %v1378, %v1386
    %v1398 = vunpack.c.l.b16 %v1370
    %v1399 = vunpack.c.h.b16 %v1370
    %v1400 = vunpack.c.l.b16 %v1371
    %v1401 = vunpack.c.h.b16 %v1371
    %v1402 = vunpack.c.l.b16 %v1372
    %v1403 = vunpack.c.h.b16 %v1372
    %v1404 = vunpack.c.l.b16 %v1373
    %v1405 = vunpack.c.h.b16 %v1373
    %v1406 = vunpack.c.l.b16 %v1374
    %v1407 = vunpack.c.h.b16 %v1374
    %v1408 = vunpack.c.l.b16 %v1375
    %v1409 = vunpack.c.h.b16 %v1375
    %v1410 = vunpack.c.l.b16 %v1376
    %v1411 = vunpack.c.h.b16 %v1376
    %v1412 = vunpack.c.l.b16 %v1377
    %v1413 = vunpack.c.h.b16 %v1377
    %v1414 = vpack.c.b16 %v1400, %v1398
    %v1415 = vpack.c.b16 %v1401, %v1399
    %v1416 = vpack.c.b16 %v1404, %v1402
    %v1417 = vpack.c.b16 %v1405, %v1403
    %v1418 = vpack.c.b16 %v1408, %v1406
    %v1419 = vpack.c.b16 %v1409, %v1407
    %v1420 = vpack.c.b16 %v1412, %v1410
    %v1421 = vpack.c.b16 %v1413, %v1411
    %v1431 = vsel %vm283, %v1366, 0
    %v1434 = vsel %vm283, %v1367, 0
    %v1437 = vsel %vm283, %v1368, 0
    %v1440 = vsel %vm283, %v1369, 0
    %1442 = vmatprep.subr.bf16.mxu0 %v1415
    %1443 = vmatpush1.bf16.msra.mxu0 %v1414
    %1444 = vmatprep.subr.bf16.mxu0 %v1417
    %1445 = vmatpush1.bf16.msra.mxu0 %v1416
    %1446 = vmatprep.subr.bf16.mxu0 %v1419
    %1447 = vmatpush1.bf16.msra.mxu0 %v1418
    %1448 = vmatprep.subr.bf16.mxu0 %v1421
    %1449 = vmatpush1.bf16.msra.mxu0 %v1420
    %1450 = vmatprep.subr.bf16.mxu0 0
    %1451 = vmatpush1.bf16.msra.mxu0 0
    %1452 = vmatprep.subr.bf16.mxu0 0
    %1453 = vmatpush1.bf16.msra.mxu0 0
    %1454 = vmatprep.subr.bf16.mxu0 0
    %1455 = vmatpush1.bf16.msra.mxu0 0
    %1456 = vmatprep.subr.bf16.mxu0 0
    %1457 = vmatpush1.bf16.msra.mxu0 0
    %1458 = vmatprep.subr.bf16.mxu0 0
    %1459 = vmatpush1.bf16.msra.mxu0 0
    %1460 = vmatprep.subr.bf16.mxu0 0
    %1461 = vmatpush1.bf16.msra.mxu0 0
    %1462 = vmatprep.subr.bf16.mxu0 0
    %1463 = vmatpush1.bf16.msra.mxu0 0
    %1464 = vmatprep.subr.bf16.mxu0 0
    %1465 = vmatpush1.bf16.msra.mxu0 0
    %1466 = vmatprep.subr.bf16.mxu0 0
    %1467 = vmatpush1.bf16.msra.mxu0 0
    %1468 = vmatprep.subr.bf16.mxu0 0
    %1469 = vmatpush1.bf16.msra.mxu0 0
    %1470 = vmatprep.subr.bf16.mxu0 0
    %1471 = vmatpush1.bf16.msra.mxu0 0
    %1472 = vmatprep.subr.bf16.mxu0 0
    %1473 = vmatpush1.bf16.msra.mxu0 0
    %1474 = vmatprep.mubr.bf16.mxu0 0
    %1475 = vmatmul.mubr.bf16.gmra.mrb[0].mxu0 %v1431
    %v1476 = vpop.f32.mrb[0].mxu0
    %v1477 = vadd.f32 %v1383, %v1476
    %v1478 = vpop.f32.mrb[0].mxu0
    %v1479 = vadd.f32 %v1387, %v1478
    %v1480 = vpop.f32.mrb[0].mxu0
    %v1481 = vadd.f32 %v1383, %v1480
    %v1482 = vpop.f32.mrb[0].mxu0
    %v1483 = vadd.f32 %v1387, %v1482
    %1484 = vmatprep.mubr.bf16.mxu0 0
    %1485 = vmatmul.mubr.bf16.gmra.mrb[0].mxu0 %v1434
    %v1486 = vpop.f32.mrb[0].mxu0
    %v1487 = vadd.f32 %v1383, %v1486
    %v1488 = vpop.f32.mrb[0].mxu0
    %v1489 = vadd.f32 %v1387, %v1488
    %v1490 = vpop.f32.mrb[0].mxu0
    %v1491 = vadd.f32 %v1383, %v1490
    %v1492 = vpop.f32.mrb[0].mxu0
    %v1493 = vadd.f32 %v1387, %v1492
    %1494 = vmatprep.mubr.bf16.mxu0 0
    %1495 = vmatmul.mubr.bf16.gmra.mrb[0].mxu0 %v1437
    %v1496 = vpop.f32.mrb[0].mxu0
    %v1497 = vadd.f32 %v1383, %v1496
    %v1498 = vpop.f32.mrb[0].mxu0
    %v1499 = vadd.f32 %v1387, %v1498
    %v1500 = vpop.f32.mrb[0].mxu0
    %v1501 = vadd.f32 %v1383, %v1500
    %v1502 = vpop.f32.mrb[0].mxu0
    %v1503 = vadd.f32 %v1387, %v1502
    %1504 = vmatprep.mubr.bf16.mxu0 0
    %1505 = vmatmul.mubr.bf16.gmra.mrb[0].mxu0 %v1440
    %v1506 = vpop.f32.mrb[0].mxu0
    %v1507 = vadd.f32 %v1383, %v1506
    %v1508 = vpop.f32.mrb[0].mxu0
    %v1509 = vadd.f32 %v1387, %v1508
    %v1510 = vpop.f32.mrb[0].mxu0
    %v1511 = vadd.f32 %v1383, %v1510
    %v1512 = vpop.f32.mrb[0].mxu0
    %v1513 = vadd.f32 %v1387, %v1512
    %1514 = vdwg.mxu0
    %1515 = vst [vmem:[#allocation2] sm:$0xff] %v1477
    %1516 = vst [vmem:[#allocation2 + $0x8] sm:$0xff] %v1479
    %1517 = vst [vmem:[#allocation2 + $0x10] sm:$0xff] %v1481
    %1518 = vst [vmem:[#allocation2 + $0x18] sm:$0xff] %v1483
    %1519 = vst [vmem:[#allocation2 + $0x20] sm:$0xff] %v1487
    %1520 = vst [vmem:[#allocation2 + $0x28] sm:$0xff] %v1489
    %1521 = vst [vmem:[#allocation2 + $0x30] sm:$0xff] %v1491
    %1522 = vst [vmem:[#allocation2 + $0x38] sm:$0xff] %v1493
    %1523 = vst [vmem:[#allocation2 + $0x40] sm:$0xff] %v1497
    %1524 = vst [vmem:[#allocation2 + $0x48] sm:$0xff] %v1499
    %1525 = vst [vmem:[#allocation2 + $0x50] sm:$0xff] %v1501
    %1526 = vst [vmem:[#allocation2 + $0x58] sm:$0xff] %v1503
    %1527 = vst [vmem:[#allocation2 + $0x60] sm:$0xff] %v1507
    %1528 = vst [vmem:[#allocation2 + $0x68] sm:$0xff] %v1509
    %1529 = vst [vmem:[#allocation2 + $0x70] sm:$0xff] %v1511
    %1530 = vst [vmem:[#allocation2 + $0x78] sm:$0xff] %v1513
    %v1531 = vld [vmem:[%s9] sm:$0xff]
    %v1532 = vld [vmem:[%s9 + $0x8] sm:$0xff]
    %v1533 = vld [vmem:[%s9 + $0x10] sm:$0xff]
    %v1534 = vld [vmem:[%s9 + $0x18] sm:$0xff]
    %v1535 = vld [vmem:[%s9 + $0x20] sm:$0xff]
    %v1536 = vld [vmem:[%s9 + $0x28] sm:$0xff]
    %v1537 = vld [vmem:[%s9 + $0x30] sm:$0xff]
    %v1538 = vld [vmem:[%s9 + $0x38] sm:$0xff]
    %v1539 = vld [vmem:[%s10] sm:$0x3]
    %v1540 = vld [vmem:[%s225] sm:$0xff]
    %v1541 = vld [vmem:[%s229 + $0x8] sm:$0xff]
    %v1543 = vlaneseq
    %v1544 = vshrl.u32 %v1543, 7
    %v1545 = vsub.s32 0, %v1544
    %v1546 = vrot.slane %v1539, %v1545
    %v1547 = vlaneseq
    %v1548 = vshrl.u32 %v1547, 7
    %v1549 = vsub.s32 1, %v1548
    %v1550 = vrot.slane %v1539, %v1549
    %v1561 = vunpack.c.l.b16 %v1531
    %v1562 = vunpack.c.h.b16 %v1531
    %v1563 = vunpack.c.l.b16 %v1532
    %v1564 = vunpack.c.h.b16 %v1532
    %v1565 = vunpack.c.l.b16 %v1533
    %v1566 = vunpack.c.h.b16 %v1533
    %v1567 = vunpack.c.l.b16 %v1534
    %v1568 = vunpack.c.h.b16 %v1534
    %v1569 = vunpack.c.l.b16 %v1535
    %v1570 = vunpack.c.h.b16 %v1535
    %v1571 = vunpack.c.l.b16 %v1536
    %v1572 = vunpack.c.h.b16 %v1536
    %v1573 = vunpack.c.l.b16 %v1537
    %v1574 = vunpack.c.h.b16 %v1537
    %v1575 = vunpack.c.l.b16 %v1538
    %v1576 = vunpack.c.h.b16 %v1538
    %v1577 = vpack.c.b16 %v1563, %v1561
    %v1578 = vpack.c.b16 %v1564, %v1562
    %v1579 = vpack.c.b16 %v1567, %v1565
    %v1580 = vpack.c.b16 %v1568, %v1566
    %v1581 = vpack.c.b16 %v1571, %v1569
    %v1582 = vpack.c.b16 %v1572, %v1570
    %v1583 = vpack.c.b16 %v1575, %v1573
    %v1584 = vpack.c.b16 %v1576, %v1574
    %1593 = vmatprep.subr.bf16.mxu0 %v1578
    %1594 = vmatpush1.bf16.msra.mxu0 %v1577
    %1595 = vmatprep.subr.bf16.mxu0 %v1580
    %1596 = vmatpush1.bf16.msra.mxu0 %v1579
    %1597 = vmatprep.subr.bf16.mxu0 %v1582
    %1598 = vmatpush1.bf16.msra.mxu0 %v1581
    %1599 = vmatprep.subr.bf16.mxu0 %v1584
    %1600 = vmatpush1.bf16.msra.mxu0 %v1583
    %1601 = vmatprep.subr.bf16.mxu0 0
    %1602 = vmatpush1.bf16.msra.mxu0 0
    %1603 = vmatprep.subr.bf16.mxu0 0
    %1604 = vmatpush1.bf16.msra.mxu0 0
    %1605 = vmatprep.subr.bf16.mxu0 0
    %1606 = vmatpush1.bf16.msra.mxu0 0
    %1607 = vmatprep.subr.bf16.mxu0 0
    %1608 = vmatpush1.bf16.msra.mxu0 0
    %1609 = vmatprep.subr.bf16.mxu0 0
    %1610 = vmatpush1.bf16.msra.mxu0 0
    %1611 = vmatprep.subr.bf16.mxu0 0
    %1612 = vmatpush1.bf16.msra.mxu0 0
    %1613 = vmatprep.subr.bf16.mxu0 0
    %1614 = vmatpush1.bf16.msra.mxu0 0
    %1615 = vmatprep.subr.bf16.mxu0 0
    %1616 = vmatpush1.bf16.msra.mxu0 0
    %1617 = vmatprep.subr.bf16.mxu0 0
    %1618 = vmatpush1.bf16.msra.mxu0 0
    %1619 = vmatprep.subr.bf16.mxu0 0
    %1620 = vmatpush1.bf16.msra.mxu0 0
    %1621 = vmatprep.subr.bf16.mxu0 0
    %1622 = vmatpush1.bf16.msra.mxu0 0
    %1623 = vmatprep.subr.bf16.mxu0 0
    %1624 = vmatpush1.bf16.msra.mxu0 0
    %1625 = vmatprep.mubr.bf16.mxu0 0
    %1626 = vmatmul.mubr.bf16.gmra.mrb[0].mxu0 %v285
    %v1627 = vpop.f32.mrb[0].mxu0
    %v1628 = vadd.f32 %v1546, %v1627
    %v1629 = vpop.f32.mrb[0].mxu0
    %v1630 = vadd.f32 %v1550, %v1629
    %v1631 = vpop.f32.mrb[0].mxu0
    %v1632 = vpop.f32.mrb[0].mxu0
    %1633 = vdwg.mxu0
    %v1634 = vadd.f32 %v1540, %v1628
    %v1635 = vxor.u32 %v1634, 2147483648
    %v1636 = vmul.f32 %v1635, 1.442695
    %v1637 = vpow.pop %v1636
    %v1638 = vadd.f32 %v1637, 1.0
    %v1639 = vrcp.pop %v1638
    %v1640 = vmul.f32 1.0, %v1639
    %1642 = vrot.lane.b32.xlu0 %v1628, 64
    %v1643 = vpop.permute.xlu0 %1642
    %v1645 = vmul.f32 %v1640, %v1643
    %1647 = vrot.lane.b32.xlu0 %v1645, 64
    %v1648 = vpop.permute.xlu0 %1647
    %v1650 = vadd.f32 %v1540, %v1648
    %v1651 = vtanh.pop %v1650
    %v1652 = vsub.f32 0.0, %v1651
    %1654 = vrot.lane.b32.xlu0 %v1652, 96
    %v1655 = vpop.permute.xlu0 %1654
    %v1657 = vmul.f32 %v1640, %v1655
    %1659 = vrot.lane.b32.xlu0 %v1657, 32
    %v1660 = vpop.permute.xlu0 %1659
    %v1662 = vadd.f32 %v1651, %v1660
    %v1663 = vadd.f32 %v1541, %v1630
    %v1664 = vxor.u32 %v1663, 2147483648
    %v1665 = vmul.f32 %v1664, 1.442695
    %v1666 = vpow.pop %v1665
    %v1667 = vadd.f32 %v1666, 1.0
    %v1668 = vrcp.pop %v1667
    %v1669 = vmul.f32 1.0, %v1668
    %1671 = vrot.lane.b32.xlu0 %v1630, 64
    %v1672 = vpop.permute.xlu0 %1671
    %v1674 = vmul.f32 %v1669, %v1672
    %1676 = vrot.lane.b32.xlu0 %v1674, 64
    %v1677 = vpop.permute.xlu0 %1676
    %v1679 = vadd.f32 %v1541, %v1677
    %v1680 = vtanh.pop %v1679
    %v1681 = vsub.f32 0.0, %v1680
    %1683 = vrot.lane.b32.xlu0 %v1681, 96
    %v1684 = vpop.permute.xlu0 %1683
    %v1686 = vmul.f32 %v1669, %v1684
    %1688 = vrot.lane.b32.xlu0 %v1686, 32
    %v1689 = vpop.permute.xlu0 %1688
    %v1691 = vadd.f32 %v1680, %v1689
    %v1692 = vsel %vm392, %v1662, 0.0
    %v1693 = vsel %vm403, %v1691, 0.0
    %vm1694 = vcmp.gt.s32.totalorder %v47, 0
    %v1695 = vsel %vm1694, 1, 0
    %1696 = vset.pattern.permute.xlu0 0
    %1697 = vperm.xlu0 %1696, %v1695
    %v1698 = vpop.permute.xlu0 %1697
    %vm1699 = vcmp.eq.s32.totalorder %v1698, 1
    %v1700 = vsel %vm1699, %v1692, -3e+38
    %v1701 = vmax.f32 %v1700, -3e+38
    %vm1702 = vcmp.gt.s32.totalorder %v47, 7
    %v1703 = vsel %vm1702, 1, 0
    %1704 = vset.pattern.permute.xlu0 0
    %1705 = vperm.xlu0 %1704, %v1703
    %v1706 = vpop.permute.xlu0 %1705
    %vm1707 = vcmp.eq.s32.totalorder %v1706, 1
    %v1708 = vsel %vm1707, %v1693, -3e+38
    %v1709 = vmax.f32 %v1708, -3e+38
    %v1710 = vld [vmem:[%s414] sm:$0xff]
    %v1711 = vld [vmem:[%s418 + $0x8] sm:$0xff]
    %1713 = vrot.lane.b32.xlu0 %v1692, 64
    %v1714 = vpop.permute.xlu0 %1713
    %1717 = vrot.lane.b32.xlu0 %v1693, 96
    %v1718 = vpop.permute.xlu0 %1717
    %v1720 = vsel %vm112, %v1714, %v1718
    %v1721 = vpack.c.bf16 %v1720, %v1720
    %v1723 = vsel %vm283, %v1721, 0
    %1725 = vmatprep.subr.bf16.mxu0 %v1578
    %1726 = vmatpush1.bf16.msra.mxu0 %v1577
    %1727 = vmatprep.subr.bf16.mxu0 %v1580
    %1728 = vmatpush1.bf16.msra.mxu0 %v1579
    %1729 = vmatprep.subr.bf16.mxu0 %v1582
    %1730 = vmatpush1.bf16.msra.mxu0 %v1581
    %1731 = vmatprep.subr.bf16.mxu0 %v1584
    %1732 = vmatpush1.bf16.msra.mxu0 %v1583
    %1733 = vmatprep.subr.bf16.mxu0 0
    %1734 = vmatpush1.bf16.msra.mxu0 0
    %1735 = vmatprep.subr.bf16.mxu0 0
    %1736 = vmatpush1.bf16.msra.mxu0 0
    %1737 = vmatprep.subr.bf16.mxu0 0
    %1738 = vmatpush1.bf16.msra.mxu0 0
    %1739 = vmatprep.subr.bf16.mxu0 0
    %1740 = vmatpush1.bf16.msra.mxu0 0
    %1741 = vmatprep.subr.bf16.mxu0 0
    %1742 = vmatpush1.bf16.msra.mxu0 0
    %1743 = vmatprep.subr.bf16.mxu0 0
    %1744 = vmatpush1.bf16.msra.mxu0 0
    %1745 = vmatprep.subr.bf16.mxu0 0
    %1746 = vmatpush1.bf16.msra.mxu0 0
    %1747 = vmatprep.subr.bf16.mxu0 0
    %1748 = vmatpush1.bf16.msra.mxu0 0
    %1749 = vmatprep.subr.bf16.mxu0 0
    %1750 = vmatpush1.bf16.msra.mxu0 0
    %1751 = vmatprep.subr.bf16.mxu0 0
    %1752 = vmatpush1.bf16.msra.mxu0 0
    %1753 = vmatprep.subr.bf16.mxu0 0
    %1754 = vmatpush1.bf16.msra.mxu0 0
    %1755 = vmatprep.subr.bf16.mxu0 0
    %1756 = vmatpush1.bf16.msra.mxu0 0
    %1757 = vmatprep.mubr.bf16.mxu0 0
    %1758 = vmatmul.mubr.bf16.gmra.mrb[0].mxu0 %v1723
    %v1759 = vpop.f32.mrb[0].mxu0
    %v1760 = vadd.f32 %v1546, %v1759
    %v1761 = vpop.f32.mrb[0].mxu0
    %v1762 = vadd.f32 %v1550, %v1761
    %v1763 = vpop.f32.mrb[0].mxu0
    %v1764 = vpop.f32.mrb[0].mxu0
    %1765 = vdwg.mxu0
    %v1766 = vadd.f32 %v1710, %v1760
    %v1767 = vxor.u32 %v1766, 2147483648
    %v1768 = vmul.f32 %v1767, 1.442695
    %v1769 = vpow.pop %v1768
    %v1770 = vadd.f32 %v1769, 1.0
    %v1771 = vrcp.pop %v1770
    %v1772 = vmul.f32 1.0, %v1771
    %1774 = vrot.lane.b32.xlu0 %v1760, 64
    %v1775 = vpop.permute.xlu0 %1774
    %v1777 = vmul.f32 %v1772, %v1775
    %1779 = vrot.lane.b32.xlu0 %v1777, 64
    %v1780 = vpop.permute.xlu0 %1779
    %v1782 = vadd.f32 %v1710, %v1780
    %v1783 = vtanh.pop %v1782
    %v1784 = vsub.f32 %v1692, %v1783
    %1786 = vrot.lane.b32.xlu0 %v1784, 96
    %v1787 = vpop.permute.xlu0 %1786
    %v1789 = vmul.f32 %v1772, %v1787
    %1791 = vrot.lane.b32.xlu0 %v1789, 32
    %v1792 = vpop.permute.xlu0 %1791
    %v1794 = vadd.f32 %v1783, %v1792
    %v1795 = vadd.f32 %v1711, %v1762
    %v1796 = vxor.u32 %v1795, 2147483648
    %v1797 = vmul.f32 %v1796, 1.442695
    %v1798 = vpow.pop %v1797
    %v1799 = vadd.f32 %v1798, 1.0
    %v1800 = vrcp.pop %v1799
    %v1801 = vmul.f32 1.0, %v1800
    %1803 = vrot.lane.b32.xlu0 %v1762, 64
    %v1804 = vpop.permute.xlu0 %1803
    %v1806 = vmul.f32 %v1801, %v1804
    %1808 = vrot.lane.b32.xlu0 %v1806, 64
    %v1809 = vpop.permute.xlu0 %1808
    %v1811 = vadd.f32 %v1711, %v1809
    %v1812 = vtanh.pop %v1811
    %v1813 = vsub.f32 %v1693, %v1812
    %1815 = vrot.lane.b32.xlu0 %v1813, 96
    %v1816 = vpop.permute.xlu0 %1815
    %v1818 = vmul.f32 %v1801, %v1816
    %1820 = vrot.lane.b32.xlu0 %v1818, 32
    %v1821 = vpop.permute.xlu0 %1820
    %v1823 = vadd.f32 %v1812, %v1821
    %v1824 = vsel %vm530, %v1794, 0.0
    %v1825 = vsel %vm542, %v1823, 0.0
    %vm1826 = vcmp.gt.s32.totalorder %v47, 1
    %v1827 = vsel %vm1826, 1, 0
    %1828 = vset.pattern.permute.xlu0 0
    %1829 = vperm.xlu0 %1828, %v1827
    %v1830 = vpop.permute.xlu0 %1829
    %vm1831 = vcmp.eq.s32.totalorder %v1830, 1
    %v1832 = vsel %vm1831, %v1824, -3e+38
    %v1833 = vmax.f32 %v1701, %v1832
    %vm1834 = vcmp.gt.s32.totalorder %v47, 6
    %v1835 = vsel %vm1834, 1, 0
    %1836 = vset.pattern.permute.xlu0 0
    %1837 = vperm.xlu0 %1836, %v1835
    %v1838 = vpop.permute.xlu0 %1837
    %vm1839 = vcmp.eq.s32.totalorder %v1838, 1
    %v1840 = vsel %vm1839, %v1825, -3e+38
    %v1841 = vmax.f32 %v1709, %v1840
    %v1842 = vsel %vm530, %v1794, %v1692
    %v1843 = vsel %vm542, %v1823, %v1693
    %v1844 = vld [vmem:[%s554] sm:$0xff]
    %v1845 = vld [vmem:[%s558 + $0x8] sm:$0xff]
    %1847 = vrot.lane.b32.xlu0 %v1842, 64
    %v1848 = vpop.permute.xlu0 %1847
    %1851 = vrot.lane.b32.xlu0 %v1843, 96
    %v1852 = vpop.permute.xlu0 %1851
    %v1854 = vsel %vm112, %v1848, %v1852
    %v1855 = vpack.c.bf16 %v1854, %v1854
    %v1857 = vsel %vm283, %v1855, 0
    %1859 = vmatprep.subr.bf16.mxu0 %v1578
    %1860 = vmatpush1.bf16.msra.mxu0 %v1577
    %1861 = vmatprep.subr.bf16.mxu0 %v1580
    %1862 = vmatpush1.bf16.msra.mxu0 %v1579
    %1863 = vmatprep.subr.bf16.mxu0 %v1582
    %1864 = vmatpush1.bf16.msra.mxu0 %v1581
    %1865 = vmatprep.subr.bf16.mxu0 %v1584
    %1866 = vmatpush1.bf16.msra.mxu0 %v1583
    %1867 = vmatprep.subr.bf16.mxu0 0
    %1868 = vmatpush1.bf16.msra.mxu0 0
    %1869 = vmatprep.subr.bf16.mxu0 0
    %1870 = vmatpush1.bf16.msra.mxu0 0
    %1871 = vmatprep.subr.bf16.mxu0 0
    %1872 = vmatpush1.bf16.msra.mxu0 0
    %1873 = vmatprep.subr.bf16.mxu0 0
    %1874 = vmatpush1.bf16.msra.mxu0 0
    %1875 = vmatprep.subr.bf16.mxu0 0
    %1876 = vmatpush1.bf16.msra.mxu0 0
    %1877 = vmatprep.subr.bf16.mxu0 0
    %1878 = vmatpush1.bf16.msra.mxu0 0
    %1879 = vmatprep.subr.bf16.mxu0 0
    %1880 = vmatpush1.bf16.msra.mxu0 0
    %1881 = vmatprep.subr.bf16.mxu0 0
    %1882 = vmatpush1.bf16.msra.mxu0 0
    %1883 = vmatprep.subr.bf16.mxu0 0
    %1884 = vmatpush1.bf16.msra.mxu0 0
    %1885 = vmatprep.subr.bf16.mxu0 0
    %1886 = vmatpush1.bf16.msra.mxu0 0
    %1887 = vmatprep.subr.bf16.mxu0 0
    %1888 = vmatpush1.bf16.msra.mxu0 0
    %1889 = vmatprep.subr.bf16.mxu0 0
    %1890 = vmatpush1.bf16.msra.mxu0 0
    %1891 = vmatprep.mubr.bf16.mxu0 0
    %1892 = vmatmul.mubr.bf16.gmra.mrb[0].mxu0 %v1857
    %v1893 = vpop.f32.mrb[0].mxu0
    %v1894 = vadd.f32 %v1546, %v1893
    %v1895 = vpop.f32.mrb[0].mxu0
    %v1896 = vadd.f32 %v1550, %v1895
    %v1897 = vpop.f32.mrb[0].mxu0
    %v1898 = vpop.f32.mrb[0].mxu0
    %1899 = vdwg.mxu0
    %v1900 = vadd.f32 %v1844, %v1894
    %v1901 = vxor.u32 %v1900, 2147483648
    %v1902 = vmul.f32 %v1901, 1.442695
    %v1903 = vpow.pop %v1902
    %v1904 = vadd.f32 %v1903, 1.0
    %v1905 = vrcp.pop %v1904
    %v1906 = vmul.f32 1.0, %v1905
    %1908 = vrot.lane.b32.xlu0 %v1894, 64
    %v1909 = vpop.permute.xlu0 %1908
    %v1911 = vmul.f32 %v1906, %v1909
    %1913 = vrot.lane.b32.xlu0 %v1911, 64
    %v1914 = vpop.permute.xlu0 %1913
    %v1916 = vadd.f32 %v1844, %v1914
    %v1917 = vtanh.pop %v1916
    %v1918 = vsub.f32 %v1842, %v1917
    %1920 = vrot.lane.b32.xlu0 %v1918, 96
    %v1921 = vpop.permute.xlu0 %1920
    %v1923 = vmul.f32 %v1906, %v1921
    %1925 = vrot.lane.b32.xlu0 %v1923, 32
    %v1926 = vpop.permute.xlu0 %1925
    %v1928 = vadd.f32 %v1917, %v1926
    %v1929 = vadd.f32 %v1845, %v1896
    %v1930 = vxor.u32 %v1929, 2147483648
    %v1931 = vmul.f32 %v1930, 1.442695
    %v1932 = vpow.pop %v1931
    %v1933 = vadd.f32 %v1932, 1.0
    %v1934 = vrcp.pop %v1933
    %v1935 = vmul.f32 1.0, %v1934
    %1937 = vrot.lane.b32.xlu0 %v1896, 64
    %v1938 = vpop.permute.xlu0 %1937
    %v1940 = vmul.f32 %v1935, %v1938
    %1942 = vrot.lane.b32.xlu0 %v1940, 64
    %v1943 = vpop.permute.xlu0 %1942
    %v1945 = vadd.f32 %v1845, %v1943
    %v1946 = vtanh.pop %v1945
    %v1947 = vsub.f32 %v1843, %v1946
    %1949 = vrot.lane.b32.xlu0 %v1947, 96
    %v1950 = vpop.permute.xlu0 %1949
    %v1952 = vmul.f32 %v1935, %v1950
    %1954 = vrot.lane.b32.xlu0 %v1952, 32
    %v1955 = vpop.permute.xlu0 %1954
    %v1957 = vadd.f32 %v1946, %v1955
    %v1958 = vsel %vm678, %v1928, 0.0
    %v1959 = vsel %vm690, %v1957, 0.0
    %vm1960 = vcmp.gt.s32.totalorder %v47, 2
    %v1961 = vsel %vm1960, 1, 0
    %1962 = vset.pattern.permute.xlu0 0
    %1963 = vperm.xlu0 %1962, %v1961
    %v1964 = vpop.permute.xlu0 %1963
    %vm1965 = vcmp.eq.s32.totalorder %v1964, 1
    %v1966 = vsel %vm1965, %v1958, -3e+38
    %v1967 = vmax.f32 %v1833, %v1966
    %vm1968 = vcmp.gt.s32.totalorder %v47, 5
    %v1969 = vsel %vm1968, 1, 0
    %1970 = vset.pattern.permute.xlu0 0
    %1971 = vperm.xlu0 %1970, %v1969
    %v1972 = vpop.permute.xlu0 %1971
    %vm1973 = vcmp.eq.s32.totalorder %v1972, 1
    %v1974 = vsel %vm1973, %v1959, -3e+38
    %v1975 = vmax.f32 %v1841, %v1974
    %v1976 = vsel %vm678, %v1928, %v1842
    %v1977 = vsel %vm690, %v1957, %v1843
    %v1978 = vld [vmem:[%s702] sm:$0xff]
    %v1979 = vld [vmem:[%s706 + $0x8] sm:$0xff]
    %1981 = vrot.lane.b32.xlu0 %v1976, 64
    %v1982 = vpop.permute.xlu0 %1981
    %1985 = vrot.lane.b32.xlu0 %v1977, 96
    %v1986 = vpop.permute.xlu0 %1985
    %v1988 = vsel %vm112, %v1982, %v1986
    %v1989 = vpack.c.bf16 %v1988, %v1988
    %v1991 = vsel %vm283, %v1989, 0
    %1993 = vmatprep.subr.bf16.mxu0 %v1578
    %1994 = vmatpush1.bf16.msra.mxu0 %v1577
    %1995 = vmatprep.subr.bf16.mxu0 %v1580
    %1996 = vmatpush1.bf16.msra.mxu0 %v1579
    %1997 = vmatprep.subr.bf16.mxu0 %v1582
    %1998 = vmatpush1.bf16.msra.mxu0 %v1581
    %1999 = vmatprep.subr.bf16.mxu0 %v1584
    %2000 = vmatpush1.bf16.msra.mxu0 %v1583
    %2001 = vmatprep.subr.bf16.mxu0 0
    %2002 = vmatpush1.bf16.msra.mxu0 0
    %2003 = vmatprep.subr.bf16.mxu0 0
    %2004 = vmatpush1.bf16.msra.mxu0 0
    %2005 = vmatprep.subr.bf16.mxu0 0
    %2006 = vmatpush1.bf16.msra.mxu0 0
    %2007 = vmatprep.subr.bf16.mxu0 0
    %2008 = vmatpush1.bf16.msra.mxu0 0
    %2009 = vmatprep.subr.bf16.mxu0 0
    %2010 = vmatpush1.bf16.msra.mxu0 0
    %2011 = vmatprep.subr.bf16.mxu0 0
    %2012 = vmatpush1.bf16.msra.mxu0 0
    %2013 = vmatprep.subr.bf16.mxu0 0
    %2014 = vmatpush1.bf16.msra.mxu0 0
    %2015 = vmatprep.subr.bf16.mxu0 0
    %2016 = vmatpush1.bf16.msra.mxu0 0
    %2017 = vmatprep.subr.bf16.mxu0 0
    %2018 = vmatpush1.bf16.msra.mxu0 0
    %2019 = vmatprep.subr.bf16.mxu0 0
    %2020 = vmatpush1.bf16.msra.mxu0 0
    %2021 = vmatprep.subr.bf16.mxu0 0
    %2022 = vmatpush1.bf16.msra.mxu0 0
    %2023 = vmatprep.subr.bf16.mxu0 0
    %2024 = vmatpush1.bf16.msra.mxu0 0
    %2025 = vmatprep.mubr.bf16.mxu0 0
    %2026 = vmatmul.mubr.bf16.gmra.mrb[0].mxu0 %v1991
    %v2027 = vpop.f32.mrb[0].mxu0
    %v2028 = vadd.f32 %v1546, %v2027
    %v2029 = vpop.f32.mrb[0].mxu0
    %v2030 = vadd.f32 %v1550, %v2029
    %v2031 = vpop.f32.mrb[0].mxu0
    %v2032 = vpop.f32.mrb[0].mxu0
    %2033 = vdwg.mxu0
    %v2034 = vadd.f32 %v1978, %v2028
    %v2035 = vxor.u32 %v2034, 2147483648
    %v2036 = vmul.f32 %v2035, 1.442695
    %v2037 = vpow.pop %v2036
    %v2038 = vadd.f32 %v2037, 1.0
    %v2039 = vrcp.pop %v2038
    %v2040 = vmul.f32 1.0, %v2039
    %2042 = vrot.lane.b32.xlu0 %v2028, 64
    %v2043 = vpop.permute.xlu0 %2042
    %v2045 = vmul.f32 %v2040, %v2043
    %2047 = vrot.lane.b32.xlu0 %v2045, 64
    %v2048 = vpop.permute.xlu0 %2047
    %v2050 = vadd.f32 %v1978, %v2048
    %v2051 = vtanh.pop %v2050
    %v2052 = vsub.f32 %v1976, %v2051
    %2054 = vrot.lane.b32.xlu0 %v2052, 96
    %v2055 = vpop.permute.xlu0 %2054
    %v2057 = vmul.f32 %v2040, %v2055
    %2059 = vrot.lane.b32.xlu0 %v2057, 32
    %v2060 = vpop.permute.xlu0 %2059
    %v2062 = vadd.f32 %v2051, %v2060
    %v2063 = vadd.f32 %v1979, %v2030
    %v2064 = vxor.u32 %v2063, 2147483648
    %v2065 = vmul.f32 %v2064, 1.442695
    %v2066 = vpow.pop %v2065
    %v2067 = vadd.f32 %v2066, 1.0
    %v2068 = vrcp.pop %v2067
    %v2069 = vmul.f32 1.0, %v2068
    %2071 = vrot.lane.b32.xlu0 %v2030, 64
    %v2072 = vpop.permute.xlu0 %2071
    %v2074 = vmul.f32 %v2069, %v2072
    %2076 = vrot.lane.b32.xlu0 %v2074, 64
    %v2077 = vpop.permute.xlu0 %2076
    %v2079 = vadd.f32 %v1979, %v2077
    %v2080 = vtanh.pop %v2079
    %v2081 = vsub.f32 %v1977, %v2080
    %2083 = vrot.lane.b32.xlu0 %v2081, 96
    %v2084 = vpop.permute.xlu0 %2083
    %v2086 = vmul.f32 %v2069, %v2084
    %2088 = vrot.lane.b32.xlu0 %v2086, 32
    %v2089 = vpop.permute.xlu0 %2088
    %v2091 = vadd.f32 %v2080, %v2089
    %v2092 = vsel %vm826, %v2062, 0.0
    %v2093 = vsel %vm838, %v2091, 0.0
    %vm2094 = vcmp.gt.s32.totalorder %v47, 3
    %v2095 = vsel %vm2094, 1, 0
    %2096 = vset.pattern.permute.xlu0 0
    %2097 = vperm.xlu0 %2096, %v2095
    %v2098 = vpop.permute.xlu0 %2097
    %vm2099 = vcmp.eq.s32.totalorder %v2098, 1
    %v2100 = vsel %vm2099, %v2092, -3e+38
    %v2101 = vmax.f32 %v1967, %v2100
    %vm2102 = vcmp.gt.s32.totalorder %v47, 4
    %v2103 = vsel %vm2102, 1, 0
    %2104 = vset.pattern.permute.xlu0 0
    %2105 = vperm.xlu0 %2104, %v2103
    %v2106 = vpop.permute.xlu0 %2105
    %vm2107 = vcmp.eq.s32.totalorder %v2106, 1
    %v2108 = vsel %vm2107, %v2093, -3e+38
    %v2109 = vmax.f32 %v1975, %v2108
    %v2110 = vsel %vm826, %v2062, %v1976
    %v2111 = vsel %vm838, %v2091, %v1977
    %v2112 = vld [vmem:[%s706] sm:$0xff]
    %v2113 = vld [vmem:[%s702 + $0x8] sm:$0xff]
    %2115 = vrot.lane.b32.xlu0 %v2110, 64
    %v2116 = vpop.permute.xlu0 %2115
    %2119 = vrot.lane.b32.xlu0 %v2111, 96
    %v2120 = vpop.permute.xlu0 %2119
    %v2122 = vsel %vm112, %v2116, %v2120
    %v2123 = vpack.c.bf16 %v2122, %v2122
    %v2125 = vsel %vm283, %v2123, 0
    %2127 = vmatprep.subr.bf16.mxu0 %v1578
    %2128 = vmatpush1.bf16.msra.mxu0 %v1577
    %2129 = vmatprep.subr.bf16.mxu0 %v1580
    %2130 = vmatpush1.bf16.msra.mxu0 %v1579
    %2131 = vmatprep.subr.bf16.mxu0 %v1582
    %2132 = vmatpush1.bf16.msra.mxu0 %v1581
    %2133 = vmatprep.subr.bf16.mxu0 %v1584
    %2134 = vmatpush1.bf16.msra.mxu0 %v1583
    %2135 = vmatprep.subr.bf16.mxu0 0
    %2136 = vmatpush1.bf16.msra.mxu0 0
    %2137 = vmatprep.subr.bf16.mxu0 0
    %2138 = vmatpush1.bf16.msra.mxu0 0
    %2139 = vmatprep.subr.bf16.mxu0 0
    %2140 = vmatpush1.bf16.msra.mxu0 0
    %2141 = vmatprep.subr.bf16.mxu0 0
    %2142 = vmatpush1.bf16.msra.mxu0 0
    %2143 = vmatprep.subr.bf16.mxu0 0
    %2144 = vmatpush1.bf16.msra.mxu0 0
    %2145 = vmatprep.subr.bf16.mxu0 0
    %2146 = vmatpush1.bf16.msra.mxu0 0
    %2147 = vmatprep.subr.bf16.mxu0 0
    %2148 = vmatpush1.bf16.msra.mxu0 0
    %2149 = vmatprep.subr.bf16.mxu0 0
    %2150 = vmatpush1.bf16.msra.mxu0 0
    %2151 = vmatprep.subr.bf16.mxu0 0
    %2152 = vmatpush1.bf16.msra.mxu0 0
    %2153 = vmatprep.subr.bf16.mxu0 0
    %2154 = vmatpush1.bf16.msra.mxu0 0
    %2155 = vmatprep.subr.bf16.mxu0 0
    %2156 = vmatpush1.bf16.msra.mxu0 0
    %2157 = vmatprep.subr.bf16.mxu0 0
    %2158 = vmatpush1.bf16.msra.mxu0 0
    %2159 = vmatprep.mubr.bf16.mxu0 0
    %2160 = vmatmul.mubr.bf16.gmra.mrb[0].mxu0 %v2125
    %v2161 = vpop.f32.mrb[0].mxu0
    %v2162 = vadd.f32 %v1546, %v2161
    %v2163 = vpop.f32.mrb[0].mxu0
    %v2164 = vadd.f32 %v1550, %v2163
    %v2165 = vpop.f32.mrb[0].mxu0
    %v2166 = vpop.f32.mrb[0].mxu0
    %2167 = vdwg.mxu0
    %v2168 = vadd.f32 %v2112, %v2162
    %v2169 = vxor.u32 %v2168, 2147483648
    %v2170 = vmul.f32 %v2169, 1.442695
    %v2171 = vpow.pop %v2170
    %v2172 = vadd.f32 %v2171, 1.0
    %v2173 = vrcp.pop %v2172
    %v2174 = vmul.f32 1.0, %v2173
    %2176 = vrot.lane.b32.xlu0 %v2162, 64
    %v2177 = vpop.permute.xlu0 %2176
    %v2179 = vmul.f32 %v2174, %v2177
    %2181 = vrot.lane.b32.xlu0 %v2179, 64
    %v2182 = vpop.permute.xlu0 %2181
    %v2184 = vadd.f32 %v2112, %v2182
    %v2185 = vtanh.pop %v2184
    %v2186 = vsub.f32 %v2110, %v2185
    %2188 = vrot.lane.b32.xlu0 %v2186, 96
    %v2189 = vpop.permute.xlu0 %2188
    %v2191 = vmul.f32 %v2174, %v2189
    %2193 = vrot.lane.b32.xlu0 %v2191, 32
    %v2194 = vpop.permute.xlu0 %2193
    %v2196 = vadd.f32 %v2185, %v2194
    %v2197 = vadd.f32 %v2113, %v2164
    %v2198 = vxor.u32 %v2197, 2147483648
    %v2199 = vmul.f32 %v2198, 1.442695
    %v2200 = vpow.pop %v2199
    %v2201 = vadd.f32 %v2200, 1.0
    %v2202 = vrcp.pop %v2201
    %v2203 = vmul.f32 1.0, %v2202
    %2205 = vrot.lane.b32.xlu0 %v2164, 64
    %v2206 = vpop.permute.xlu0 %2205
    %v2208 = vmul.f32 %v2203, %v2206
    %2210 = vrot.lane.b32.xlu0 %v2208, 64
    %v2211 = vpop.permute.xlu0 %2210
    %v2213 = vadd.f32 %v2113, %v2211
    %v2214 = vtanh.pop %v2213
    %v2215 = vsub.f32 %v2111, %v2214
    %2217 = vrot.lane.b32.xlu0 %v2215, 96
    %v2218 = vpop.permute.xlu0 %2217
    %v2220 = vmul.f32 %v2203, %v2218
    %2222 = vrot.lane.b32.xlu0 %v2220, 32
    %v2223 = vpop.permute.xlu0 %2222
    %v2225 = vadd.f32 %v2214, %v2223
    %v2226 = vsel %vm838, %v2196, 0.0
    %v2227 = vsel %vm826, %v2225, 0.0
    %v2228 = vsel %vm2107, %v2226, -3e+38
    %v2229 = vmax.f32 %v2101, %v2228
    %v2230 = vsel %vm2099, %v2227, -3e+38
    %v2231 = vmax.f32 %v2109, %v2230
    %v2232 = vsel %vm838, %v2196, %v2110
    %v2233 = vsel %vm826, %v2225, %v2111
    %v2234 = vld [vmem:[%s558] sm:$0xff]
    %v2235 = vld [vmem:[%s554 + $0x8] sm:$0xff]
    %2237 = vrot.lane.b32.xlu0 %v2232, 64
    %v2238 = vpop.permute.xlu0 %2237
    %2241 = vrot.lane.b32.xlu0 %v2233, 96
    %v2242 = vpop.permute.xlu0 %2241
    %v2244 = vsel %vm112, %v2238, %v2242
    %v2245 = vpack.c.bf16 %v2244, %v2244
    %v2247 = vsel %vm283, %v2245, 0
    %2249 = vmatprep.subr.bf16.mxu0 %v1578
    %2250 = vmatpush1.bf16.msra.mxu0 %v1577
    %2251 = vmatprep.subr.bf16.mxu0 %v1580
    %2252 = vmatpush1.bf16.msra.mxu0 %v1579
    %2253 = vmatprep.subr.bf16.mxu0 %v1582
    %2254 = vmatpush1.bf16.msra.mxu0 %v1581
    %2255 = vmatprep.subr.bf16.mxu0 %v1584
    %2256 = vmatpush1.bf16.msra.mxu0 %v1583
    %2257 = vmatprep.subr.bf16.mxu0 0
    %2258 = vmatpush1.bf16.msra.mxu0 0
    %2259 = vmatprep.subr.bf16.mxu0 0
    %2260 = vmatpush1.bf16.msra.mxu0 0
    %2261 = vmatprep.subr.bf16.mxu0 0
    %2262 = vmatpush1.bf16.msra.mxu0 0
    %2263 = vmatprep.subr.bf16.mxu0 0
    %2264 = vmatpush1.bf16.msra.mxu0 0
    %2265 = vmatprep.subr.bf16.mxu0 0
    %2266 = vmatpush1.bf16.msra.mxu0 0
    %2267 = vmatprep.subr.bf16.mxu0 0
    %2268 = vmatpush1.bf16.msra.mxu0 0
    %2269 = vmatprep.subr.bf16.mxu0 0
    %2270 = vmatpush1.bf16.msra.mxu0 0
    %2271 = vmatprep.subr.bf16.mxu0 0
    %2272 = vmatpush1.bf16.msra.mxu0 0
    %2273 = vmatprep.subr.bf16.mxu0 0
    %2274 = vmatpush1.bf16.msra.mxu0 0
    %2275 = vmatprep.subr.bf16.mxu0 0
    %2276 = vmatpush1.bf16.msra.mxu0 0
    %2277 = vmatprep.subr.bf16.mxu0 0
    %2278 = vmatpush1.bf16.msra.mxu0 0
    %2279 = vmatprep.subr.bf16.mxu0 0
    %2280 = vmatpush1.bf16.msra.mxu0 0
    %2281 = vmatprep.mubr.bf16.mxu0 0
    %2282 = vmatmul.mubr.bf16.gmra.mrb[0].mxu0 %v2247
    %v2283 = vpop.f32.mrb[0].mxu0
    %v2284 = vadd.f32 %v1546, %v2283
    %v2285 = vpop.f32.mrb[0].mxu0
    %v2286 = vadd.f32 %v1550, %v2285
    %v2287 = vpop.f32.mrb[0].mxu0
    %v2288 = vpop.f32.mrb[0].mxu0
    %2289 = vdwg.mxu0
    %v2290 = vadd.f32 %v2234, %v2284
    %v2291 = vxor.u32 %v2290, 2147483648
    %v2292 = vmul.f32 %v2291, 1.442695
    %v2293 = vpow.pop %v2292
    %v2294 = vadd.f32 %v2293, 1.0
    %v2295 = vrcp.pop %v2294
    %v2296 = vmul.f32 1.0, %v2295
    %2298 = vrot.lane.b32.xlu0 %v2284, 64
    %v2299 = vpop.permute.xlu0 %2298
    %v2301 = vmul.f32 %v2296, %v2299
    %2303 = vrot.lane.b32.xlu0 %v2301, 64
    %v2304 = vpop.permute.xlu0 %2303
    %v2306 = vadd.f32 %v2234, %v2304
    %v2307 = vtanh.pop %v2306
    %v2308 = vsub.f32 %v2232, %v2307
    %2310 = vrot.lane.b32.xlu0 %v2308, 96
    %v2311 = vpop.permute.xlu0 %2310
    %v2313 = vmul.f32 %v2296, %v2311
    %2315 = vrot.lane.b32.xlu0 %v2313, 32
    %v2316 = vpop.permute.xlu0 %2315
    %v2318 = vadd.f32 %v2307, %v2316
    %v2319 = vadd.f32 %v2235, %v2286
    %v2320 = vxor.u32 %v2319, 2147483648
    %v2321 = vmul.f32 %v2320, 1.442695
    %v2322 = vpow.pop %v2321
    %v2323 = vadd.f32 %v2322, 1.0
    %v2324 = vrcp.pop %v2323
    %v2325 = vmul.f32 1.0, %v2324
    %2327 = vrot.lane.b32.xlu0 %v2286, 64
    %v2328 = vpop.permute.xlu0 %2327
    %v2330 = vmul.f32 %v2325, %v2328
    %2332 = vrot.lane.b32.xlu0 %v2330, 64
    %v2333 = vpop.permute.xlu0 %2332
    %v2335 = vadd.f32 %v2235, %v2333
    %v2336 = vtanh.pop %v2335
    %v2337 = vsub.f32 %v2233, %v2336
    %2339 = vrot.lane.b32.xlu0 %v2337, 96
    %v2340 = vpop.permute.xlu0 %2339
    %v2342 = vmul.f32 %v2325, %v2340
    %2344 = vrot.lane.b32.xlu0 %v2342, 32
    %v2345 = vpop.permute.xlu0 %2344
    %v2347 = vadd.f32 %v2336, %v2345
    %v2348 = vsel %vm690, %v2318, 0.0
    %v2349 = vsel %vm678, %v2347, 0.0
    %v2350 = vsel %vm1973, %v2348, -3e+38
    %v2351 = vmax.f32 %v2229, %v2350
    %v2352 = vsel %vm1965, %v2349, -3e+38
    %v2353 = vmax.f32 %v2231, %v2352
    %v2354 = vsel %vm690, %v2318, %v2232
    %v2355 = vsel %vm678, %v2347, %v2233
    %v2356 = vld [vmem:[%s418] sm:$0xff]
    %v2357 = vld [vmem:[%s414 + $0x8] sm:$0xff]
    %2359 = vrot.lane.b32.xlu0 %v2354, 64
    %v2360 = vpop.permute.xlu0 %2359
    %2363 = vrot.lane.b32.xlu0 %v2355, 96
    %v2364 = vpop.permute.xlu0 %2363
    %v2366 = vsel %vm112, %v2360, %v2364
    %v2367 = vpack.c.bf16 %v2366, %v2366
    %v2369 = vsel %vm283, %v2367, 0
    %2371 = vmatprep.subr.bf16.mxu0 %v1578
    %2372 = vmatpush1.bf16.msra.mxu0 %v1577
    %2373 = vmatprep.subr.bf16.mxu0 %v1580
    %2374 = vmatpush1.bf16.msra.mxu0 %v1579
    %2375 = vmatprep.subr.bf16.mxu0 %v1582
    %2376 = vmatpush1.bf16.msra.mxu0 %v1581
    %2377 = vmatprep.subr.bf16.mxu0 %v1584
    %2378 = vmatpush1.bf16.msra.mxu0 %v1583
    %2379 = vmatprep.subr.bf16.mxu0 0
    %2380 = vmatpush1.bf16.msra.mxu0 0
    %2381 = vmatprep.subr.bf16.mxu0 0
    %2382 = vmatpush1.bf16.msra.mxu0 0
    %2383 = vmatprep.subr.bf16.mxu0 0
    %2384 = vmatpush1.bf16.msra.mxu0 0
    %2385 = vmatprep.subr.bf16.mxu0 0
    %2386 = vmatpush1.bf16.msra.mxu0 0
    %2387 = vmatprep.subr.bf16.mxu0 0
    %2388 = vmatpush1.bf16.msra.mxu0 0
    %2389 = vmatprep.subr.bf16.mxu0 0
    %2390 = vmatpush1.bf16.msra.mxu0 0
    %2391 = vmatprep.subr.bf16.mxu0 0
    %2392 = vmatpush1.bf16.msra.mxu0 0
    %2393 = vmatprep.subr.bf16.mxu0 0
    %2394 = vmatpush1.bf16.msra.mxu0 0
    %2395 = vmatprep.subr.bf16.mxu0 0
    %2396 = vmatpush1.bf16.msra.mxu0 0
    %2397 = vmatprep.subr.bf16.mxu0 0
    %2398 = vmatpush1.bf16.msra.mxu0 0
    %2399 = vmatprep.subr.bf16.mxu0 0
    %2400 = vmatpush1.bf16.msra.mxu0 0
    %2401 = vmatprep.subr.bf16.mxu0 0
    %2402 = vmatpush1.bf16.msra.mxu0 0
    %2403 = vmatprep.mubr.bf16.mxu0 0
    %2404 = vmatmul.mubr.bf16.gmra.mrb[0].mxu0 %v2369
    %v2405 = vpop.f32.mrb[0].mxu0
    %v2406 = vadd.f32 %v1546, %v2405
    %v2407 = vpop.f32.mrb[0].mxu0
    %v2408 = vadd.f32 %v1550, %v2407
    %v2409 = vpop.f32.mrb[0].mxu0
    %v2410 = vpop.f32.mrb[0].mxu0
    %2411 = vdwg.mxu0
    %v2412 = vadd.f32 %v2356, %v2406
    %v2413 = vxor.u32 %v2412, 2147483648
    %v2414 = vmul.f32 %v2413, 1.442695
    %v2415 = vpow.pop %v2414
    %v2416 = vadd.f32 %v2415, 1.0
    %v2417 = vrcp.pop %v2416
    %v2418 = vmul.f32 1.0, %v2417
    %2420 = vrot.lane.b32.xlu0 %v2406, 64
    %v2421 = vpop.permute.xlu0 %2420
    %v2423 = vmul.f32 %v2418, %v2421
    %2425 = vrot.lane.b32.xlu0 %v2423, 64
    %v2426 = vpop.permute.xlu0 %2425
    %v2428 = vadd.f32 %v2356, %v2426
    %v2429 = vtanh.pop %v2428
    %v2430 = vsub.f32 %v2354, %v2429
    %2432 = vrot.lane.b32.xlu0 %v2430, 96
    %v2433 = vpop.permute.xlu0 %2432
    %v2435 = vmul.f32 %v2418, %v2433
    %2437 = vrot.lane.b32.xlu0 %v2435, 32
    %v2438 = vpop.permute.xlu0 %2437
    %v2440 = vadd.f32 %v2429, %v2438
    %v2441 = vadd.f32 %v2357, %v2408
    %v2442 = vxor.u32 %v2441, 2147483648
    %v2443 = vmul.f32 %v2442, 1.442695
    %v2444 = vpow.pop %v2443
    %v2445 = vadd.f32 %v2444, 1.0
    %v2446 = vrcp.pop %v2445
    %v2447 = vmul.f32 1.0, %v2446
    %2449 = vrot.lane.b32.xlu0 %v2408, 64
    %v2450 = vpop.permute.xlu0 %2449
    %v2452 = vmul.f32 %v2447, %v2450
    %2454 = vrot.lane.b32.xlu0 %v2452, 64
    %v2455 = vpop.permute.xlu0 %2454
    %v2457 = vadd.f32 %v2357, %v2455
    %v2458 = vtanh.pop %v2457
    %v2459 = vsub.f32 %v2355, %v2458
    %2461 = vrot.lane.b32.xlu0 %v2459, 96
    %v2462 = vpop.permute.xlu0 %2461
    %v2464 = vmul.f32 %v2447, %v2462
    %2466 = vrot.lane.b32.xlu0 %v2464, 32
    %v2467 = vpop.permute.xlu0 %2466
    %v2469 = vadd.f32 %v2458, %v2467
    %v2470 = vsel %vm542, %v2440, 0.0
    %v2471 = vsel %vm530, %v2469, 0.0
    %v2472 = vsel %vm1839, %v2470, -3e+38
    %v2473 = vmax.f32 %v2351, %v2472
    %v2474 = vsel %vm1831, %v2471, -3e+38
    %v2475 = vmax.f32 %v2353, %v2474
    %v2476 = vsel %vm542, %v2440, %v2354
    %v2477 = vsel %vm530, %v2469, %v2355
    %v2478 = vld [vmem:[%s229] sm:$0xff]
    %v2479 = vld [vmem:[%s225 + $0x8] sm:$0xff]
    %2481 = vrot.lane.b32.xlu0 %v2476, 64
    %v2482 = vpop.permute.xlu0 %2481
    %2485 = vrot.lane.b32.xlu0 %v2477, 96
    %v2486 = vpop.permute.xlu0 %2485
    %v2488 = vsel %vm112, %v2482, %v2486
    %v2489 = vpack.c.bf16 %v2488, %v2488
    %v2491 = vsel %vm283, %v2489, 0
    %2493 = vmatprep.subr.bf16.mxu0 %v1578
    %2494 = vmatpush1.bf16.msra.mxu0 %v1577
    %2495 = vmatprep.subr.bf16.mxu0 %v1580
    %2496 = vmatpush1.bf16.msra.mxu0 %v1579
    %2497 = vmatprep.subr.bf16.mxu0 %v1582
    %2498 = vmatpush1.bf16.msra.mxu0 %v1581
    %2499 = vmatprep.subr.bf16.mxu0 %v1584
    %2500 = vmatpush1.bf16.msra.mxu0 %v1583
    %2501 = vmatprep.subr.bf16.mxu0 0
    %2502 = vmatpush1.bf16.msra.mxu0 0
    %2503 = vmatprep.subr.bf16.mxu0 0
    %2504 = vmatpush1.bf16.msra.mxu0 0
    %2505 = vmatprep.subr.bf16.mxu0 0
    %2506 = vmatpush1.bf16.msra.mxu0 0
    %2507 = vmatprep.subr.bf16.mxu0 0
    %2508 = vmatpush1.bf16.msra.mxu0 0
    %2509 = vmatprep.subr.bf16.mxu0 0
    %2510 = vmatpush1.bf16.msra.mxu0 0
    %2511 = vmatprep.subr.bf16.mxu0 0
    %2512 = vmatpush1.bf16.msra.mxu0 0
    %2513 = vmatprep.subr.bf16.mxu0 0
    %2514 = vmatpush1.bf16.msra.mxu0 0
    %2515 = vmatprep.subr.bf16.mxu0 0
    %2516 = vmatpush1.bf16.msra.mxu0 0
    %2517 = vmatprep.subr.bf16.mxu0 0
    %2518 = vmatpush1.bf16.msra.mxu0 0
    %2519 = vmatprep.subr.bf16.mxu0 0
    %2520 = vmatpush1.bf16.msra.mxu0 0
    %2521 = vmatprep.subr.bf16.mxu0 0
    %2522 = vmatpush1.bf16.msra.mxu0 0
    %2523 = vmatprep.subr.bf16.mxu0 0
    %2524 = vmatpush1.bf16.msra.mxu0 0
    %2525 = vmatprep.mubr.bf16.mxu0 0
    %2526 = vmatmul.mubr.bf16.gmra.mrb[0].mxu0 %v2491
    %v2527 = vpop.f32.mrb[0].mxu0
    %v2528 = vadd.f32 %v1546, %v2527
    %v2529 = vpop.f32.mrb[0].mxu0
    %v2530 = vadd.f32 %v1550, %v2529
    %v2531 = vpop.f32.mrb[0].mxu0
    %v2532 = vpop.f32.mrb[0].mxu0
    %2533 = vdwg.mxu0
    %v2534 = vadd.f32 %v2478, %v2528
    %v2535 = vxor.u32 %v2534, 2147483648
    %v2536 = vmul.f32 %v2535, 1.442695
    %v2537 = vpow.pop %v2536
    %v2538 = vadd.f32 %v2537, 1.0
    %v2539 = vrcp.pop %v2538
    %v2540 = vmul.f32 1.0, %v2539
    %2542 = vrot.lane.b32.xlu0 %v2528, 64
    %v2543 = vpop.permute.xlu0 %2542
    %v2545 = vmul.f32 %v2540, %v2543
    %2547 = vrot.lane.b32.xlu0 %v2545, 64
    %v2548 = vpop.permute.xlu0 %2547
    %v2550 = vadd.f32 %v2478, %v2548
    %v2551 = vtanh.pop %v2550
    %v2552 = vsub.f32 %v2476, %v2551
    %2554 = vrot.lane.b32.xlu0 %v2552, 96
    %v2555 = vpop.permute.xlu0 %2554
    %v2557 = vmul.f32 %v2540, %v2555
    %2559 = vrot.lane.b32.xlu0 %v2557, 32
    %v2560 = vpop.permute.xlu0 %2559
    %v2562 = vadd.f32 %v2551, %v2560
    %v2563 = vadd.f32 %v2479, %v2530
    %v2564 = vxor.u32 %v2563, 2147483648
    %v2565 = vmul.f32 %v2564, 1.442695
    %v2566 = vpow.pop %v2565
    %v2567 = vadd.f32 %v2566, 1.0
    %v2568 = vrcp.pop %v2567
    %v2569 = vmul.f32 1.0, %v2568
    %2571 = vrot.lane.b32.xlu0 %v2530, 64
    %v2572 = vpop.permute.xlu0 %2571
    %v2574 = vmul.f32 %v2569, %v2572
    %2576 = vrot.lane.b32.xlu0 %v2574, 64
    %v2577 = vpop.permute.xlu0 %2576
    %v2579 = vadd.f32 %v2479, %v2577
    %v2580 = vtanh.pop %v2579
    %v2581 = vsub.f32 %v2477, %v2580
    %2583 = vrot.lane.b32.xlu0 %v2581, 96
    %v2584 = vpop.permute.xlu0 %2583
    %v2586 = vmul.f32 %v2569, %v2584
    %2588 = vrot.lane.b32.xlu0 %v2586, 32
    %v2589 = vpop.permute.xlu0 %2588
    %v2591 = vadd.f32 %v2580, %v2589
    %v2592 = vsel %vm403, %v2562, 0.0
    %v2593 = vsel %vm392, %v2591, 0.0
    %v2594 = vsel %vm1707, %v2592, -3e+38
    %v2595 = vmax.f32 %v2473, %v2594
    %v2596 = vsel %vm1699, %v2593, -3e+38
    %v2597 = vmax.f32 %v2475, %v2596
    %2599 = vrot.lane.b32.xlu0 %v2595, 64
    %v2600 = vpop.permute.xlu0 %2599
    %2603 = vrot.lane.b32.xlu0 %v2597, 96
    %v2604 = vpop.permute.xlu0 %2603
    %v2606 = vsel %vm112, %v2600, %v2604
    %v2608 = vrot.slane %v2606, 2
    %v2610 = vmul.f32 %v2606, %v2608
    %v2611 = vsub.f32 %v2606, %v2608
    %v2612 = vand.u32 2147483647, %v2611
    %2614 = vrot.lane.b32.xlu0 %v2610, 64
    %v2615 = vpop.permute.xlu0 %2614
    %2617 = vrot.lane.b32.xlu0 %v2608, 64
    %v2618 = vpop.permute.xlu0 %2617
    %v2620 = vsel %vm283, %v2606, %v2615
    %v2621 = vsel %vm283, %v2612, %v2618
    %v2622 = vpack.c.bf16 %v2620, %v2620
    %v2623 = vpack.c.bf16 %v2621, %v2621
    %v2624 = vld [vmem:[%s11] sm:$0xf]
    %v2625 = vld [vmem:[%s11 + $0x4] sm:$0xf]
    %v2626 = vld [vmem:[%s11 + $0x8] sm:$0xf]
    %v2627 = vld [vmem:[%s11 + $0xc] sm:$0xf]
    %v2628 = vld [vmem:[%s11 + $0x10] sm:$0xf]
    %v2629 = vld [vmem:[%s11 + $0x14] sm:$0xf]
    %v2630 = vld [vmem:[%s11 + $0x18] sm:$0xf]
    %v2631 = vld [vmem:[%s11 + $0x1c] sm:$0xf]
    %v2632 = vld [vmem:[%s11 + $0x20] sm:$0xf]
    %v2633 = vld [vmem:[%s11 + $0x24] sm:$0xf]
    %v2634 = vld [vmem:[%s11 + $0x28] sm:$0xf]
    %v2635 = vld [vmem:[%s11 + $0x2c] sm:$0xf]
    %v2636 = vld [vmem:[%s11 + $0x30] sm:$0xf]
    %v2637 = vld [vmem:[%s11 + $0x34] sm:$0xf]
    %v2638 = vld [vmem:[%s11 + $0x38] sm:$0xf]
    %v2639 = vld [vmem:[%s11 + $0x3c] sm:$0xf]
    %v2640 = vld [vmem:[%s11 + $0x40] sm:$0xf]
    %v2641 = vld [vmem:[%s11 + $0x44] sm:$0xf]
    %v2642 = vld [vmem:[%s11 + $0x48] sm:$0xf]
    %v2643 = vld [vmem:[%s11 + $0x4c] sm:$0xf]
    %v2644 = vld [vmem:[%s11 + $0x50] sm:$0xf]
    %v2645 = vld [vmem:[%s11 + $0x54] sm:$0xf]
    %v2646 = vld [vmem:[%s11 + $0x58] sm:$0xf]
    %v2647 = vld [vmem:[%s11 + $0x5c] sm:$0xf]
    %v2648 = vld [vmem:[%s11 + $0x60] sm:$0xf]
    %v2649 = vld [vmem:[%s11 + $0x64] sm:$0xf]
    %v2650 = vld [vmem:[%s11 + $0x68] sm:$0xf]
    %v2651 = vld [vmem:[%s11 + $0x6c] sm:$0xf]
    %v2652 = vld [vmem:[%s11 + $0x70] sm:$0xf]
    %v2653 = vld [vmem:[%s11 + $0x74] sm:$0xf]
    %v2654 = vld [vmem:[%s11 + $0x78] sm:$0xf]
    %v2655 = vld [vmem:[%s11 + $0x7c] sm:$0xf]
    %v2656 = vld [vmem:[%s12] sm:$0x1]
    %v2658 = vlaneseq
    %v2659 = vshrl.u32 %v2658, 7
    %v2660 = vsub.s32 0, %v2659
    %v2661 = vrot.slane %v2656, %v2660
    %v2695 = vunpack.c.l.b16 %v2624
    %v2696 = vunpack.c.l.b16 %v2625
    %v2697 = vunpack.c.l.b16 %v2626
    %v2698 = vunpack.c.l.b16 %v2627
    %v2699 = vunpack.c.l.b16 %v2628
    %v2700 = vunpack.c.l.b16 %v2629
    %v2701 = vunpack.c.l.b16 %v2630
    %v2702 = vunpack.c.l.b16 %v2631
    %v2703 = vunpack.c.l.b16 %v2632
    %v2704 = vunpack.c.l.b16 %v2633
    %v2705 = vunpack.c.l.b16 %v2634
    %v2706 = vunpack.c.l.b16 %v2635
    %v2707 = vunpack.c.l.b16 %v2636
    %v2708 = vunpack.c.l.b16 %v2637
    %v2709 = vunpack.c.l.b16 %v2638
    %v2710 = vunpack.c.l.b16 %v2639
    %v2711 = vunpack.c.l.b16 %v2640
    %v2712 = vunpack.c.l.b16 %v2641
    %v2713 = vunpack.c.l.b16 %v2642
    %v2714 = vunpack.c.l.b16 %v2643
    %v2715 = vunpack.c.l.b16 %v2644
    %v2716 = vunpack.c.l.b16 %v2645
    %v2717 = vunpack.c.l.b16 %v2646
    %v2718 = vunpack.c.l.b16 %v2647
    %v2719 = vunpack.c.l.b16 %v2648
    %v2720 = vunpack.c.l.b16 %v2649
    %v2721 = vunpack.c.l.b16 %v2650
    %v2722 = vunpack.c.l.b16 %v2651
    %v2723 = vunpack.c.l.b16 %v2652
    %v2724 = vunpack.c.l.b16 %v2653
    %v2725 = vunpack.c.l.b16 %v2654
    %v2726 = vunpack.c.l.b16 %v2655
    %v2727 = vpack.c.b16 %v2696, %v2695
    %v2728 = vpack.c.b16 %v2698, %v2697
    %v2729 = vpack.c.b16 %v2700, %v2699
    %v2730 = vpack.c.b16 %v2702, %v2701
    %v2731 = vpack.c.b16 %v2704, %v2703
    %v2732 = vpack.c.b16 %v2706, %v2705
    %v2733 = vpack.c.b16 %v2708, %v2707
    %v2734 = vpack.c.b16 %v2710, %v2709
    %v2735 = vpack.c.b16 %v2712, %v2711
    %v2736 = vpack.c.b16 %v2714, %v2713
    %v2737 = vpack.c.b16 %v2716, %v2715
    %v2738 = vpack.c.b16 %v2718, %v2717
    %v2739 = vpack.c.b16 %v2720, %v2719
    %v2740 = vpack.c.b16 %v2722, %v2721
    %v2741 = vpack.c.b16 %v2724, %v2723
    %v2742 = vpack.c.b16 %v2726, %v2725
    %2759 = vmatprep.subr.bf16.mxu0 0
    %2760 = vmatpush1.bf16.msra.mxu0 %v2727
    %2761 = vmatprep.subr.bf16.mxu0 0
    %2762 = vmatpush1.bf16.msra.mxu0 %v2728
    %2763 = vmatprep.subr.bf16.mxu0 0
    %2764 = vmatpush1.bf16.msra.mxu0 %v2729
    %2765 = vmatprep.subr.bf16.mxu0 0
    %2766 = vmatpush1.bf16.msra.mxu0 %v2730
    %2767 = vmatprep.subr.bf16.mxu0 0
    %2768 = vmatpush1.bf16.msra.mxu0 %v2731
    %2769 = vmatprep.subr.bf16.mxu0 0
    %2770 = vmatpush1.bf16.msra.mxu0 %v2732
    %2771 = vmatprep.subr.bf16.mxu0 0
    %2772 = vmatpush1.bf16.msra.mxu0 %v2733
    %2773 = vmatprep.subr.bf16.mxu0 0
    %2774 = vmatpush1.bf16.msra.mxu0 %v2734
    %2775 = vmatprep.subr.bf16.mxu0 0
    %2776 = vmatpush1.bf16.msra.mxu0 %v2735
    %2777 = vmatprep.subr.bf16.mxu0 0
    %2778 = vmatpush1.bf16.msra.mxu0 %v2736
    %2779 = vmatprep.subr.bf16.mxu0 0
    %2780 = vmatpush1.bf16.msra.mxu0 %v2737
    %2781 = vmatprep.subr.bf16.mxu0 0
    %2782 = vmatpush1.bf16.msra.mxu0 %v2738
    %2783 = vmatprep.subr.bf16.mxu0 0
    %2784 = vmatpush1.bf16.msra.mxu0 %v2739
    %2785 = vmatprep.subr.bf16.mxu0 0
    %2786 = vmatpush1.bf16.msra.mxu0 %v2740
    %2787 = vmatprep.subr.bf16.mxu0 0
    %2788 = vmatpush1.bf16.msra.mxu0 %v2741
    %2789 = vmatprep.subr.bf16.mxu0 0
    %2790 = vmatpush1.bf16.msra.mxu0 %v2742
    %2791 = vmatprep.mubr.bf16.mxu0 %v2623
    %2792 = vmatmul.mubr.bf16.gmra.mrb[0].mxu0 %v2622
    %v2793 = vpop.f32.mrb[0].mxu0
    %v2794 = vadd.f32 %v2661, %v2793
    %v2795 = vpop.f32.mrb[0].mxu0
    %v2796 = vpop.f32.mrb[0].mxu0
    %v2797 = vpop.f32.mrb[0].mxu0
    %2798 = vdwg.mxu0
    %2799 = vst [vmem:[#allocation4] sm:$0x3] %v2794
    // Predicated region
    $region54: #{siamese_gru_forward.1} parent=1 // pred_check
      _
    $region55: #{siamese_gru_forward.1} parent=1 // pred_check_branch
      %2801 = sbr.rel (0) target = $region57
    $region56: #{siamese_gru_forward.1} parent=1 // pred_region
      %s2803 = ssub.s32 32, 32
      %2804 = vsyncadd [#allocation5], %s2803
      %s2806 = sshll.u32 [#allocation4], 4
      %s2807 = int_to_ptr.vmem [resolvable:$true] %s2806
      %2809 = dma.vmem_to_hbm [thread:$0]  %s2807, 32, %s13, [#allocation5]
    $region57: #{siamese_gru_forward.1} parent=1 // pred_fallthru
      _
    // Predicated region
    $region58: #{siamese_gru_forward.1} parent=1 // pred_check
      _
    $region59: #{siamese_gru_forward.1} parent=1 // pred_check_branch
      %2811 = sbr.rel (0) target = $region61
    $region60: #{siamese_gru_forward.1} parent=1 // pred_region
      %2812 = dma.done [#allocation5], 32
    $region61: #{siamese_gru_forward.1} parent=1 // pred_fallthru
      _
    %2813 = vsyncpa [#allocation5], 1

</llo_original>
